<compile_context>
chip_gen: v7x
topology: tpu7x:2x2x1
jax: 0.10.0
libtpu: 0.0.40
codegen_flags: <defaults>
</compile_context>

<pallas_src>
import functools

import jax
import jax.numpy as jnp
from jax.experimental import pallas as pl
from jax.experimental.pallas import tpu as pltpu

_LANE_PAD = 128  # lane-pad the tiny class dimension for dense stores


def _head_kernel(hidden_ref, w1_ref, b1_ref, w2_ref, b2_ref, mask_ref,
                 labels_ref, logits_ref, nll_ref, acc_ref, *, seq_len,
                 num_classes):
    s = pl.program_id(1)

    # ---- init the pooled-sum accumulator for this batch tile ---------------
    @pl.when(s == 0)
    def _():
        acc_ref[...] = jnp.zeros_like(acc_ref)

    # ---- streaming partial sum over this sequence tile (f32 accumulation) --
    h = hidden_ref[...].astype(jnp.float32)              # (bt, st, H)
    acc_ref[...] += jnp.sum(h, axis=1)                   # (bt, H)

    # ---- finalize: head + loss on the last sequence step -------------------
    @pl.when(s == pl.num_programs(1) - 1)
    def _():
        pooled = acc_ref[...] * jnp.float32(1.0 / seq_len)        # (bt, H)

        # lin_1 (bf16 MXU inputs, f32 accumulation) + ReLU
        x = jnp.dot(pooled.astype(jnp.bfloat16), w1_ref[...],
                    preferred_element_type=jnp.float32) + b1_ref[...]
        x = jnp.maximum(x, 0.0)

        # dropout: mask is pre-scaled by 1/(1-p) (ones in eval mode)
        x = x * mask_ref[...]

        # lin_2 into the lane-padded class dimension
        logits = jnp.dot(x, w2_ref[...],
                         preferred_element_type=jnp.float32) + b2_ref[...]
        logits_ref[...] = logits                          # (bt, _LANE_PAD)

        # per-sample cross-entropy (padded lanes masked out of the LSE)
        bt, npad = logits.shape
        col = jax.lax.broadcasted_iota(jnp.int32, (bt, npad), 1)
        valid = col < num_classes
        lm = jnp.where(valid, logits, jnp.float32(-1e30))
        m = jnp.max(lm, axis=-1, keepdims=True)
        lse = m + jnp.log(jnp.sum(jnp.exp(lm - m), axis=-1, keepdims=True))
        onehot = col == labels_ref[...]                   # labels (bt, 1) int32
        picked = jnp.sum(jnp.where(onehot, logits, 0.0), axis=-1, keepdims=True)
        nll_ref[...] = lse - picked                       # (bt, 1)


def _make_dropout_mask(key, batch, hidden, p):
    keep = jax.random.bernoulli(key, 1.0 - p, (batch, hidden))
    return keep.astype(jnp.float32) * jnp.float32(1.0 / (1.0 - p))


def codebert_head(hidden, labels, w1, b1, w2, b2, *, training=False, p=0.2,
                  dropout_key=None, b_tile=8, s_tile=128):
    """hidden: (B, S, H); labels: (B,) int; Linear weights pre-transposed (in, out).

    Returns (logits (B, C) f32, scalar mean cross-entropy loss).
    """
    B, S, H = hidden.shape
    C = w2.shape[-1]
    assert B % b_tile == 0, "batch must be divisible by b_tile"
    assert S % s_tile == 0, "sequence length must be divisible by s_tile"

    # Big operands stream in bf16 (halves the dominant HBM traffic).
    hidden = hidden.astype(jnp.bfloat16)
    w1 = jnp.asarray(w1, jnp.bfloat16)
    b1_2d = jnp.asarray(b1, jnp.float32).reshape(1, H)

    # Lane-pad the class dimension (zero weight / zero bias in padded columns).
    w2p = jnp.zeros((H, _LANE_PAD), jnp.float32).at[:, :C].set(
        jnp.asarray(w2, jnp.float32))
    b2p = jnp.zeros((1, _LANE_PAD), jnp.float32).at[:, :C].set(
        jnp.asarray(b2, jnp.float32).reshape(1, C))

    if training:
        if dropout_key is None:
            dropout_key = jax.random.PRNGKey(0)
        drop_mask = _make_dropout_mask(dropout_key, B, H, p)
    else:
        drop_mask = jnp.ones((B, H), jnp.float32)

    labels_2d = jnp.asarray(labels, jnp.int32).reshape(B, 1)

    kernel = functools.partial(_head_kernel, seq_len=S, num_classes=C)

    flops = B * S * H + 2 * B * H * H + 2 * B * H * _LANE_PAD
    bytes_accessed = (hidden.size * 2 + w1.size * 2
                      + (b1_2d.size + w2p.size + b2p.size + drop_mask.size) * 4
                      + labels_2d.size * 4 + (B * _LANE_PAD + B) * 4)
    cost = pl.CostEstimate(flops=flops, transcendentals=B * _LANE_PAD,
                           bytes_accessed=bytes_accessed)

    grid = (B // b_tile, S // s_tile)
    logits_pad, nll = pl.pallas_call(
        kernel,
        out_shape=(jax.ShapeDtypeStruct((B, _LANE_PAD), jnp.float32),
                   jax.ShapeDtypeStruct((B, 1), jnp.float32)),
        grid_spec=pltpu.PrefetchScalarGridSpec(
            num_scalar_prefetch=0,
            grid=grid,
            in_specs=[
                pl.BlockSpec((b_tile, s_tile, H), lambda b, s: (b, s, 0)),
                pl.BlockSpec((H, H), lambda b, s: (0, 0)),          # w1 (bf16)
                pl.BlockSpec((1, H), lambda b, s: (0, 0)),          # b1
                pl.BlockSpec((H, _LANE_PAD), lambda b, s: (0, 0)),  # w2 padded
                pl.BlockSpec((1, _LANE_PAD), lambda b, s: (0, 0)),  # b2 padded
                pl.BlockSpec((b_tile, H), lambda b, s: (b, 0)),     # dropout mask
                pl.BlockSpec((b_tile, 1), lambda b, s: (b, 0)),     # labels
            ],
            out_specs=(
                pl.BlockSpec((b_tile, _LANE_PAD), lambda b, s: (b, 0)),
                pl.BlockSpec((b_tile, 1), lambda b, s: (b, 0)),
            ),
            scratch_shapes=[pltpu.VMEM((b_tile, H), jnp.float32)],
        ),
        compiler_params=pltpu.CompilerParams(
            dimension_semantics=("parallel", "arbitrary"),
            vmem_limit_bytes=32 * 1024 * 1024),
        cost_estimate=cost,
    )(hidden, w1, b1_2d, w2p, b2p, drop_mask, labels_2d)

    logits = logits_pad[:, :C]
    loss = jnp.mean(nll[:, 0])
    return logits, loss


def _ref_forward(hidden_bf16, labels, w1_bf16, b1, w2, b2, drop_mask=None):
    """Pure-JAX reference mirroring the kernel's dtype choices."""
    h = hidden_bf16.astype(jnp.float32)
    pooled = jnp.mean(h, axis=1)
    x = jnp.dot(pooled.astype(jnp.bfloat16), jnp.asarray(w1_bf16, jnp.bfloat16),
                preferred_element_type=jnp.float32) + jnp.asarray(b1, jnp.float32)
    x = jnp.maximum(x, 0.0)
    if drop_mask is not None:
        x = x * drop_mask
    logits = x @ jnp.asarray(w2, jnp.float32) + jnp.asarray(b2, jnp.float32)
    lse = jax.scipy.special.logsumexp(logits, axis=-1)
    picked = jnp.take_along_axis(logits, labels[:, None], axis=1)[:, 0]
    return logits, jnp.mean(lse - picked)


if __name__ == "__main__":
    # Small shapes consistent with the module (hidden must be 768, num_labels=2).
    B, S, H, C = 16, 64, 768, 2

    key = jax.random.PRNGKey(0)
    k_hid, k_w1, k_b1, k_w2, k_b2, k_lab = jax.random.split(key, 6)

    # Synthetic stand-in for the pretrained encoder's last_hidden_state (bf16).
    hidden = jax.random.normal(k_hid, (B, S, H), jnp.float32).astype(jnp.bfloat16)
    labels = jax.random.randint(k_lab, (B,), 0, C, jnp.int32)

    # PyTorch Linear weights are (out, in); stored here pre-transposed (in, out).
    w1 = (jax.random.normal(k_w1, (H, H), jnp.float32) / jnp.sqrt(H)).astype(
        jnp.bfloat16)
    b1 = jax.random.normal(k_b1, (H,), jnp.float32) * 0.01
    w2 = jax.random.normal(k_w2, (H, C), jnp.float32) / jnp.sqrt(H)
    b2 = jax.random.normal(k_b2, (C,), jnp.float32) * 0.01

    # ---- eval mode: dropout is identity ------------------------------------
    logits, loss = codebert_head(hidden, labels, w1, b1, w2, b2,
                                 training=False, b_tile=8, s_tile=32)
    jax.block_until_ready((logits, loss))
    ref_logits, ref_loss = _ref_forward(hidden, labels, w1, b1, w2, b2)
    assert jnp.allclose(logits, ref_logits, atol=1e-2, rtol=1e-2)
    assert jnp.allclose(loss, ref_loss, atol=1e-2, rtol=1e-2)

    # ---- training mode: dropout active (host-side mask, deterministic key) --
    k_drop = jax.random.PRNGKey(42)
    logits_tr, loss_tr = codebert_head(hidden, labels, w1, b1, w2, b2,
                                       training=True, p=0.2,
                                       dropout_key=k_drop,
                                       b_tile=8, s_tile=32)
    jax.block_until_ready((logits_tr, loss_tr))
    mask = _make_dropout_mask(k_drop, B, H, 0.2)
    ref_logits_tr, ref_loss_tr = _ref_forward(hidden, labels, w1, b1, w2, b2,
                                              drop_mask=mask)
    assert jnp.allclose(logits_tr, ref_logits_tr, atol=1e-2, rtol=1e-2)
    assert jnp.allclose(loss_tr, ref_loss_tr, atol=1e-2, rtol=1e-2)
    assert bool(jnp.isfinite(loss_tr))

    print("KERNEL_OK")
</pallas_src>

<mosaic_0001>
module attributes {stable_mosaic.version = 11 : i64} {
  func.func @_head_kernel(%arg0: i32, %arg1: i32, %arg2: memref<8x32x768xbf16, #tpu.memory_space<vmem>>, %arg3: memref<768x768xbf16, #tpu.memory_space<vmem>>, %arg4: memref<1x768xf32, #tpu.memory_space<vmem>>, %arg5: memref<768x128xf32, #tpu.memory_space<vmem>>, %arg6: memref<1x128xf32, #tpu.memory_space<vmem>>, %arg7: memref<8x768xf32, #tpu.memory_space<vmem>>, %arg8: memref<8x1xi32, #tpu.memory_space<vmem>>, %arg9: memref<8x128xf32, #tpu.memory_space<vmem>>, %arg10: memref<8x1xf32, #tpu.memory_space<vmem>>, %arg11: memref<8x768xf32, #tpu.memory_space<vmem>>) attributes {dimension_semantics = [#tpu.dimension_semantics<parallel>, #tpu.dimension_semantics<arbitrary>], iteration_bounds = array<i64: 2, 2>, scalar_prefetch = 0 : i64, scratch_operands = 1 : i64, tpu.core_type = #tpu.core_type<tc>, window_params = [{transform_indices = @transform_0, window_bounds = array<i64: 8, 32, 768>}, {pipeline_mode = #tpu.pipeline_mode<synchronous>, transform_indices = @transform_1, window_bounds = array<i64: 768, 768>}, {pipeline_mode = #tpu.pipeline_mode<synchronous>, transform_indices = @transform_2, window_bounds = array<i64: 1, 768>}, {pipeline_mode = #tpu.pipeline_mode<synchronous>, transform_indices = @transform_3, window_bounds = array<i64: 768, 128>}, {pipeline_mode = #tpu.pipeline_mode<synchronous>, transform_indices = @transform_4, window_bounds = array<i64: 1, 128>}, {transform_indices = @transform_5, window_bounds = array<i64: 8, 768>}, {transform_indices = @transform_6, window_bounds = array<i64: 8, 1>}, {transform_indices = @transform_7, window_bounds = array<i64: 8, 128>}, {transform_indices = @transform_8, window_bounds = array<i64: 8, 1>}]} {
    %c0_i32 = arith.constant 0 : i32
    %0 = arith.cmpi eq, %arg1, %c0_i32 : i32
    %1 = arith.extui %0 : i1 to i32
    %c0_i32_0 = arith.constant 0 : i32
    %2 = arith.cmpi ne, %1, %c0_i32_0 : i32
    scf.if %2 {
      %cst_8 = arith.constant 0.000000e+00 : f32
      %12 = vector.broadcast %cst_8 : f32 to vector<8x768xf32>
      %c0_9 = arith.constant 0 : index
      %c0_10 = arith.constant 0 : index
      %13 = vector.load %arg11[%c0_9, %c0_10] : memref<8x768xf32, #tpu.memory_space<vmem>>, vector<8x768xf32>
      tpu.vector_store %arg11[%c0_9, %c0_10], %12 {strides = array<i32>} : memref<8x768xf32, #tpu.memory_space<vmem>>, vector<8x768xf32>,
    } else {
    }
    %c0 = arith.constant 0 : index
    %c0_1 = arith.constant 0 : index
    %c0_2 = arith.constant 0 : index
    %3 = vector.load %arg2[%c0, %c0_1, %c0_2] : memref<8x32x768xbf16, #tpu.memory_space<vmem>>, vector<8x32x768xbf16>
    %4 = arith.extf %3 : vector<8x32x768xbf16> to vector<8x32x768xf32>
    %c0_3 = arith.constant 0 : index
    %c0_4 = arith.constant 0 : index
    %5 = vector.load %arg11[%c0_3, %c0_4] : memref<8x768xf32, #tpu.memory_space<vmem>>, vector<8x768xf32>
    %cst = arith.constant dense<0.000000e+00> : vector<8x768xf32>
    %6 = vector.multi_reduction <add>, %4, %cst [1] : vector<8x32x768xf32> to vector<8x768xf32>
    %7 = arith.addf %5, %6 : vector<8x768xf32>
    %c0_5 = arith.constant 0 : index
    %c0_6 = arith.constant 0 : index
    %8 = vector.load %arg11[%c0_5, %c0_6] : memref<8x768xf32, #tpu.memory_space<vmem>>, vector<8x768xf32>
    tpu.vector_store %arg11[%c0_5, %c0_6], %7 {strides = array<i32>} : memref<8x768xf32, #tpu.memory_space<vmem>>, vector<8x768xf32>,
    %c1_i32 = arith.constant 1 : i32
    %9 = arith.cmpi eq, %arg1, %c1_i32 : i32
    %10 = arith.extui %9 : i1 to i32
    %c0_i32_7 = arith.constant 0 : i32
    %11 = arith.cmpi ne, %10, %c0_i32_7 : i32
    scf.if %11 {
      %c0_8 = arith.constant 0 : index
      %c0_9 = arith.constant 0 : index
      %12 = vector.load %arg11[%c0_8, %c0_9] : memref<8x768xf32, #tpu.memory_space<vmem>>, vector<8x768xf32>
      %cst_10 = arith.constant 1.562500e-02 : f32
      %13 = vector.broadcast %cst_10 : f32 to vector<8x768xf32>
      %14 = arith.mulf %12, %13 : vector<8x768xf32>
      %15 = arith.truncf %14 : vector<8x768xf32> to vector<8x768xbf16>
      %c0_11 = arith.constant 0 : index
      %c0_12 = arith.constant 0 : index
      %16 = vector.load %arg3[%c0_11, %c0_12] : memref<768x768xbf16, #tpu.memory_space<vmem>>, vector<768x768xbf16>
      %cst_13 = arith.constant dense<0.000000e+00> : vector<8x768xf32>
      %17 = tpu.matmul %15, %16, %cst_13 {dimension_numbers = #tpu.dot_dimension_numbers<[1], [0], [0], [1], [0, 0, 1, 1], [], []>} : vector<8x768xbf16>, vector<768x768xbf16>, vector<8x768xf32> -> vector<8x768xf32>
      %c0_14 = arith.constant 0 : index
      %c0_15 = arith.constant 0 : index
      %18 = vector.load %arg4[%c0_14, %c0_15] : memref<1x768xf32, #tpu.memory_space<vmem>>, vector<1x768xf32>
      %19 = vector.broadcast %18 : vector<1x768xf32> to vector<8x768xf32>
      %20 = arith.addf %17, %19 : vector<8x768xf32>
      %cst_16 = arith.constant 0.000000e+00 : f32
      %21 = vector.broadcast %cst_16 : f32 to vector<8x768xf32>
      %22 = arith.maximumf %20, %21 : vector<8x768xf32>
      %c0_17 = arith.constant 0 : index
      %c0_18 = arith.constant 0 : index
      %23 = vector.load %arg7[%c0_17, %c0_18] : memref<8x768xf32, #tpu.memory_space<vmem>>, vector<8x768xf32>
      %24 = arith.mulf %22, %23 : vector<8x768xf32>
      %c0_19 = arith.constant 0 : index
      %c0_20 = arith.constant 0 : index
      %25 = vector.load %arg5[%c0_19, %c0_20] : memref<768x128xf32, #tpu.memory_space<vmem>>, vector<768x128xf32>
      %cst_21 = arith.constant dense<0.000000e+00> : vector<8x128xf32>
      %26 = tpu.matmul %24, %25, %cst_21 {dimension_numbers = #tpu.dot_dimension_numbers<[1], [0], [0], [1], [0, 0, 1, 1], [], []>} : vector<8x768xf32>, vector<768x128xf32>, vector<8x128xf32> -> vector<8x128xf32>
      %c0_22 = arith.constant 0 : index
      %c0_23 = arith.constant 0 : index
      %27 = vector.load %arg6[%c0_22, %c0_23] : memref<1x128xf32, #tpu.memory_space<vmem>>, vector<1x128xf32>
      %28 = vector.broadcast %27 : vector<1x128xf32> to vector<8x128xf32>
      %29 = arith.addf %26, %28 : vector<8x128xf32>
      %c0_24 = arith.constant 0 : index
      %c0_25 = arith.constant 0 : index
      %30 = vector.load %arg9[%c0_24, %c0_25] : memref<8x128xf32, #tpu.memory_space<vmem>>, vector<8x128xf32>
      tpu.vector_store %arg9[%c0_24, %c0_25], %29 {strides = array<i32>} : memref<8x128xf32, #tpu.memory_space<vmem>>, vector<8x128xf32>,
      %31 = tpu.iota {dimensions = array<i32: 1>} : vector<8x128xi32>
      %c2_i32 = arith.constant 2 : i32
      %32 = vector.broadcast %c2_i32 : i32 to vector<8x128xi32>
      %33 = arith.cmpi slt, %31, %32 : vector<8x128xi32>
      %cst_26 = arith.constant -1.000000e+30 : f32
      %34 = vector.broadcast %cst_26 : f32 to vector<8x128xf32>
      %35 = arith.select %33, %29, %34 : vector<8x128xi1>, vector<8x128xf32>
      %cst_27 = arith.constant dense<0xFF800000> : vector<8xf32>
      %36 = vector.multi_reduction <maximumf>, %35, %cst_27 [1] : vector<8x128xf32> to vector<8xf32>
      %37 = vector.shape_cast %36 : vector<8xf32> to vector<8x1xf32>
      %38 = vector.broadcast %37 : vector<8x1xf32> to vector<8x128xf32>
      %39 = arith.subf %35, %38 : vector<8x128xf32>
      %40 = math.exp %39 : vector<8x128xf32>
      %cst_28 = arith.constant dense<0.000000e+00> : vector<8xf32>
      %41 = vector.multi_reduction <add>, %40, %cst_28 [1] : vector<8x128xf32> to vector<8xf32>
      %42 = vector.shape_cast %41 : vector<8xf32> to vector<8x1xf32>
      %43 = math.log %42 : vector<8x1xf32>
      %44 = arith.addf %37, %43 : vector<8x1xf32>
      %c0_29 = arith.constant 0 : index
      %c0_30 = arith.constant 0 : index
      %45 = vector.load %arg8[%c0_29, %c0_30] : memref<8x1xi32, #tpu.memory_space<vmem>>, vector<8x1xi32>
      %46 = vector.broadcast %45 : vector<8x1xi32> to vector<8x128xi32>
      %47 = arith.cmpi eq, %31, %46 : vector<8x128xi32>
      %cst_31 = arith.constant 0.000000e+00 : f32
      %48 = vector.broadcast %cst_31 : f32 to vector<8x128xf32>
      %49 = arith.select %47, %29, %48 : vector<8x128xi1>, vector<8x128xf32>
      %cst_32 = arith.constant dense<0.000000e+00> : vector<8xf32>
      %50 = vector.multi_reduction <add>, %49, %cst_32 [1] : vector<8x128xf32> to vector<8xf32>
      %51 = vector.shape_cast %50 : vector<8xf32> to vector<8x1xf32>
      %52 = arith.subf %44, %51 : vector<8x1xf32>
      %c0_33 = arith.constant 0 : index
      %c0_34 = arith.constant 0 : index
      %53 = vector.load %arg10[%c0_33, %c0_34] : memref<8x1xf32, #tpu.memory_space<vmem>>, vector<8x1xf32>
      tpu.vector_store %arg10[%c0_33, %c0_34], %52 {strides = array<i32>} : memref<8x1xf32, #tpu.memory_space<vmem>>, vector<8x1xf32>,
    } else {
    }
    return
  }
  func.func @transform_0(%arg0: i32, %arg1: i32) -> (i32, i32, i32) {
    %c0_i32 = arith.constant 0 : i32
    %c0_i32_0 = arith.constant 0 : i32
    return %arg0, %arg1, %c0_i32 : i32, i32, i32
  }
  func.func @transform_1(%arg0: i32, %arg1: i32) -> (i32, i32) {
    %c0_i32 = arith.constant 0 : i32
    %c0_i32_0 = arith.constant 0 : i32
    %c0_i32_1 = arith.constant 0 : i32
    return %c0_i32, %c0_i32_0 : i32, i32
  }
  func.func @transform_2(%arg0: i32, %arg1: i32) -> (i32, i32) {
    %c0_i32 = arith.constant 0 : i32
    %c0_i32_0 = arith.constant 0 : i32
    %c0_i32_1 = arith.constant 0 : i32
    return %c0_i32, %c0_i32_0 : i32, i32
  }
  func.func @transform_3(%arg0: i32, %arg1: i32) -> (i32, i32) {
    %c0_i32 = arith.constant 0 : i32
    %c0_i32_0 = arith.constant 0 : i32
    %c0_i32_1 = arith.constant 0 : i32
    return %c0_i32, %c0_i32_0 : i32, i32
  }
  func.func @transform_4(%arg0: i32, %arg1: i32) -> (i32, i32) {
    %c0_i32 = arith.constant 0 : i32
    %c0_i32_0 = arith.constant 0 : i32
    %c0_i32_1 = arith.constant 0 : i32
    return %c0_i32, %c0_i32_0 : i32, i32
  }
  func.func @transform_5(%arg0: i32, %arg1: i32) -> (i32, i32) {
    %c0_i32 = arith.constant 0 : i32
    %c0_i32_0 = arith.constant 0 : i32
    return %arg0, %c0_i32 : i32, i32
  }
  func.func @transform_6(%arg0: i32, %arg1: i32) -> (i32, i32) {
    %c0_i32 = arith.constant 0 : i32
    %c0_i32_0 = arith.constant 0 : i32
    return %arg0, %c0_i32 : i32, i32
  }
  func.func @transform_7(%arg0: i32, %arg1: i32) -> (i32, i32) {
    %c0_i32 = arith.constant 0 : i32
    %c0_i32_0 = arith.constant 0 : i32
    return %arg0, %c0_i32 : i32, i32
  }
  func.func @transform_8(%arg0: i32, %arg1: i32) -> (i32, i32) {
    %c0_i32 = arith.constant 0 : i32
    %c0_i32_0 = arith.constant 0 : i32
    return %arg0, %c0_i32 : i32, i32
  }
}

</mosaic_0001>

<llo_original>
// kernel: tpu_custom_call.1
$region0: #{tpu_custom_call.1}
  #allocation0 [shape = 'u32[]', space=smem, size = 0x4, offset = 0x4, fixed_abs, tag = 'smem constant byte address 0x4 - core index']
  #allocation1 [shape = 'u32[144,128]{1,0:T(1,128)}', space=vmem, size = 0x12000, scoped, tag = 'internal scratch']
  #allocation2 [shape = 'f32[8,768]{1,0:T(8,128)}', space=vmem, size = 0x6000, scoped, tag = 'scratch operand']
  #allocation15 [shape = 's32[]', space=sflag, size = 0x4, offset = 0, fixed_abs, tag = 'sflag constant byte address 0x0 - dummy sync flag']
  %s0 = inlined_call_operand.hbm [shape: bf16[16,64,768], index: 0, kind: input, shape index: {}]
  %s1 = inlined_call_operand.hbm [shape: bf16[768,768], index: 1, kind: input, shape index: {}]
  %s2 = inlined_call_operand.hbm [shape: f32[1,768], index: 2, kind: input, shape index: {}]
  %s3 = inlined_call_operand.hbm [shape: f32[768,128], index: 3, kind: input, shape index: {}]
  %s4 = inlined_call_operand.hbm [shape: f32[1,128], index: 4, kind: input, shape index: {}]
  %s5 = inlined_call_operand.hbm [shape: f32[16,768], index: 5, kind: input, shape index: {}]
  %s6 = inlined_call_operand.vmem [shape: s32[16,1], index: 6, kind: input, shape index: {}]
  %s7 = inlined_call_operand.hbm [shape: f32[16,128], index: 7, kind: output, shape index: {0}]
  %s8 = inlined_call_operand.vmem [shape: f32[16,1], index: 8, kind: output, shape index: {1}]
  %9 = xla_tuple %s7, %s8
  %s10 = sld [smem:[#allocation0]]
  $region101: #{tpu_custom_call.1} parent=0
    _
  %s12 = ssub.s32 1, %s10
  %s13 = scalar_select 0, %s12, %s10
  $region1: #{tpu_custom_call.1} parent=0
    #allocation3 [shape = 'u8[786432]{0}', space=vmem, size = 0xc0000, scoped, tag = 'input window, operand 0']
    #allocation4 [shape = 's32[2]{0}', space=sflag, size = 0x8, scoped, tag = 'scoped memory for tpu_custom_call.1']
    #allocation5 [shape = 's32[2]{0}', space=sflag, size = 0x8, scoped, tag = 'scoped memory for tpu_custom_call.1']
    #allocation6 [shape = 'u8[1179648]{0}', space=vmem, size = 0x120000, scoped, tag = 'input window, operand 1, single buffered']
    #allocation7 [shape = 's32[1]{0}', space=sflag, size = 0x4, scoped, tag = 'scoped memory for tpu_custom_call.1']
    #allocation8 [shape = 'u8[3072]{0}', space=vmem, size = 0xc00, scoped, tag = 'input window, operand 2, single buffered']
    #allocation9 [shape = 'u8[393216]{0}', space=vmem, size = 0x60000, scoped, tag = 'input window, operand 3, single buffered']
    #allocation10 [shape = 's32[1]{0}', space=sflag, size = 0x4, scoped, tag = 'scoped memory for tpu_custom_call.1']
    #allocation11 [shape = 'u8[512]{0}', space=vmem, size = 0x400, scoped, tag = 'input window, operand 4, single buffered']
    #allocation12 [shape = 'u8[49152]{0}', space=vmem, size = 0xc000, scoped, tag = 'input window, operand 5']
    #allocation13 [shape = 's32[2]{0}', space=sflag, size = 0x8, scoped, tag = 'scoped memory for tpu_custom_call.1']
    #allocation14 [shape = 'u8[8192]{0}', space=vmem, size = 0x2000, scoped, tag = 'output window, operand 0']
    %14 = vsyncpa [#allocation4], 0
    %s15 = scalar_lea.sflag [#allocation4], 1
    %16 = vsyncpa %s15, 0
    %17 = vsyncpa [#allocation7], 0
    %18 = vsyncpa [#allocation10], 0
    %19 = vsyncpa [#allocation13], 0
    %s20 = scalar_lea.sflag [#allocation13], 1
    %21 = vsyncpa %s20, 0
    %22 = vsyncpa [#allocation5], 0
    %s23 = scalar_lea.sflag [#allocation5], 1
    %24 = vsyncpa %s23, 0
    loop: start=0, step=1, limit=6
    $region2: #{tpu_custom_call.1} parent=1 // loop_pre_header
      _
    $region3: #{tpu_custom_call.1} parent=1 // loop_header
      %s26 = sphi 0, %s30
      %p27 = scmp.ge.s32.totalorder %s26, 6
      %s33 = sphi 0, %s45
      %s34 = sphi 0, %s41
      %s35 = sphi 0, %s33
      %s36 = sphi 0, %s34
      %s37 = sphi 0, %s35
      %s38 = sphi 0, %s36
      %s50 = sphi 0, %s52
      %s53 = sphi 0, %s50
      %s54 = sphi 0, %s53
      %s70 = sphi 0, %s54
      %s74 = sphi 0, %s74
      %s76 = sphi 0, %s74
      %s77 = sphi 0, %s76
      %s91 = sphi 0, %s77
      %s95 = sphi 0, %s95
      %s97 = sphi 0, %s95
      %s98 = sphi 0, %s97
      %s112 = sphi 0, %s98
      %s116 = sphi 0, %s116
      %s118 = sphi 0, %s116
      %s119 = sphi 0, %s118
      %s133 = sphi 0, %s119
      %s137 = sphi 0, %s137
      %s139 = sphi 0, %s137
      %s140 = sphi 0, %s139
      %s154 = sphi 0, %s140
      %s160 = sphi 0, %s162
      %s163 = sphi 0, %s160
      %s164 = sphi 0, %s163
      %s180 = sphi 0, %s164
      %s186 = sphi 0, %s188
      %s189 = sphi 0, %s186
      %s190 = sphi 0, %s189
      %s206 = sphi 0, %s190
      %s212 = sphi 0, %s214
      %s215 = sphi 0, %s212
      %s216 = sphi 0, %s215
      %s232 = sphi 0, %s216
      %s238 = sphi 0, %s240
      %s241 = sphi 0, %s238
      %s242 = sphi 0, %s241
      %s258 = sphi 0, %s242
    $region4: #{tpu_custom_call.1} parent=1 // loop_header_branch
      %29 = sbr.rel (%p27) target = $region8
    $region5: #{tpu_custom_call.1} parent=1 // loop_body
      %s31 = ssub.s32 %s26, 1
      %s32 = ssub.s32 %s26, 2
      %s39 = sadd.s32 1, %s34
      %p40 = scmp.ge.s32.totalorder %s39, 2
      %s41 = scalar_select %p40, 0, %s39
      %s42 = sadd.s32 1, %s33
      %s43 = scalar_select %p40, %s42, %s33
      %p44 = scmp.ge.s32.totalorder %s43, 2
      %s45 = scalar_select %p44, 0, %s43
      %s46 = ssub.s32 %s33, %s45
      %s47 = ssub.s32 %s34, %s41
      %s48 = sor.u32 %s46, %s47
      %p49 = scmp.eq.s32.totalorder %s48, 0
      %s51 = sadd.s32 %s50, 1
      %s52 = scalar_select %p49, %s50, %s51
      %p55 = pneg %p49
      %p56 = scmp.eq.s32.totalorder %s26, 3
      %p57 = por %p55, %p56
      %p58 = scmp.ne.s32.totalorder %s50, %s53
      %p59 = scmp.eq.s32.totalorder %s26, 0
      %p60 = por %p58, %p59
      %p61 = scmp.ne.s32.totalorder %s50, %s53
      %p62 = scmp.eq.s32.totalorder %s31, 3
      %p63 = por %p61, %p62
      %p64 = scmp.ne.s32.totalorder %s53, %s54
      %p65 = scmp.eq.s32.totalorder %s31, 0
      %p66 = por %p64, %p65
      %p67 = scmp.ne.s32.totalorder %s53, %s54
      %p68 = scmp.eq.s32.totalorder %s32, 3
      %p69 = por %p67, %p68
      %p71 = scmp.ne.s32.totalorder %s54, %s70
      %p72 = scmp.eq.s32.totalorder %s32, 0
      %p73 = por %p71, %p72
      %s75 = sadd.s32 %s74, 1
      %p78 = scmp.eq.s32.totalorder %s26, 3
      %p79 = scmp.ne.s32.totalorder %s74, %s76
      %p80 = scmp.eq.s32.totalorder %s26, 0
      %p81 = por %p79, %p80
      %p82 = scmp.ne.s32.totalorder %s74, %s76
      %p83 = scmp.eq.s32.totalorder %s31, 3
      %p84 = por %p82, %p83
      %p85 = scmp.ne.s32.totalorder %s76, %s77
      %p86 = scmp.eq.s32.totalorder %s31, 0
      %p87 = por %p85, %p86
      %p88 = scmp.ne.s32.totalorder %s76, %s77
      %p89 = scmp.eq.s32.totalorder %s32, 3
      %p90 = por %p88, %p89
      %p92 = scmp.ne.s32.totalorder %s77, %s91
      %p93 = scmp.eq.s32.totalorder %s32, 0
      %p94 = por %p92, %p93
      %s96 = sadd.s32 %s95, 1
      %p99 = scmp.eq.s32.totalorder %s26, 3
      %p100 = scmp.ne.s32.totalorder %s95, %s97
      %p101 = scmp.eq.s32.totalorder %s26, 0
      %p102 = por %p100, %p101
      %p103 = scmp.ne.s32.totalorder %s95, %s97
      %p104 = scmp.eq.s32.totalorder %s31, 3
      %p105 = por %p103, %p104
      %p106 = scmp.ne.s32.totalorder %s97, %s98
      %p107 = scmp.eq.s32.totalorder %s31, 0
      %p108 = por %p106, %p107
      %p109 = scmp.ne.s32.totalorder %s97, %s98
      %p110 = scmp.eq.s32.totalorder %s32, 3
      %p111 = por %p109, %p110
      %p113 = scmp.ne.s32.totalorder %s98, %s112
      %p114 = scmp.eq.s32.totalorder %s32, 0
      %p115 = por %p113, %p114
      %s117 = sadd.s32 %s116, 1
      %p120 = scmp.eq.s32.totalorder %s26, 3
      %p121 = scmp.ne.s32.totalorder %s116, %s118
      %p122 = scmp.eq.s32.totalorder %s26, 0
      %p123 = por %p121, %p122
      %p124 = scmp.ne.s32.totalorder %s116, %s118
      %p125 = scmp.eq.s32.totalorder %s31, 3
      %p126 = por %p124, %p125
      %p127 = scmp.ne.s32.totalorder %s118, %s119
      %p128 = scmp.eq.s32.totalorder %s31, 0
      %p129 = por %p127, %p128
      %p130 = scmp.ne.s32.totalorder %s118, %s119
      %p131 = scmp.eq.s32.totalorder %s32, 3
      %p132 = por %p130, %p131
      %p134 = scmp.ne.s32.totalorder %s119, %s133
      %p135 = scmp.eq.s32.totalorder %s32, 0
      %p136 = por %p134, %p135
      %s138 = sadd.s32 %s137, 1
      %p141 = scmp.eq.s32.totalorder %s26, 3
      %p142 = scmp.ne.s32.totalorder %s137, %s139
      %p143 = scmp.eq.s32.totalorder %s26, 0
      %p144 = por %p142, %p143
      %p145 = scmp.ne.s32.totalorder %s137, %s139
      %p146 = scmp.eq.s32.totalorder %s31, 3
      %p147 = por %p145, %p146
      %p148 = scmp.ne.s32.totalorder %s139, %s140
      %p149 = scmp.eq.s32.totalorder %s31, 0
      %p150 = por %p148, %p149
      %p151 = scmp.ne.s32.totalorder %s139, %s140
      %p152 = scmp.eq.s32.totalorder %s32, 3
      %p153 = por %p151, %p152
      %p155 = scmp.ne.s32.totalorder %s140, %s154
      %p156 = scmp.eq.s32.totalorder %s32, 0
      %p157 = por %p155, %p156
      %s158 = ssub.s32 %s33, %s45
      %p159 = scmp.eq.s32.totalorder %s158, 0
      %s161 = sadd.s32 %s160, 1
      %s162 = scalar_select %p159, %s160, %s161
      %p165 = pneg %p159
      %p166 = scmp.eq.s32.totalorder %s26, 3
      %p167 = por %p165, %p166
      %p168 = scmp.ne.s32.totalorder %s160, %s163
      %p169 = scmp.eq.s32.totalorder %s26, 0
      %p170 = por %p168, %p169
      %p171 = scmp.ne.s32.totalorder %s160, %s163
      %p172 = scmp.eq.s32.totalorder %s31, 3
      %p173 = por %p171, %p172
      %p174 = scmp.ne.s32.totalorder %s163, %s164
      %p175 = scmp.eq.s32.totalorder %s31, 0
      %p176 = por %p174, %p175
      %p177 = scmp.ne.s32.totalorder %s163, %s164
      %p178 = scmp.eq.s32.totalorder %s32, 3
      %p179 = por %p177, %p178
      %p181 = scmp.ne.s32.totalorder %s164, %s180
      %p182 = scmp.eq.s32.totalorder %s32, 0
      %p183 = por %p181, %p182
      %s184 = ssub.s32 %s33, %s45
      %p185 = scmp.eq.s32.totalorder %s184, 0
      %s187 = sadd.s32 %s186, 1
      %s188 = scalar_select %p185, %s186, %s187
      %p191 = pneg %p185
      %p192 = scmp.eq.s32.totalorder %s26, 3
      %p193 = por %p191, %p192
      %p194 = scmp.ne.s32.totalorder %s186, %s189
      %p195 = scmp.eq.s32.totalorder %s26, 0
      %p196 = por %p194, %p195
      %p197 = scmp.ne.s32.totalorder %s186, %s189
      %p198 = scmp.eq.s32.totalorder %s31, 3
      %p199 = por %p197, %p198
      %p200 = scmp.ne.s32.totalorder %s189, %s190
      %p201 = scmp.eq.s32.totalorder %s31, 0
      %p202 = por %p200, %p201
      %p203 = scmp.ne.s32.totalorder %s189, %s190
      %p204 = scmp.eq.s32.totalorder %s32, 3
      %p205 = por %p203, %p204
      %p207 = scmp.ne.s32.totalorder %s190, %s206
      %p208 = scmp.eq.s32.totalorder %s32, 0
      %p209 = por %p207, %p208
      %s210 = ssub.s32 %s33, %s45
      %p211 = scmp.eq.s32.totalorder %s210, 0
      %s213 = sadd.s32 %s212, 1
      %s214 = scalar_select %p211, %s212, %s213
      %p217 = pneg %p211
      %p218 = scmp.eq.s32.totalorder %s26, 3
      %p219 = por %p217, %p218
      %p220 = scmp.ne.s32.totalorder %s212, %s215
      %p221 = scmp.eq.s32.totalorder %s26, 0
      %p222 = por %p220, %p221
      %p223 = scmp.ne.s32.totalorder %s212, %s215
      %p224 = scmp.eq.s32.totalorder %s31, 3
      %p225 = por %p223, %p224
      %p226 = scmp.ne.s32.totalorder %s215, %s216
      %p227 = scmp.eq.s32.totalorder %s31, 0
      %p228 = por %p226, %p227
      %p229 = scmp.ne.s32.totalorder %s215, %s216
      %p230 = scmp.eq.s32.totalorder %s32, 3
      %p231 = por %p229, %p230
      %p233 = scmp.ne.s32.totalorder %s216, %s232
      %p234 = scmp.eq.s32.totalorder %s32, 0
      %p235 = por %p233, %p234
      %s236 = ssub.s32 %s33, %s45
      %p237 = scmp.eq.s32.totalorder %s236, 0
      %s239 = sadd.s32 %s238, 1
      %s240 = scalar_select %p237, %s238, %s239
      %p243 = pneg %p237
      %p244 = scmp.eq.s32.totalorder %s26, 3
      %p245 = por %p243, %p244
      %p246 = scmp.ne.s32.totalorder %s238, %s241
      %p247 = scmp.eq.s32.totalorder %s26, 0
      %p248 = por %p246, %p247
      %p249 = scmp.ne.s32.totalorder %s238, %s241
      %p250 = scmp.eq.s32.totalorder %s31, 3
      %p251 = por %p249, %p250
      %p252 = scmp.ne.s32.totalorder %s241, %s242
      %p253 = scmp.eq.s32.totalorder %s31, 0
      %p254 = por %p252, %p253
      %p255 = scmp.ne.s32.totalorder %s241, %s242
      %p256 = scmp.eq.s32.totalorder %s32, 3
      %p257 = por %p255, %p256
      %p259 = scmp.ne.s32.totalorder %s242, %s258
      %p260 = scmp.eq.s32.totalorder %s32, 0
      %p261 = por %p259, %p260
      %p262 = scmp.le.s32.totalorder 1, %s26
      %p263 = scmp.lt.s32.totalorder %s26, 5
      %p264 = pnand %p262, %p263
      %p265 = pneg %p264
      // Predicated region
      $region9: #{tpu_custom_call.1} parent=5 // pred_check
        _
      $region10: #{tpu_custom_call.1} parent=5 // pred_check_branch
        %267 = sbr.rel (%p264) target = $region12
      $region11: #{tpu_custom_call.1} parent=5 // pred_region
        %s268 = ssub.s32 %s26, 1
        // Predicated region
        $region13: #{tpu_custom_call.1} parent=11 // pred_check
          %p269 = pneg %p87
        $region14: #{tpu_custom_call.1} parent=11 // pred_check_branch
          %271 = sbr.rel (%p269) target = $region16
        $region15: #{tpu_custom_call.1} parent=11 // pred_region
          %s273 = ssub.s32 36864, 36864
          %274 = vsyncadd [#allocation7], %s273
          %s275 = sshll.u32 [#allocation6], 4
          %s276 = int_to_ptr.vmem [resolvable:$true] %s275
          %281 = dma.hbm_to_vmem [thread:$0]  %s1, 36864, %s276, [#allocation7], 384, 384, 24
        $region16: #{tpu_custom_call.1} parent=11 // pred_fallthru
          _
        // Predicated region
        $region17: #{tpu_custom_call.1} parent=11 // pred_check
          %p282 = pneg %p108
        $region18: #{tpu_custom_call.1} parent=11 // pred_check_branch
          %284 = sbr.rel (%p282) target = $region20
        $region19: #{tpu_custom_call.1} parent=11 // pred_region
          %s286 = ssub.s32 96, 96
          %287 = vsyncadd [#allocation7], %s286
          %s289 = sshll.u32 [#allocation8], 4
          %s290 = int_to_ptr.vmem [resolvable:$true] %s289
          %292 = dma.hbm_to_vmem [thread:$0]  %s2, 96, %s290, [#allocation7]
        $region20: #{tpu_custom_call.1} parent=11 // pred_fallthru
          _
        // Predicated region
        $region21: #{tpu_custom_call.1} parent=11 // pred_check
          %p293 = pneg %p129
        $region22: #{tpu_custom_call.1} parent=11 // pred_check_branch
          %295 = sbr.rel (%p293) target = $region24
        $region23: #{tpu_custom_call.1} parent=11 // pred_region
          %s297 = ssub.s32 12288, 12288
          %298 = vsyncadd [#allocation10], %s297
          %s299 = sshll.u32 [#allocation9], 4
          %s300 = int_to_ptr.vmem [resolvable:$true] %s299
          %305 = dma.hbm_to_vmem [thread:$0]  %s3, 12288, %s300, [#allocation10], 128, 128, 8
        $region24: #{tpu_custom_call.1} parent=11 // pred_fallthru
          _
        // Predicated region
        $region25: #{tpu_custom_call.1} parent=11 // pred_check
          %p306 = pneg %p150
        $region26: #{tpu_custom_call.1} parent=11 // pred_check_branch
          %308 = sbr.rel (%p306) target = $region28
        $region27: #{tpu_custom_call.1} parent=11 // pred_region
          %s310 = ssub.s32 16, 16
          %311 = vsyncadd [#allocation10], %s310
          %s313 = sshll.u32 [#allocation11], 4
          %s314 = int_to_ptr.vmem [resolvable:$true] %s313
          %316 = dma.hbm_to_vmem [thread:$0]  %s4, 16, %s314, [#allocation10]
        $region28: #{tpu_custom_call.1} parent=11 // pred_fallthru
          _
      $region12: #{tpu_custom_call.1} parent=5 // pred_fallthru
        _
      %p317 = scmp.lt.s32.totalorder %s26, 4
      // Predicated region
      $region29: #{tpu_custom_call.1} parent=5 // pred_check
        %p318 = pneg %p317
      $region30: #{tpu_custom_call.1} parent=5 // pred_check_branch
        %320 = sbr.rel (%p318) target = $region32
      $region31: #{tpu_custom_call.1} parent=5 // pred_region
        // Predicated region
        $region33: #{tpu_custom_call.1} parent=31 // pred_check
          %p321 = pneg %p60
        $region34: #{tpu_custom_call.1} parent=31 // pred_check_branch
          %323 = sbr.rel (%p321) target = $region36
        $region35: #{tpu_custom_call.1} parent=31 // pred_region
          #allocation16 [shape = 'u32[6]{0}', space=smem, size = 0x18, scoped, tag = 'DMA stride descriptor']
          %s324 = sand.u32 %s50, 1
          %s325 = scalar_lea.sflag [#allocation4], %s324
          %s326 = sand.u32 %s50, 1
          %s327 = smul.addr %s326, 768
          %s328 = scalar_lea.vmem [#allocation3], %s327
          %s329 = smul.u32 8, %s33
          %s330 = smul.u32 4, %s34
          %s332 = ssub.s32 12288, 12288
          %333 = vsyncadd %s325, %s332
          %s334 = smul.addr %s330, 6
          %s335 = smul.addr %s329, 48
          %s336 = sadd.s32 %s334, %s335
          %s337 = smul.addr %s336, 64
          %s338 = scalar_lea.hbm %s0, %s337
          %s340 = sshll.u32 1, 14
          %s341 = sxor.u32 4294967295, %s340
          %s343 = sld [smem:[#allocation0]]
          %s344 = sadd.s32 2, %s343
          %s346 = sshll.u32 7, 26
          %s347 = sxor.u32 4294967295, %s346
          %s348 = sand.u32 0, %s347
          %s349 = sshll.u32 %s344, 26
          %s350 = sor.u32 %s348, %s349
          %s351 = sshll.u32 %s328, 4
          %s352 = int_to_ptr.vmem [resolvable:$true] %s351
          %358 = sst [smem:[#allocation16]] 3072
          %s359 = scalar_lea.smem [#allocation16], 1
          %360 = sst [smem:[%s359]] 1536
          %s361 = scalar_lea.smem [#allocation16], 2
          %362 = sst [smem:[%s361]] 4
          %s363 = scalar_lea.smem [#allocation16], 3
          %364 = sst [smem:[%s363]] 384
          %s365 = scalar_lea.smem [#allocation16], 4
          %366 = sst [smem:[%s365]] 384
          %s367 = scalar_lea.smem [#allocation16], 5
          %368 = sst [smem:[%s367]] 24
          %370 = dma.general %s338, 12288, %s352, %s325, [#allocation15], [#allocation16], %s350, 0
        $region36: #{tpu_custom_call.1} parent=31 // pred_fallthru
          _
        // Predicated region
        $region37: #{tpu_custom_call.1} parent=31 // pred_check
          %p371 = pneg %p170
        $region38: #{tpu_custom_call.1} parent=31 // pred_check_branch
          %373 = sbr.rel (%p371) target = $region40
        $region39: #{tpu_custom_call.1} parent=31 // pred_region
          %s374 = sand.u32 %s160, 1
          %s375 = scalar_lea.sflag [#allocation13], %s374
          %s376 = sand.u32 %s160, 1
          %s377 = smul.addr %s376, 48
          %s378 = scalar_lea.vmem [#allocation12], %s377
          %s380 = ssub.s32 768, 768
          %381 = vsyncadd %s375, %s380
          %s382 = smul.addr %s33, 6
          %s383 = smul.addr %s382, 128
          %s384 = scalar_lea.hbm %s5, %s383
          %s386 = sshll.u32 %s378, 4
          %s387 = int_to_ptr.vmem [resolvable:$true] %s386
          %389 = dma.hbm_to_vmem [thread:$0]  %s384, 768, %s387, %s375
        $region40: #{tpu_custom_call.1} parent=31 // pred_fallthru
          _
        // Predicated region
        $region41: #{tpu_custom_call.1} parent=31 // pred_check
          %p390 = pneg %p196
        $region42: #{tpu_custom_call.1} parent=31 // pred_check_branch
          %392 = sbr.rel (%p390) target = $region44
        $region43: #{tpu_custom_call.1} parent=31 // pred_region
          %p393 = scmp.lt.s32.totalorder %s33, 1
          %s394 = scalar_select %p393, %s33, 1
          %s395 = smul.addr %s394, 8
          %s396 = scalar_lea.vmem %s6, %s395
        $region44: #{tpu_custom_call.1} parent=31 // pred_fallthru
          _
      $region32: #{tpu_custom_call.1} parent=5 // pred_fallthru
        _
      %p397 = scmp.le.s32.totalorder 1, %s26
      %p398 = scmp.lt.s32.totalorder %s26, 5
      %p399 = pnand %p397, %p398
      %p400 = pneg %p399
      // Predicated region
      $region45: #{tpu_custom_call.1} parent=5 // pred_check
        _
      $region46: #{tpu_custom_call.1} parent=5 // pred_check_branch
        %402 = sbr.rel (%p399) target = $region48
      $region47: #{tpu_custom_call.1} parent=5 // pred_region
        %s403 = ssub.s32 %s26, 1
        %s404 = sand.u32 %s53, 1
        %s405 = scalar_lea.sflag [#allocation4], %s404
        %s406 = sand.u32 %s53, 1
        %s407 = smul.addr %s406, 768
        %s408 = scalar_lea.vmem [#allocation3], %s407
        // Predicated region
        $region49: #{tpu_custom_call.1} parent=47 // pred_check
          %p409 = pneg %p66
        $region50: #{tpu_custom_call.1} parent=47 // pred_check_branch
          %411 = sbr.rel (%p409) target = $region52
        $region51: #{tpu_custom_call.1} parent=47 // pred_region
          %412 = dma.done %s405, 12288
        $region52: #{tpu_custom_call.1} parent=47 // pred_fallthru
          _
        // Predicated region
        $region53: #{tpu_custom_call.1} parent=47 // pred_check
          %p413 = pneg %p87
        $region54: #{tpu_custom_call.1} parent=47 // pred_check_branch
          %415 = sbr.rel (%p413) target = $region56
        $region55: #{tpu_custom_call.1} parent=47 // pred_region
          %416 = dma.done [#allocation7], 36864
        $region56: #{tpu_custom_call.1} parent=47 // pred_fallthru
          _
        // Predicated region
        $region57: #{tpu_custom_call.1} parent=47 // pred_check
          %p417 = pneg %p108
        $region58: #{tpu_custom_call.1} parent=47 // pred_check_branch
          %419 = sbr.rel (%p417) target = $region60
        $region59: #{tpu_custom_call.1} parent=47 // pred_region
          %420 = dma.done [#allocation7], 96
        $region60: #{tpu_custom_call.1} parent=47 // pred_fallthru
          _
        // Predicated region
        $region61: #{tpu_custom_call.1} parent=47 // pred_check
          %p421 = pneg %p129
        $region62: #{tpu_custom_call.1} parent=47 // pred_check_branch
          %423 = sbr.rel (%p421) target = $region64
        $region63: #{tpu_custom_call.1} parent=47 // pred_region
          %424 = dma.done [#allocation10], 12288
        $region64: #{tpu_custom_call.1} parent=47 // pred_fallthru
          _
        // Predicated region
        $region65: #{tpu_custom_call.1} parent=47 // pred_check
          %p425 = pneg %p150
        $region66: #{tpu_custom_call.1} parent=47 // pred_check_branch
          %427 = sbr.rel (%p425) target = $region68
        $region67: #{tpu_custom_call.1} parent=47 // pred_region
          %428 = dma.done [#allocation10], 16
        $region68: #{tpu_custom_call.1} parent=47 // pred_fallthru
          _
        %s429 = sand.u32 %s163, 1
        %s430 = scalar_lea.sflag [#allocation13], %s429
        %s431 = sand.u32 %s163, 1
        %s432 = smul.addr %s431, 48
        %s433 = scalar_lea.vmem [#allocation12], %s432
        // Predicated region
        $region69: #{tpu_custom_call.1} parent=47 // pred_check
          %p434 = pneg %p176
        $region70: #{tpu_custom_call.1} parent=47 // pred_check_branch
          %436 = sbr.rel (%p434) target = $region72
        $region71: #{tpu_custom_call.1} parent=47 // pred_region
          %437 = dma.done %s430, 768
        $region72: #{tpu_custom_call.1} parent=47 // pred_fallthru
          _
        %s438 = sand.u32 %s53, 1
        %s439 = scalar_lea.sflag [#allocation4], %s438
        %s440 = sand.u32 %s53, 1
        %s441 = smul.addr %s440, 768
        %s442 = scalar_lea.vmem [#allocation3], %s441
        %p443 = pneg %p66
        %p444 = pneg %p63
        %p445 = pneg %p87
        %p446 = pneg %p84
        %p447 = pneg %p108
        %p448 = pneg %p105
        %p449 = pneg %p129
        %p450 = pneg %p126
        %p451 = pneg %p150
        %p452 = pneg %p147
        %s453 = sand.u32 %s163, 1
        %s454 = scalar_lea.sflag [#allocation13], %s453
        %s455 = sand.u32 %s163, 1
        %s456 = smul.addr %s455, 48
        %s457 = scalar_lea.vmem [#allocation12], %s456
        %p458 = pneg %p176
        %p459 = pneg %p173
        %p460 = scmp.lt.s32.totalorder %s35, 1
        %s461 = scalar_select %p460, %s35, 1
        %s462 = smul.addr %s461, 8
        %s463 = scalar_lea.vmem %s6, %s462
        %p464 = pneg %p202
        %p465 = pneg %p199
        %p466 = pneg %p228
        %p467 = pneg %p225
        %s468 = sand.u32 %s215, 1
        %s469 = scalar_lea.sflag [#allocation5], %s468
        %s470 = sand.u32 %s215, 1
        %s471 = smul.addr %s470, 8
        %s472 = scalar_lea.vmem [#allocation14], %s471
        %p473 = pneg %p254
        %p474 = pneg %p251
        %p475 = scmp.lt.s32.totalorder %s35, 1
        %s476 = scalar_select %p475, %s35, 1
        %s477 = smul.addr %s476, 8
        %s478 = scalar_lea.vmem %s8, %s477
        %s479 = smul.u32 8, %s35
        %s480 = smul.u32 4, %s36
        %p481 = scmp.lt.s32.totalorder %s35, 1
        %s482 = scalar_select %p481, %s35, 1
        %s483 = smul.addr %s482, 8
        %s484 = scalar_lea.vmem %s6, %s483
        %p485 = scmp.lt.s32.totalorder %s35, 1
        %s486 = scalar_select %p485, %s35, 1
        %s487 = smul.addr %s486, 8
        %s488 = scalar_lea.vmem %s8, %s487
        %p489 = scmp.eq.s32.totalorder %s36, 0
        // Predicated region
        $region73: #{tpu_custom_call.1} parent=47 // pred_check
          %p490 = pneg %p489
        $region74: #{tpu_custom_call.1} parent=47 // pred_check_branch
          %492 = sbr.rel (%p490) target = $region76
        $region75: #{tpu_custom_call.1} parent=47 // pred_region
          %493 = vst [vmem:[#allocation2] sm:$0xff] 0.0
          %494 = vst [vmem:[#allocation2 + $0x8] sm:$0xff] 0.0
          %495 = vst [vmem:[#allocation2 + $0x10] sm:$0xff] 0.0
          %496 = vst [vmem:[#allocation2 + $0x18] sm:$0xff] 0.0
          %497 = vst [vmem:[#allocation2 + $0x20] sm:$0xff] 0.0
          %498 = vst [vmem:[#allocation2 + $0x28] sm:$0xff] 0.0
        $region76: #{tpu_custom_call.1} parent=47 // pred_fallthru
          _
        %v499 = vld [vmem:[%s408] sm:$0xff]
        %v500 = vld [vmem:[%s408 + $0x8] sm:$0xff]
        %v501 = vld [vmem:[%s408 + $0x10] sm:$0xff]
        %v502 = vld [vmem:[%s408 + $0x18] sm:$0xff]
        %v503 = vld [vmem:[%s408 + $0x20] sm:$0xff]
        %v504 = vld [vmem:[%s408 + $0x28] sm:$0xff]
        %v505 = vld [vmem:[%s408 + $0x30] sm:$0xff]
        %v506 = vld [vmem:[%s408 + $0x38] sm:$0xff]
        %v507 = vld [vmem:[%s408 + $0x40] sm:$0xff]
        %v508 = vld [vmem:[%s408 + $0x48] sm:$0xff]
        %v509 = vld [vmem:[%s408 + $0x50] sm:$0xff]
        %v510 = vld [vmem:[%s408 + $0x58] sm:$0xff]
        %v511 = vld [vmem:[%s408 + $0x60] sm:$0xff]
        %v512 = vld [vmem:[%s408 + $0x68] sm:$0xff]
        %v513 = vld [vmem:[%s408 + $0x70] sm:$0xff]
        %v514 = vld [vmem:[%s408 + $0x78] sm:$0xff]
        %v515 = vld [vmem:[%s408 + $0x80] sm:$0xff]
        %v516 = vld [vmem:[%s408 + $0x88] sm:$0xff]
        %v517 = vld [vmem:[%s408 + $0x90] sm:$0xff]
        %v518 = vld [vmem:[%s408 + $0x98] sm:$0xff]
        %v519 = vld [vmem:[%s408 + $0xa0] sm:$0xff]
        %v520 = vld [vmem:[%s408 + $0xa8] sm:$0xff]
        %v521 = vld [vmem:[%s408 + $0xb0] sm:$0xff]
        %v522 = vld [vmem:[%s408 + $0xb8] sm:$0xff]
        %v523 = vld [vmem:[%s408 + $0xc0] sm:$0xff]
        %v524 = vld [vmem:[%s408 + $0xc8] sm:$0xff]
        %v525 = vld [vmem:[%s408 + $0xd0] sm:$0xff]
        %v526 = vld [vmem:[%s408 + $0xd8] sm:$0xff]
        %v527 = vld [vmem:[%s408 + $0xe0] sm:$0xff]
        %v528 = vld [vmem:[%s408 + $0xe8] sm:$0xff]
        %v529 = vld [vmem:[%s408 + $0xf0] sm:$0xff]
        %v530 = vld [vmem:[%s408 + $0xf8] sm:$0xff]
        %v531 = vld [vmem:[%s408 + $0x100] sm:$0xff]
        %v532 = vld [vmem:[%s408 + $0x108] sm:$0xff]
        %v533 = vld [vmem:[%s408 + $0x110] sm:$0xff]
        %v534 = vld [vmem:[%s408 + $0x118] sm:$0xff]
        %v535 = vld [vmem:[%s408 + $0x120] sm:$0xff]
        %v536 = vld [vmem:[%s408 + $0x128] sm:$0xff]
        %v537 = vld [vmem:[%s408 + $0x130] sm:$0xff]
        %v538 = vld [vmem:[%s408 + $0x138] sm:$0xff]
        %v539 = vld [vmem:[%s408 + $0x140] sm:$0xff]
        %v540 = vld [vmem:[%s408 + $0x148] sm:$0xff]
        %v541 = vld [vmem:[%s408 + $0x150] sm:$0xff]
        %v542 = vld [vmem:[%s408 + $0x158] sm:$0xff]
        %v543 = vld [vmem:[%s408 + $0x160] sm:$0xff]
        %v544 = vld [vmem:[%s408 + $0x168] sm:$0xff]
        %v545 = vld [vmem:[%s408 + $0x170] sm:$0xff]
        %v546 = vld [vmem:[%s408 + $0x178] sm:$0xff]
        %v547 = vld [vmem:[%s408 + $0x180] sm:$0xff]
        %v548 = vld [vmem:[%s408 + $0x188] sm:$0xff]
        %v549 = vld [vmem:[%s408 + $0x190] sm:$0xff]
        %v550 = vld [vmem:[%s408 + $0x198] sm:$0xff]
        %v551 = vld [vmem:[%s408 + $0x1a0] sm:$0xff]
        %v552 = vld [vmem:[%s408 + $0x1a8] sm:$0xff]
        %v553 = vld [vmem:[%s408 + $0x1b0] sm:$0xff]
        %v554 = vld [vmem:[%s408 + $0x1b8] sm:$0xff]
        %v555 = vld [vmem:[%s408 + $0x1c0] sm:$0xff]
        %v556 = vld [vmem:[%s408 + $0x1c8] sm:$0xff]
        %v557 = vld [vmem:[%s408 + $0x1d0] sm:$0xff]
        %v558 = vld [vmem:[%s408 + $0x1d8] sm:$0xff]
        %v559 = vld [vmem:[%s408 + $0x1e0] sm:$0xff]
        %v560 = vld [vmem:[%s408 + $0x1e8] sm:$0xff]
        %v561 = vld [vmem:[%s408 + $0x1f0] sm:$0xff]
        %v562 = vld [vmem:[%s408 + $0x1f8] sm:$0xff]
        %v563 = vld [vmem:[%s408 + $0x200] sm:$0xff]
        %v564 = vld [vmem:[%s408 + $0x208] sm:$0xff]
        %v565 = vld [vmem:[%s408 + $0x210] sm:$0xff]
        %v566 = vld [vmem:[%s408 + $0x218] sm:$0xff]
        %v567 = vld [vmem:[%s408 + $0x220] sm:$0xff]
        %v568 = vld [vmem:[%s408 + $0x228] sm:$0xff]
        %v569 = vld [vmem:[%s408 + $0x230] sm:$0xff]
        %v570 = vld [vmem:[%s408 + $0x238] sm:$0xff]
        %v571 = vld [vmem:[%s408 + $0x240] sm:$0xff]
        %v572 = vld [vmem:[%s408 + $0x248] sm:$0xff]
        %v573 = vld [vmem:[%s408 + $0x250] sm:$0xff]
        %v574 = vld [vmem:[%s408 + $0x258] sm:$0xff]
        %v575 = vld [vmem:[%s408 + $0x260] sm:$0xff]
        %v576 = vld [vmem:[%s408 + $0x268] sm:$0xff]
        %v577 = vld [vmem:[%s408 + $0x270] sm:$0xff]
        %v578 = vld [vmem:[%s408 + $0x278] sm:$0xff]
        %v579 = vld [vmem:[%s408 + $0x280] sm:$0xff]
        %v580 = vld [vmem:[%s408 + $0x288] sm:$0xff]
        %v581 = vld [vmem:[%s408 + $0x290] sm:$0xff]
        %v582 = vld [vmem:[%s408 + $0x298] sm:$0xff]
        %v583 = vld [vmem:[%s408 + $0x2a0] sm:$0xff]
        %v584 = vld [vmem:[%s408 + $0x2a8] sm:$0xff]
        %v585 = vld [vmem:[%s408 + $0x2b0] sm:$0xff]
        %v586 = vld [vmem:[%s408 + $0x2b8] sm:$0xff]
        %v587 = vld [vmem:[%s408 + $0x2c0] sm:$0xff]
        %v588 = vld [vmem:[%s408 + $0x2c8] sm:$0xff]
        %v589 = vld [vmem:[%s408 + $0x2d0] sm:$0xff]
        %v590 = vld [vmem:[%s408 + $0x2d8] sm:$0xff]
        %v591 = vld [vmem:[%s408 + $0x2e0] sm:$0xff]
        %v592 = vld [vmem:[%s408 + $0x2e8] sm:$0xff]
        %v593 = vld [vmem:[%s408 + $0x2f0] sm:$0xff]
        %v594 = vld [vmem:[%s408 + $0x2f8] sm:$0xff]
        %v595 = vunpack.c.l.bf16 %v499
        %v596 = vunpack.c.h.bf16 %v499
        %v597 = vunpack.c.l.bf16 %v500
        %v598 = vunpack.c.h.bf16 %v500
        %v599 = vunpack.c.l.bf16 %v501
        %v600 = vunpack.c.h.bf16 %v501
        %v601 = vunpack.c.l.bf16 %v502
        %v602 = vunpack.c.h.bf16 %v502
        %v603 = vunpack.c.l.bf16 %v503
        %v604 = vunpack.c.h.bf16 %v503
        %v605 = vunpack.c.l.bf16 %v504
        %v606 = vunpack.c.h.bf16 %v504
        %v607 = vunpack.c.l.bf16 %v505
        %v608 = vunpack.c.h.bf16 %v505
        %v609 = vunpack.c.l.bf16 %v506
        %v610 = vunpack.c.h.bf16 %v506
        %v611 = vunpack.c.l.bf16 %v507
        %v612 = vunpack.c.h.bf16 %v507
        %v613 = vunpack.c.l.bf16 %v508
        %v614 = vunpack.c.h.bf16 %v508
        %v615 = vunpack.c.l.bf16 %v509
        %v616 = vunpack.c.h.bf16 %v509
        %v617 = vunpack.c.l.bf16 %v510
        %v618 = vunpack.c.h.bf16 %v510
        %v619 = vunpack.c.l.bf16 %v511
        %v620 = vunpack.c.h.bf16 %v511
        %v621 = vunpack.c.l.bf16 %v512
        %v622 = vunpack.c.h.bf16 %v512
        %v623 = vunpack.c.l.bf16 %v513
        %v624 = vunpack.c.h.bf16 %v513
        %v625 = vunpack.c.l.bf16 %v514
        %v626 = vunpack.c.h.bf16 %v514
        %v627 = vunpack.c.l.bf16 %v515
        %v628 = vunpack.c.h.bf16 %v515
        %v629 = vunpack.c.l.bf16 %v516
        %v630 = vunpack.c.h.bf16 %v516
        %v631 = vunpack.c.l.bf16 %v517
        %v632 = vunpack.c.h.bf16 %v517
        %v633 = vunpack.c.l.bf16 %v518
        %v634 = vunpack.c.h.bf16 %v518
        %v635 = vunpack.c.l.bf16 %v519
        %v636 = vunpack.c.h.bf16 %v519
        %v637 = vunpack.c.l.bf16 %v520
        %v638 = vunpack.c.h.bf16 %v520
        %v639 = vunpack.c.l.bf16 %v521
        %v640 = vunpack.c.h.bf16 %v521
        %v641 = vunpack.c.l.bf16 %v522
        %v642 = vunpack.c.h.bf16 %v522
        %v643 = vunpack.c.l.bf16 %v523
        %v644 = vunpack.c.h.bf16 %v523
        %v645 = vunpack.c.l.bf16 %v524
        %v646 = vunpack.c.h.bf16 %v524
        %v647 = vunpack.c.l.bf16 %v525
        %v648 = vunpack.c.h.bf16 %v525
        %v649 = vunpack.c.l.bf16 %v526
        %v650 = vunpack.c.h.bf16 %v526
        %v651 = vunpack.c.l.bf16 %v527
        %v652 = vunpack.c.h.bf16 %v527
        %v653 = vunpack.c.l.bf16 %v528
        %v654 = vunpack.c.h.bf16 %v528
        %v655 = vunpack.c.l.bf16 %v529
        %v656 = vunpack.c.h.bf16 %v529
        %v657 = vunpack.c.l.bf16 %v530
        %v658 = vunpack.c.h.bf16 %v530
        %v659 = vunpack.c.l.bf16 %v531
        %v660 = vunpack.c.h.bf16 %v531
        %v661 = vunpack.c.l.bf16 %v532
        %v662 = vunpack.c.h.bf16 %v532
        %v663 = vunpack.c.l.bf16 %v533
        %v664 = vunpack.c.h.bf16 %v533
        %v665 = vunpack.c.l.bf16 %v534
        %v666 = vunpack.c.h.bf16 %v534
        %v667 = vunpack.c.l.bf16 %v535
        %v668 = vunpack.c.h.bf16 %v535
        %v669 = vunpack.c.l.bf16 %v536
        %v670 = vunpack.c.h.bf16 %v536
        %v671 = vunpack.c.l.bf16 %v537
        %v672 = vunpack.c.h.bf16 %v537
        %v673 = vunpack.c.l.bf16 %v538
        %v674 = vunpack.c.h.bf16 %v538
        %v675 = vunpack.c.l.bf16 %v539
        %v676 = vunpack.c.h.bf16 %v539
        %v677 = vunpack.c.l.bf16 %v540
        %v678 = vunpack.c.h.bf16 %v540
        %v679 = vunpack.c.l.bf16 %v541
        %v680 = vunpack.c.h.bf16 %v541
        %v681 = vunpack.c.l.bf16 %v542
        %v682 = vunpack.c.h.bf16 %v542
        %v683 = vunpack.c.l.bf16 %v543
        %v684 = vunpack.c.h.bf16 %v543
        %v685 = vunpack.c.l.bf16 %v544
        %v686 = vunpack.c.h.bf16 %v544
        %v687 = vunpack.c.l.bf16 %v545
        %v688 = vunpack.c.h.bf16 %v545
        %v689 = vunpack.c.l.bf16 %v546
        %v690 = vunpack.c.h.bf16 %v546
        %v691 = vunpack.c.l.bf16 %v547
        %v692 = vunpack.c.h.bf16 %v547
        %v693 = vunpack.c.l.bf16 %v548
        %v694 = vunpack.c.h.bf16 %v548
        %v695 = vunpack.c.l.bf16 %v549
        %v696 = vunpack.c.h.bf16 %v549
        %v697 = vunpack.c.l.bf16 %v550
        %v698 = vunpack.c.h.bf16 %v550
        %v699 = vunpack.c.l.bf16 %v551
        %v700 = vunpack.c.h.bf16 %v551
        %v701 = vunpack.c.l.bf16 %v552
        %v702 = vunpack.c.h.bf16 %v552
        %v703 = vunpack.c.l.bf16 %v553
        %v704 = vunpack.c.h.bf16 %v553
        %v705 = vunpack.c.l.bf16 %v554
        %v706 = vunpack.c.h.bf16 %v554
        %v707 = vunpack.c.l.bf16 %v555
        %v708 = vunpack.c.h.bf16 %v555
        %v709 = vunpack.c.l.bf16 %v556
        %v710 = vunpack.c.h.bf16 %v556
        %v711 = vunpack.c.l.bf16 %v557
        %v712 = vunpack.c.h.bf16 %v557
        %v713 = vunpack.c.l.bf16 %v558
        %v714 = vunpack.c.h.bf16 %v558
        %v715 = vunpack.c.l.bf16 %v559
        %v716 = vunpack.c.h.bf16 %v559
        %v717 = vunpack.c.l.bf16 %v560
        %v718 = vunpack.c.h.bf16 %v560
        %v719 = vunpack.c.l.bf16 %v561
        %v720 = vunpack.c.h.bf16 %v561
        %v721 = vunpack.c.l.bf16 %v562
        %v722 = vunpack.c.h.bf16 %v562
        %v723 = vunpack.c.l.bf16 %v563
        %v724 = vunpack.c.h.bf16 %v563
        %v725 = vunpack.c.l.bf16 %v564
        %v726 = vunpack.c.h.bf16 %v564
        %v727 = vunpack.c.l.bf16 %v565
        %v728 = vunpack.c.h.bf16 %v565
        %v729 = vunpack.c.l.bf16 %v566
        %v730 = vunpack.c.h.bf16 %v566
        %v731 = vunpack.c.l.bf16 %v567
        %v732 = vunpack.c.h.bf16 %v567
        %v733 = vunpack.c.l.bf16 %v568
        %v734 = vunpack.c.h.bf16 %v568
        %v735 = vunpack.c.l.bf16 %v569
        %v736 = vunpack.c.h.bf16 %v569
        %v737 = vunpack.c.l.bf16 %v570
        %v738 = vunpack.c.h.bf16 %v570
        %v739 = vunpack.c.l.bf16 %v571
        %v740 = vunpack.c.h.bf16 %v571
        %v741 = vunpack.c.l.bf16 %v572
        %v742 = vunpack.c.h.bf16 %v572
        %v743 = vunpack.c.l.bf16 %v573
        %v744 = vunpack.c.h.bf16 %v573
        %v745 = vunpack.c.l.bf16 %v574
        %v746 = vunpack.c.h.bf16 %v574
        %v747 = vunpack.c.l.bf16 %v575
        %v748 = vunpack.c.h.bf16 %v575
        %v749 = vunpack.c.l.bf16 %v576
        %v750 = vunpack.c.h.bf16 %v576
        %v751 = vunpack.c.l.bf16 %v577
        %v752 = vunpack.c.h.bf16 %v577
        %v753 = vunpack.c.l.bf16 %v578
        %v754 = vunpack.c.h.bf16 %v578
        %v755 = vunpack.c.l.bf16 %v579
        %v756 = vunpack.c.h.bf16 %v579
        %v757 = vunpack.c.l.bf16 %v580
        %v758 = vunpack.c.h.bf16 %v580
        %v759 = vunpack.c.l.bf16 %v581
        %v760 = vunpack.c.h.bf16 %v581
        %v761 = vunpack.c.l.bf16 %v582
        %v762 = vunpack.c.h.bf16 %v582
        %v763 = vunpack.c.l.bf16 %v583
        %v764 = vunpack.c.h.bf16 %v583
        %v765 = vunpack.c.l.bf16 %v584
        %v766 = vunpack.c.h.bf16 %v584
        %v767 = vunpack.c.l.bf16 %v585
        %v768 = vunpack.c.h.bf16 %v585
        %v769 = vunpack.c.l.bf16 %v586
        %v770 = vunpack.c.h.bf16 %v586
        %v771 = vunpack.c.l.bf16 %v587
        %v772 = vunpack.c.h.bf16 %v587
        %v773 = vunpack.c.l.bf16 %v588
        %v774 = vunpack.c.h.bf16 %v588
        %v775 = vunpack.c.l.bf16 %v589
        %v776 = vunpack.c.h.bf16 %v589
        %v777 = vunpack.c.l.bf16 %v590
        %v778 = vunpack.c.h.bf16 %v590
        %v779 = vunpack.c.l.bf16 %v591
        %v780 = vunpack.c.h.bf16 %v591
        %v781 = vunpack.c.l.bf16 %v592
        %v782 = vunpack.c.h.bf16 %v592
        %v783 = vunpack.c.l.bf16 %v593
        %v784 = vunpack.c.h.bf16 %v593
        %v785 = vunpack.c.l.bf16 %v594
        %v786 = vunpack.c.h.bf16 %v594
        %v787 = vld [vmem:[#allocation2] sm:$0xff]
        %v788 = vld [vmem:[#allocation2 + $0x8] sm:$0xff]
        %v789 = vld [vmem:[#allocation2 + $0x10] sm:$0xff]
        %v790 = vld [vmem:[#allocation2 + $0x18] sm:$0xff]
        %v791 = vld [vmem:[#allocation2 + $0x20] sm:$0xff]
        %v792 = vld [vmem:[#allocation2 + $0x28] sm:$0xff]
        %v793 = vadd.f32 %v595, %v601
        %v794 = vadd.f32 %v793, %v607
        %v795 = vadd.f32 %v794, %v613
        %v796 = vrot.slane %v795, 4
        %v797 = vadd.f32 %v795, %v796
        %v798 = vrot.slane %v797, 2
        %v799 = vadd.f32 %v797, %v798
        %v800 = vrot.slane %v799, 1
        %v801 = vadd.f32 %v799, %v800
        %v802 = vadd.f32 %v596, %v602
        %v803 = vadd.f32 %v802, %v608
        %v804 = vadd.f32 %v803, %v614
        %v805 = vrot.slane %v804, 4
        %v806 = vadd.f32 %v804, %v805
        %v807 = vrot.slane %v806, 2
        %v808 = vadd.f32 %v806, %v807
        %v809 = vrot.slane %v808, 1
        %v810 = vadd.f32 %v808, %v809
        %v811 = vadd.f32 %v597, %v603
        %v812 = vadd.f32 %v811, %v609
        %v813 = vadd.f32 %v812, %v615
        %v814 = vrot.slane %v813, 4
        %v815 = vadd.f32 %v813, %v814
        %v816 = vrot.slane %v815, 2
        %v817 = vadd.f32 %v815, %v816
        %v818 = vrot.slane %v817, 1
        %v819 = vadd.f32 %v817, %v818
        %v820 = vadd.f32 %v598, %v604
        %v821 = vadd.f32 %v820, %v610
        %v822 = vadd.f32 %v821, %v616
        %v823 = vrot.slane %v822, 4
        %v824 = vadd.f32 %v822, %v823
        %v825 = vrot.slane %v824, 2
        %v826 = vadd.f32 %v824, %v825
        %v827 = vrot.slane %v826, 1
        %v828 = vadd.f32 %v826, %v827
        %v829 = vadd.f32 %v599, %v605
        %v830 = vadd.f32 %v829, %v611
        %v831 = vadd.f32 %v830, %v617
        %v832 = vrot.slane %v831, 4
        %v833 = vadd.f32 %v831, %v832
        %v834 = vrot.slane %v833, 2
        %v835 = vadd.f32 %v833, %v834
        %v836 = vrot.slane %v835, 1
        %v837 = vadd.f32 %v835, %v836
        %v838 = vadd.f32 %v600, %v606
        %v839 = vadd.f32 %v838, %v612
        %v840 = vadd.f32 %v839, %v618
        %v841 = vrot.slane %v840, 4
        %v842 = vadd.f32 %v840, %v841
        %v843 = vrot.slane %v842, 2
        %v844 = vadd.f32 %v842, %v843
        %v845 = vrot.slane %v844, 1
        %v846 = vadd.f32 %v844, %v845
        %v847 = vadd.f32 %v619, %v625
        %v848 = vadd.f32 %v847, %v631
        %v849 = vadd.f32 %v848, %v637
        %v850 = vrot.slane %v849, 4
        %v851 = vadd.f32 %v849, %v850
        %v852 = vrot.slane %v851, 2
        %v853 = vadd.f32 %v851, %v852
        %v854 = vrot.slane %v853, 1
        %v855 = vadd.f32 %v853, %v854
        %v856 = vadd.f32 %v620, %v626
        %v857 = vadd.f32 %v856, %v632
        %v858 = vadd.f32 %v857, %v638
        %v859 = vrot.slane %v858, 4
        %v860 = vadd.f32 %v858, %v859
        %v861 = vrot.slane %v860, 2
        %v862 = vadd.f32 %v860, %v861
        %v863 = vrot.slane %v862, 1
        %v864 = vadd.f32 %v862, %v863
        %v865 = vadd.f32 %v621, %v627
        %v866 = vadd.f32 %v865, %v633
        %v867 = vadd.f32 %v866, %v639
        %v868 = vrot.slane %v867, 4
        %v869 = vadd.f32 %v867, %v868
        %v870 = vrot.slane %v869, 2
        %v871 = vadd.f32 %v869, %v870
        %v872 = vrot.slane %v871, 1
        %v873 = vadd.f32 %v871, %v872
        %v874 = vadd.f32 %v622, %v628
        %v875 = vadd.f32 %v874, %v634
        %v876 = vadd.f32 %v875, %v640
        %v877 = vrot.slane %v876, 4
        %v878 = vadd.f32 %v876, %v877
        %v879 = vrot.slane %v878, 2
        %v880 = vadd.f32 %v878, %v879
        %v881 = vrot.slane %v880, 1
        %v882 = vadd.f32 %v880, %v881
        %v883 = vadd.f32 %v623, %v629
        %v884 = vadd.f32 %v883, %v635
        %v885 = vadd.f32 %v884, %v641
        %v886 = vrot.slane %v885, 4
        %v887 = vadd.f32 %v885, %v886
        %v888 = vrot.slane %v887, 2
        %v889 = vadd.f32 %v887, %v888
        %v890 = vrot.slane %v889, 1
        %v891 = vadd.f32 %v889, %v890
        %v892 = vadd.f32 %v624, %v630
        %v893 = vadd.f32 %v892, %v636
        %v894 = vadd.f32 %v893, %v642
        %v895 = vrot.slane %v894, 4
        %v896 = vadd.f32 %v894, %v895
        %v897 = vrot.slane %v896, 2
        %v898 = vadd.f32 %v896, %v897
        %v899 = vrot.slane %v898, 1
        %v900 = vadd.f32 %v898, %v899
        %v901 = vadd.f32 %v643, %v649
        %v902 = vadd.f32 %v901, %v655
        %v903 = vadd.f32 %v902, %v661
        %v904 = vrot.slane %v903, 4
        %v905 = vadd.f32 %v903, %v904
        %v906 = vrot.slane %v905, 2
        %v907 = vadd.f32 %v905, %v906
        %v908 = vrot.slane %v907, 1
        %v909 = vadd.f32 %v907, %v908
        %v910 = vadd.f32 %v644, %v650
        %v911 = vadd.f32 %v910, %v656
        %v912 = vadd.f32 %v911, %v662
        %v913 = vrot.slane %v912, 4
        %v914 = vadd.f32 %v912, %v913
        %v915 = vrot.slane %v914, 2
        %v916 = vadd.f32 %v914, %v915
        %v917 = vrot.slane %v916, 1
        %v918 = vadd.f32 %v916, %v917
        %v919 = vadd.f32 %v645, %v651
        %v920 = vadd.f32 %v919, %v657
        %v921 = vadd.f32 %v920, %v663
        %v922 = vrot.slane %v921, 4
        %v923 = vadd.f32 %v921, %v922
        %v924 = vrot.slane %v923, 2
        %v925 = vadd.f32 %v923, %v924
        %v926 = vrot.slane %v925, 1
        %v927 = vadd.f32 %v925, %v926
        %v928 = vadd.f32 %v646, %v652
        %v929 = vadd.f32 %v928, %v658
        %v930 = vadd.f32 %v929, %v664
        %v931 = vrot.slane %v930, 4
        %v932 = vadd.f32 %v930, %v931
        %v933 = vrot.slane %v932, 2
        %v934 = vadd.f32 %v932, %v933
        %v935 = vrot.slane %v934, 1
        %v936 = vadd.f32 %v934, %v935
        %v937 = vadd.f32 %v647, %v653
        %v938 = vadd.f32 %v937, %v659
        %v939 = vadd.f32 %v938, %v665
        %v940 = vrot.slane %v939, 4
        %v941 = vadd.f32 %v939, %v940
        %v942 = vrot.slane %v941, 2
        %v943 = vadd.f32 %v941, %v942
        %v944 = vrot.slane %v943, 1
        %v945 = vadd.f32 %v943, %v944
        %v946 = vadd.f32 %v648, %v654
        %v947 = vadd.f32 %v946, %v660
        %v948 = vadd.f32 %v947, %v666
        %v949 = vrot.slane %v948, 4
        %v950 = vadd.f32 %v948, %v949
        %v951 = vrot.slane %v950, 2
        %v952 = vadd.f32 %v950, %v951
        %v953 = vrot.slane %v952, 1
        %v954 = vadd.f32 %v952, %v953
        %v955 = vadd.f32 %v667, %v673
        %v956 = vadd.f32 %v955, %v679
        %v957 = vadd.f32 %v956, %v685
        %v958 = vrot.slane %v957, 4
        %v959 = vadd.f32 %v957, %v958
        %v960 = vrot.slane %v959, 2
        %v961 = vadd.f32 %v959, %v960
        %v962 = vrot.slane %v961, 1
        %v963 = vadd.f32 %v961, %v962
        %v964 = vadd.f32 %v668, %v674
        %v965 = vadd.f32 %v964, %v680
        %v966 = vadd.f32 %v965, %v686
        %v967 = vrot.slane %v966, 4
        %v968 = vadd.f32 %v966, %v967
        %v969 = vrot.slane %v968, 2
        %v970 = vadd.f32 %v968, %v969
        %v971 = vrot.slane %v970, 1
        %v972 = vadd.f32 %v970, %v971
        %v973 = vadd.f32 %v669, %v675
        %v974 = vadd.f32 %v973, %v681
        %v975 = vadd.f32 %v974, %v687
        %v976 = vrot.slane %v975, 4
        %v977 = vadd.f32 %v975, %v976
        %v978 = vrot.slane %v977, 2
        %v979 = vadd.f32 %v977, %v978
        %v980 = vrot.slane %v979, 1
        %v981 = vadd.f32 %v979, %v980
        %v982 = vadd.f32 %v670, %v676
        %v983 = vadd.f32 %v982, %v682
        %v984 = vadd.f32 %v983, %v688
        %v985 = vrot.slane %v984, 4
        %v986 = vadd.f32 %v984, %v985
        %v987 = vrot.slane %v986, 2
        %v988 = vadd.f32 %v986, %v987
        %v989 = vrot.slane %v988, 1
        %v990 = vadd.f32 %v988, %v989
        %v991 = vadd.f32 %v671, %v677
        %v992 = vadd.f32 %v991, %v683
        %v993 = vadd.f32 %v992, %v689
        %v994 = vrot.slane %v993, 4
        %v995 = vadd.f32 %v993, %v994
        %v996 = vrot.slane %v995, 2
        %v997 = vadd.f32 %v995, %v996
        %v998 = vrot.slane %v997, 1
        %v999 = vadd.f32 %v997, %v998
        %v1000 = vadd.f32 %v672, %v678
        %v1001 = vadd.f32 %v1000, %v684
        %v1002 = vadd.f32 %v1001, %v690
        %v1003 = vrot.slane %v1002, 4
        %v1004 = vadd.f32 %v1002, %v1003
        %v1005 = vrot.slane %v1004, 2
        %v1006 = vadd.f32 %v1004, %v1005
        %v1007 = vrot.slane %v1006, 1
        %v1008 = vadd.f32 %v1006, %v1007
        %v1009 = vadd.f32 %v691, %v697
        %v1010 = vadd.f32 %v1009, %v703
        %v1011 = vadd.f32 %v1010, %v709
        %v1012 = vrot.slane %v1011, 4
        %v1013 = vadd.f32 %v1011, %v1012
        %v1014 = vrot.slane %v1013, 2
        %v1015 = vadd.f32 %v1013, %v1014
        %v1016 = vrot.slane %v1015, 1
        %v1017 = vadd.f32 %v1015, %v1016
        %v1018 = vadd.f32 %v692, %v698
        %v1019 = vadd.f32 %v1018, %v704
        %v1020 = vadd.f32 %v1019, %v710
        %v1021 = vrot.slane %v1020, 4
        %v1022 = vadd.f32 %v1020, %v1021
        %v1023 = vrot.slane %v1022, 2
        %v1024 = vadd.f32 %v1022, %v1023
        %v1025 = vrot.slane %v1024, 1
        %v1026 = vadd.f32 %v1024, %v1025
        %v1027 = vadd.f32 %v693, %v699
        %v1028 = vadd.f32 %v1027, %v705
        %v1029 = vadd.f32 %v1028, %v711
        %v1030 = vrot.slane %v1029, 4
        %v1031 = vadd.f32 %v1029, %v1030
        %v1032 = vrot.slane %v1031, 2
        %v1033 = vadd.f32 %v1031, %v1032
        %v1034 = vrot.slane %v1033, 1
        %v1035 = vadd.f32 %v1033, %v1034
        %v1036 = vadd.f32 %v694, %v700
        %v1037 = vadd.f32 %v1036, %v706
        %v1038 = vadd.f32 %v1037, %v712
        %v1039 = vrot.slane %v1038, 4
        %v1040 = vadd.f32 %v1038, %v1039
        %v1041 = vrot.slane %v1040, 2
        %v1042 = vadd.f32 %v1040, %v1041
        %v1043 = vrot.slane %v1042, 1
        %v1044 = vadd.f32 %v1042, %v1043
        %v1045 = vadd.f32 %v695, %v701
        %v1046 = vadd.f32 %v1045, %v707
        %v1047 = vadd.f32 %v1046, %v713
        %v1048 = vrot.slane %v1047, 4
        %v1049 = vadd.f32 %v1047, %v1048
        %v1050 = vrot.slane %v1049, 2
        %v1051 = vadd.f32 %v1049, %v1050
        %v1052 = vrot.slane %v1051, 1
        %v1053 = vadd.f32 %v1051, %v1052
        %v1054 = vadd.f32 %v696, %v702
        %v1055 = vadd.f32 %v1054, %v708
        %v1056 = vadd.f32 %v1055, %v714
        %v1057 = vrot.slane %v1056, 4
        %v1058 = vadd.f32 %v1056, %v1057
        %v1059 = vrot.slane %v1058, 2
        %v1060 = vadd.f32 %v1058, %v1059
        %v1061 = vrot.slane %v1060, 1
        %v1062 = vadd.f32 %v1060, %v1061
        %v1063 = vadd.f32 %v715, %v721
        %v1064 = vadd.f32 %v1063, %v727
        %v1065 = vadd.f32 %v1064, %v733
        %v1066 = vrot.slane %v1065, 4
        %v1067 = vadd.f32 %v1065, %v1066
        %v1068 = vrot.slane %v1067, 2
        %v1069 = vadd.f32 %v1067, %v1068
        %v1070 = vrot.slane %v1069, 1
        %v1071 = vadd.f32 %v1069, %v1070
        %v1072 = vadd.f32 %v716, %v722
        %v1073 = vadd.f32 %v1072, %v728
        %v1074 = vadd.f32 %v1073, %v734
        %v1075 = vrot.slane %v1074, 4
        %v1076 = vadd.f32 %v1074, %v1075
        %v1077 = vrot.slane %v1076, 2
        %v1078 = vadd.f32 %v1076, %v1077
        %v1079 = vrot.slane %v1078, 1
        %v1080 = vadd.f32 %v1078, %v1079
        %v1081 = vadd.f32 %v717, %v723
        %v1082 = vadd.f32 %v1081, %v729
        %v1083 = vadd.f32 %v1082, %v735
        %v1084 = vrot.slane %v1083, 4
        %v1085 = vadd.f32 %v1083, %v1084
        %v1086 = vrot.slane %v1085, 2
        %v1087 = vadd.f32 %v1085, %v1086
        %v1088 = vrot.slane %v1087, 1
        %v1089 = vadd.f32 %v1087, %v1088
        %v1090 = vadd.f32 %v718, %v724
        %v1091 = vadd.f32 %v1090, %v730
        %v1092 = vadd.f32 %v1091, %v736
        %v1093 = vrot.slane %v1092, 4
        %v1094 = vadd.f32 %v1092, %v1093
        %v1095 = vrot.slane %v1094, 2
        %v1096 = vadd.f32 %v1094, %v1095
        %v1097 = vrot.slane %v1096, 1
        %v1098 = vadd.f32 %v1096, %v1097
        %v1099 = vadd.f32 %v719, %v725
        %v1100 = vadd.f32 %v1099, %v731
        %v1101 = vadd.f32 %v1100, %v737
        %v1102 = vrot.slane %v1101, 4
        %v1103 = vadd.f32 %v1101, %v1102
        %v1104 = vrot.slane %v1103, 2
        %v1105 = vadd.f32 %v1103, %v1104
        %v1106 = vrot.slane %v1105, 1
        %v1107 = vadd.f32 %v1105, %v1106
        %v1108 = vadd.f32 %v720, %v726
        %v1109 = vadd.f32 %v1108, %v732
        %v1110 = vadd.f32 %v1109, %v738
        %v1111 = vrot.slane %v1110, 4
        %v1112 = vadd.f32 %v1110, %v1111
        %v1113 = vrot.slane %v1112, 2
        %v1114 = vadd.f32 %v1112, %v1113
        %v1115 = vrot.slane %v1114, 1
        %v1116 = vadd.f32 %v1114, %v1115
        %v1117 = vadd.f32 %v739, %v745
        %v1118 = vadd.f32 %v1117, %v751
        %v1119 = vadd.f32 %v1118, %v757
        %v1120 = vrot.slane %v1119, 4
        %v1121 = vadd.f32 %v1119, %v1120
        %v1122 = vrot.slane %v1121, 2
        %v1123 = vadd.f32 %v1121, %v1122
        %v1124 = vrot.slane %v1123, 1
        %v1125 = vadd.f32 %v1123, %v1124
        %v1126 = vadd.f32 %v740, %v746
        %v1127 = vadd.f32 %v1126, %v752
        %v1128 = vadd.f32 %v1127, %v758
        %v1129 = vrot.slane %v1128, 4
        %v1130 = vadd.f32 %v1128, %v1129
        %v1131 = vrot.slane %v1130, 2
        %v1132 = vadd.f32 %v1130, %v1131
        %v1133 = vrot.slane %v1132, 1
        %v1134 = vadd.f32 %v1132, %v1133
        %v1135 = vadd.f32 %v741, %v747
        %v1136 = vadd.f32 %v1135, %v753
        %v1137 = vadd.f32 %v1136, %v759
        %v1138 = vrot.slane %v1137, 4
        %v1139 = vadd.f32 %v1137, %v1138
        %v1140 = vrot.slane %v1139, 2
        %v1141 = vadd.f32 %v1139, %v1140
        %v1142 = vrot.slane %v1141, 1
        %v1143 = vadd.f32 %v1141, %v1142
        %v1144 = vadd.f32 %v742, %v748
        %v1145 = vadd.f32 %v1144, %v754
        %v1146 = vadd.f32 %v1145, %v760
        %v1147 = vrot.slane %v1146, 4
        %v1148 = vadd.f32 %v1146, %v1147
        %v1149 = vrot.slane %v1148, 2
        %v1150 = vadd.f32 %v1148, %v1149
        %v1151 = vrot.slane %v1150, 1
        %v1152 = vadd.f32 %v1150, %v1151
        %v1153 = vadd.f32 %v743, %v749
        %v1154 = vadd.f32 %v1153, %v755
        %v1155 = vadd.f32 %v1154, %v761
        %v1156 = vrot.slane %v1155, 4
        %v1157 = vadd.f32 %v1155, %v1156
        %v1158 = vrot.slane %v1157, 2
        %v1159 = vadd.f32 %v1157, %v1158
        %v1160 = vrot.slane %v1159, 1
        %v1161 = vadd.f32 %v1159, %v1160
        %v1162 = vadd.f32 %v744, %v750
        %v1163 = vadd.f32 %v1162, %v756
        %v1164 = vadd.f32 %v1163, %v762
        %v1165 = vrot.slane %v1164, 4
        %v1166 = vadd.f32 %v1164, %v1165
        %v1167 = vrot.slane %v1166, 2
        %v1168 = vadd.f32 %v1166, %v1167
        %v1169 = vrot.slane %v1168, 1
        %v1170 = vadd.f32 %v1168, %v1169
        %v1171 = vadd.f32 %v763, %v769
        %v1172 = vadd.f32 %v1171, %v775
        %v1173 = vadd.f32 %v1172, %v781
        %v1174 = vrot.slane %v1173, 4
        %v1175 = vadd.f32 %v1173, %v1174
        %v1176 = vrot.slane %v1175, 2
        %v1177 = vadd.f32 %v1175, %v1176
        %v1178 = vrot.slane %v1177, 1
        %v1179 = vadd.f32 %v1177, %v1178
        %v1180 = vadd.f32 %v764, %v770
        %v1181 = vadd.f32 %v1180, %v776
        %v1182 = vadd.f32 %v1181, %v782
        %v1183 = vrot.slane %v1182, 4
        %v1184 = vadd.f32 %v1182, %v1183
        %v1185 = vrot.slane %v1184, 2
        %v1186 = vadd.f32 %v1184, %v1185
        %v1187 = vrot.slane %v1186, 1
        %v1188 = vadd.f32 %v1186, %v1187
        %v1189 = vadd.f32 %v765, %v771
        %v1190 = vadd.f32 %v1189, %v777
        %v1191 = vadd.f32 %v1190, %v783
        %v1192 = vrot.slane %v1191, 4
        %v1193 = vadd.f32 %v1191, %v1192
        %v1194 = vrot.slane %v1193, 2
        %v1195 = vadd.f32 %v1193, %v1194
        %v1196 = vrot.slane %v1195, 1
        %v1197 = vadd.f32 %v1195, %v1196
        %v1198 = vadd.f32 %v766, %v772
        %v1199 = vadd.f32 %v1198, %v778
        %v1200 = vadd.f32 %v1199, %v784
        %v1201 = vrot.slane %v1200, 4
        %v1202 = vadd.f32 %v1200, %v1201
        %v1203 = vrot.slane %v1202, 2
        %v1204 = vadd.f32 %v1202, %v1203
        %v1205 = vrot.slane %v1204, 1
        %v1206 = vadd.f32 %v1204, %v1205
        %v1207 = vadd.f32 %v767, %v773
        %v1208 = vadd.f32 %v1207, %v779
        %v1209 = vadd.f32 %v1208, %v785
        %v1210 = vrot.slane %v1209, 4
        %v1211 = vadd.f32 %v1209, %v1210
        %v1212 = vrot.slane %v1211, 2
        %v1213 = vadd.f32 %v1211, %v1212
        %v1214 = vrot.slane %v1213, 1
        %v1215 = vadd.f32 %v1213, %v1214
        %v1216 = vadd.f32 %v768, %v774
        %v1217 = vadd.f32 %v1216, %v780
        %v1218 = vadd.f32 %v1217, %v786
        %v1219 = vrot.slane %v1218, 4
        %v1220 = vadd.f32 %v1218, %v1219
        %v1221 = vrot.slane %v1220, 2
        %v1222 = vadd.f32 %v1220, %v1221
        %v1223 = vrot.slane %v1222, 1
        %v1224 = vadd.f32 %v1222, %v1223
        %vm1273 = vcmask 1041409
        %v1274 = vsel %vm1273, %v855, %v801
        %vm1275 = vcmask 1042434
        %v1276 = vsel %vm1275, %v909, %v1274
        %vm1277 = vcmask 1043459
        %v1278 = vsel %vm1277, %v963, %v1276
        %vm1279 = vcmask 1044484
        %v1280 = vsel %vm1279, %v1017, %v1278
        %vm1281 = vcmask 1045509
        %v1282 = vsel %vm1281, %v1071, %v1280
        %vm1283 = vcmask 1046534
        %v1284 = vsel %vm1283, %v1125, %v1282
        %vm1285 = vcmask 1047559
        %v1286 = vsel %vm1285, %v1179, %v1284
        %v1287 = vsel %vm1273, %v864, %v810
        %v1288 = vsel %vm1275, %v918, %v1287
        %v1289 = vsel %vm1277, %v972, %v1288
        %v1290 = vsel %vm1279, %v1026, %v1289
        %v1291 = vsel %vm1281, %v1080, %v1290
        %v1292 = vsel %vm1283, %v1134, %v1291
        %v1293 = vsel %vm1285, %v1188, %v1292
        %v1294 = vsel %vm1273, %v873, %v819
        %v1295 = vsel %vm1275, %v927, %v1294
        %v1296 = vsel %vm1277, %v981, %v1295
        %v1297 = vsel %vm1279, %v1035, %v1296
        %v1298 = vsel %vm1281, %v1089, %v1297
        %v1299 = vsel %vm1283, %v1143, %v1298
        %v1300 = vsel %vm1285, %v1197, %v1299
        %v1301 = vsel %vm1273, %v882, %v828
        %v1302 = vsel %vm1275, %v936, %v1301
        %v1303 = vsel %vm1277, %v990, %v1302
        %v1304 = vsel %vm1279, %v1044, %v1303
        %v1305 = vsel %vm1281, %v1098, %v1304
        %v1306 = vsel %vm1283, %v1152, %v1305
        %v1307 = vsel %vm1285, %v1206, %v1306
        %v1308 = vsel %vm1273, %v891, %v837
        %v1309 = vsel %vm1275, %v945, %v1308
        %v1310 = vsel %vm1277, %v999, %v1309
        %v1311 = vsel %vm1279, %v1053, %v1310
        %v1312 = vsel %vm1281, %v1107, %v1311
        %v1313 = vsel %vm1283, %v1161, %v1312
        %v1314 = vsel %vm1285, %v1215, %v1313
        %v1315 = vsel %vm1273, %v900, %v846
        %v1316 = vsel %vm1275, %v954, %v1315
        %v1317 = vsel %vm1277, %v1008, %v1316
        %v1318 = vsel %vm1279, %v1062, %v1317
        %v1319 = vsel %vm1281, %v1116, %v1318
        %v1320 = vsel %vm1283, %v1170, %v1319
        %v1321 = vsel %vm1285, %v1224, %v1320
        %v1328 = vadd.f32 %v787, %v1286
        %v1329 = vadd.f32 %v788, %v1293
        %v1330 = vadd.f32 %v789, %v1300
        %v1331 = vadd.f32 %v790, %v1307
        %v1332 = vadd.f32 %v791, %v1314
        %v1333 = vadd.f32 %v792, %v1321
        %1334 = vst [vmem:[#allocation2] sm:$0xff] %v1328
        %1335 = vst [vmem:[#allocation2 + $0x8] sm:$0xff] %v1329
        %1336 = vst [vmem:[#allocation2 + $0x10] sm:$0xff] %v1330
        %1337 = vst [vmem:[#allocation2 + $0x18] sm:$0xff] %v1331
        %1338 = vst [vmem:[#allocation2 + $0x20] sm:$0xff] %v1332
        %1339 = vst [vmem:[#allocation2 + $0x28] sm:$0xff] %v1333
        %p1340 = scmp.eq.s32.totalorder %s36, 1
        // Predicated region
        $region77: #{tpu_custom_call.1} parent=47 // pred_check
          %p1341 = pneg %p1340
        $region78: #{tpu_custom_call.1} parent=47 // pred_check_branch
          %1343 = sbr.rel (%p1341) target = $region80
        $region79: #{tpu_custom_call.1} parent=47 // pred_region
          %v1344 = vld [vmem:[#allocation2] sm:$0xff]
          %v1345 = vld [vmem:[#allocation2 + $0x8] sm:$0xff]
          %v1346 = vld [vmem:[#allocation2 + $0x10] sm:$0xff]
          %v1347 = vld [vmem:[#allocation2 + $0x18] sm:$0xff]
          %v1348 = vld [vmem:[#allocation2 + $0x20] sm:$0xff]
          %v1349 = vld [vmem:[#allocation2 + $0x28] sm:$0xff]
          %v1350 = vmul.f32 %v1344, 0.015625
          %v1351 = vmul.f32 %v1345, 0.015625
          %v1352 = vmul.f32 %v1346, 0.015625
          %v1353 = vmul.f32 %v1347, 0.015625
          %v1354 = vmul.f32 %v1348, 0.015625
          %v1355 = vmul.f32 %v1349, 0.015625
          %v1356 = vpack.c.bf16 %v1350, %v1350
          %v1357 = vpack.c.bf16 %v1351, %v1351
          %v1358 = vpack.c.bf16 %v1352, %v1352
          %v1359 = vpack.c.bf16 %v1353, %v1353
          %v1360 = vpack.c.bf16 %v1354, %v1354
          %v1361 = vpack.c.bf16 %v1355, %v1355
          %v1362 = vld [vmem:[#allocation6] sm:$0xff]
          %v1363 = vld [vmem:[#allocation6 + $0x8] sm:$0xff]
          %v1364 = vld [vmem:[#allocation6 + $0x10] sm:$0xff]
          %v1365 = vld [vmem:[#allocation6 + $0x18] sm:$0xff]
          %v1366 = vld [vmem:[#allocation6 + $0x20] sm:$0xff]
          %v1367 = vld [vmem:[#allocation6 + $0x28] sm:$0xff]
          %v1368 = vld [vmem:[#allocation6 + $0x30] sm:$0xff]
          %v1369 = vld [vmem:[#allocation6 + $0x38] sm:$0xff]
          %v1370 = vld [vmem:[#allocation6 + $0x40] sm:$0xff]
          %v1371 = vld [vmem:[#allocation6 + $0x48] sm:$0xff]
          %v1372 = vld [vmem:[#allocation6 + $0x50] sm:$0xff]
          %v1373 = vld [vmem:[#allocation6 + $0x58] sm:$0xff]
          %v1374 = vld [vmem:[#allocation6 + $0x60] sm:$0xff]
          %v1375 = vld [vmem:[#allocation6 + $0x68] sm:$0xff]
          %v1376 = vld [vmem:[#allocation6 + $0x70] sm:$0xff]
          %v1377 = vld [vmem:[#allocation6 + $0x78] sm:$0xff]
          %v1378 = vld [vmem:[#allocation6 + $0x80] sm:$0xff]
          %v1379 = vld [vmem:[#allocation6 + $0x88] sm:$0xff]
          %v1380 = vld [vmem:[#allocation6 + $0x90] sm:$0xff]
          %v1381 = vld [vmem:[#allocation6 + $0x98] sm:$0xff]
          %v1382 = vld [vmem:[#allocation6 + $0xa0] sm:$0xff]
          %v1383 = vld [vmem:[#allocation6 + $0xa8] sm:$0xff]
          %v1384 = vld [vmem:[#allocation6 + $0xb0] sm:$0xff]
          %v1385 = vld [vmem:[#allocation6 + $0xb8] sm:$0xff]
          %v1386 = vld [vmem:[#allocation6 + $0xc0] sm:$0xff]
          %v1387 = vld [vmem:[#allocation6 + $0xc8] sm:$0xff]
          %v1388 = vld [vmem:[#allocation6 + $0xd0] sm:$0xff]
          %v1389 = vld [vmem:[#allocation6 + $0xd8] sm:$0xff]
          %v1390 = vld [vmem:[#allocation6 + $0xe0] sm:$0xff]
          %v1391 = vld [vmem:[#allocation6 + $0xe8] sm:$0xff]
          %v1392 = vld [vmem:[#allocation6 + $0xf0] sm:$0xff]
          %v1393 = vld [vmem:[#allocation6 + $0xf8] sm:$0xff]
          %v1394 = vld [vmem:[#allocation6 + $0x100] sm:$0xff]
          %v1395 = vld [vmem:[#allocation6 + $0x108] sm:$0xff]
          %v1396 = vld [vmem:[#allocation6 + $0x110] sm:$0xff]
          %v1397 = vld [vmem:[#allocation6 + $0x118] sm:$0xff]
          %v1398 = vld [vmem:[#allocation6 + $0x120] sm:$0xff]
          %v1399 = vld [vmem:[#allocation6 + $0x128] sm:$0xff]
          %v1400 = vld [vmem:[#allocation6 + $0x130] sm:$0xff]
          %v1401 = vld [vmem:[#allocation6 + $0x138] sm:$0xff]
          %v1402 = vld [vmem:[#allocation6 + $0x140] sm:$0xff]
          %v1403 = vld [vmem:[#allocation6 + $0x148] sm:$0xff]
          %v1404 = vld [vmem:[#allocation6 + $0x150] sm:$0xff]
          %v1405 = vld [vmem:[#allocation6 + $0x158] sm:$0xff]
          %v1406 = vld [vmem:[#allocation6 + $0x160] sm:$0xff]
          %v1407 = vld [vmem:[#allocation6 + $0x168] sm:$0xff]
          %v1408 = vld [vmem:[#allocation6 + $0x170] sm:$0xff]
          %v1409 = vld [vmem:[#allocation6 + $0x178] sm:$0xff]
          %v1410 = vld [vmem:[#allocation6 + $0x180] sm:$0xff]
          %v1411 = vld [vmem:[#allocation6 + $0x188] sm:$0xff]
          %v1412 = vld [vmem:[#allocation6 + $0x190] sm:$0xff]
          %v1413 = vld [vmem:[#allocation6 + $0x198] sm:$0xff]
          %v1414 = vld [vmem:[#allocation6 + $0x1a0] sm:$0xff]
          %v1415 = vld [vmem:[#allocation6 + $0x1a8] sm:$0xff]
          %v1416 = vld [vmem:[#allocation6 + $0x1b0] sm:$0xff]
          %v1417 = vld [vmem:[#allocation6 + $0x1b8] sm:$0xff]
          %v1418 = vld [vmem:[#allocation6 + $0x1c0] sm:$0xff]
          %v1419 = vld [vmem:[#allocation6 + $0x1c8] sm:$0xff]
          %v1420 = vld [vmem:[#allocation6 + $0x1d0] sm:$0xff]
          %v1421 = vld [vmem:[#allocation6 + $0x1d8] sm:$0xff]
          %v1422 = vld [vmem:[#allocation6 + $0x1e0] sm:$0xff]
          %v1423 = vld [vmem:[#allocation6 + $0x1e8] sm:$0xff]
          %v1424 = vld [vmem:[#allocation6 + $0x1f0] sm:$0xff]
          %v1425 = vld [vmem:[#allocation6 + $0x1f8] sm:$0xff]
          %v1426 = vld [vmem:[#allocation6 + $0x200] sm:$0xff]
          %v1427 = vld [vmem:[#allocation6 + $0x208] sm:$0xff]
          %v1428 = vld [vmem:[#allocation6 + $0x210] sm:$0xff]
          %v1429 = vld [vmem:[#allocation6 + $0x218] sm:$0xff]
          %v1430 = vld [vmem:[#allocation6 + $0x220] sm:$0xff]
          %v1431 = vld [vmem:[#allocation6 + $0x228] sm:$0xff]
          %v1432 = vld [vmem:[#allocation6 + $0x230] sm:$0xff]
          %v1433 = vld [vmem:[#allocation6 + $0x238] sm:$0xff]
          %v1434 = vld [vmem:[#allocation6 + $0x240] sm:$0xff]
          %v1435 = vld [vmem:[#allocation6 + $0x248] sm:$0xff]
          %v1436 = vld [vmem:[#allocation6 + $0x250] sm:$0xff]
          %v1437 = vld [vmem:[#allocation6 + $0x258] sm:$0xff]
          %v1438 = vld [vmem:[#allocation6 + $0x260] sm:$0xff]
          %v1439 = vld [vmem:[#allocation6 + $0x268] sm:$0xff]
          %v1440 = vld [vmem:[#allocation6 + $0x270] sm:$0xff]
          %v1441 = vld [vmem:[#allocation6 + $0x278] sm:$0xff]
          %v1442 = vld [vmem:[#allocation6 + $0x280] sm:$0xff]
          %v1443 = vld [vmem:[#allocation6 + $0x288] sm:$0xff]
          %v1444 = vld [vmem:[#allocation6 + $0x290] sm:$0xff]
          %v1445 = vld [vmem:[#allocation6 + $0x298] sm:$0xff]
          %v1446 = vld [vmem:[#allocation6 + $0x2a0] sm:$0xff]
          %v1447 = vld [vmem:[#allocation6 + $0x2a8] sm:$0xff]
          %v1448 = vld [vmem:[#allocation6 + $0x2b0] sm:$0xff]
          %v1449 = vld [vmem:[#allocation6 + $0x2b8] sm:$0xff]
          %v1450 = vld [vmem:[#allocation6 + $0x2c0] sm:$0xff]
          %v1451 = vld [vmem:[#allocation6 + $0x2c8] sm:$0xff]
          %v1452 = vld [vmem:[#allocation6 + $0x2d0] sm:$0xff]
          %v1453 = vld [vmem:[#allocation6 + $0x2d8] sm:$0xff]
          %v1454 = vld [vmem:[#allocation6 + $0x2e0] sm:$0xff]
          %v1455 = vld [vmem:[#allocation6 + $0x2e8] sm:$0xff]
          %v1456 = vld [vmem:[#allocation6 + $0x2f0] sm:$0xff]
          %v1457 = vld [vmem:[#allocation6 + $0x2f8] sm:$0xff]
          %v1458 = vld [vmem:[#allocation6 + $0x300] sm:$0xff]
          %v1459 = vld [vmem:[#allocation6 + $0x308] sm:$0xff]
          %v1460 = vld [vmem:[#allocation6 + $0x310] sm:$0xff]
          %v1461 = vld [vmem:[#allocation6 + $0x318] sm:$0xff]
          %v1462 = vld [vmem:[#allocation6 + $0x320] sm:$0xff]
          %v1463 = vld [vmem:[#allocation6 + $0x328] sm:$0xff]
          %v1464 = vld [vmem:[#allocation6 + $0x330] sm:$0xff]
          %v1465 = vld [vmem:[#allocation6 + $0x338] sm:$0xff]
          %v1466 = vld [vmem:[#allocation6 + $0x340] sm:$0xff]
          %v1467 = vld [vmem:[#allocation6 + $0x348] sm:$0xff]
          %v1468 = vld [vmem:[#allocation6 + $0x350] sm:$0xff]
          %v1469 = vld [vmem:[#allocation6 + $0x358] sm:$0xff]
          %v1470 = vld [vmem:[#allocation6 + $0x360] sm:$0xff]
          %v1471 = vld [vmem:[#allocation6 + $0x368] sm:$0xff]
          %v1472 = vld [vmem:[#allocation6 + $0x370] sm:$0xff]
          %v1473 = vld [vmem:[#allocation6 + $0x378] sm:$0xff]
          %v1474 = vld [vmem:[#allocation6 + $0x380] sm:$0xff]
          %v1475 = vld [vmem:[#allocation6 + $0x388] sm:$0xff]
          %v1476 = vld [vmem:[#allocation6 + $0x390] sm:$0xff]
          %v1477 = vld [vmem:[#allocation6 + $0x398] sm:$0xff]
          %v1478 = vld [vmem:[#allocation6 + $0x3a0] sm:$0xff]
          %v1479 = vld [vmem:[#allocation6 + $0x3a8] sm:$0xff]
          %v1480 = vld [vmem:[#allocation6 + $0x3b0] sm:$0xff]
          %v1481 = vld [vmem:[#allocation6 + $0x3b8] sm:$0xff]
          %v1482 = vld [vmem:[#allocation6 + $0x3c0] sm:$0xff]
          %v1483 = vld [vmem:[#allocation6 + $0x3c8] sm:$0xff]
          %v1484 = vld [vmem:[#allocation6 + $0x3d0] sm:$0xff]
          %v1485 = vld [vmem:[#allocation6 + $0x3d8] sm:$0xff]
          %v1486 = vld [vmem:[#allocation6 + $0x3e0] sm:$0xff]
          %v1487 = vld [vmem:[#allocation6 + $0x3e8] sm:$0xff]
          %v1488 = vld [vmem:[#allocation6 + $0x3f0] sm:$0xff]
          %v1489 = vld [vmem:[#allocation6 + $0x3f8] sm:$0xff]
          %v1490 = vld [vmem:[#allocation6 + $0x400] sm:$0xff]
          %v1491 = vld [vmem:[#allocation6 + $0x408] sm:$0xff]
          %v1492 = vld [vmem:[#allocation6 + $0x410] sm:$0xff]
          %v1493 = vld [vmem:[#allocation6 + $0x418] sm:$0xff]
          %v1494 = vld [vmem:[#allocation6 + $0x420] sm:$0xff]
          %v1495 = vld [vmem:[#allocation6 + $0x428] sm:$0xff]
          %v1496 = vld [vmem:[#allocation6 + $0x430] sm:$0xff]
          %v1497 = vld [vmem:[#allocation6 + $0x438] sm:$0xff]
          %v1498 = vld [vmem:[#allocation6 + $0x440] sm:$0xff]
          %v1499 = vld [vmem:[#allocation6 + $0x448] sm:$0xff]
          %v1500 = vld [vmem:[#allocation6 + $0x450] sm:$0xff]
          %v1501 = vld [vmem:[#allocation6 + $0x458] sm:$0xff]
          %v1502 = vld [vmem:[#allocation6 + $0x460] sm:$0xff]
          %v1503 = vld [vmem:[#allocation6 + $0x468] sm:$0xff]
          %v1504 = vld [vmem:[#allocation6 + $0x470] sm:$0xff]
          %v1505 = vld [vmem:[#allocation6 + $0x478] sm:$0xff]
          %v1506 = vld [vmem:[#allocation6 + $0x480] sm:$0xff]
          %v1507 = vld [vmem:[#allocation6 + $0x488] sm:$0xff]
          %v1508 = vld [vmem:[#allocation6 + $0x490] sm:$0xff]
          %v1509 = vld [vmem:[#allocation6 + $0x498] sm:$0xff]
          %v1510 = vld [vmem:[#allocation6 + $0x4a0] sm:$0xff]
          %v1511 = vld [vmem:[#allocation6 + $0x4a8] sm:$0xff]
          %v1512 = vld [vmem:[#allocation6 + $0x4b0] sm:$0xff]
          %v1513 = vld [vmem:[#allocation6 + $0x4b8] sm:$0xff]
          %v1514 = vld [vmem:[#allocation6 + $0x4c0] sm:$0xff]
          %v1515 = vld [vmem:[#allocation6 + $0x4c8] sm:$0xff]
          %v1516 = vld [vmem:[#allocation6 + $0x4d0] sm:$0xff]
          %v1517 = vld [vmem:[#allocation6 + $0x4d8] sm:$0xff]
          %v1518 = vld [vmem:[#allocation6 + $0x4e0] sm:$0xff]
          %v1519 = vld [vmem:[#allocation6 + $0x4e8] sm:$0xff]
          %v1520 = vld [vmem:[#allocation6 + $0x4f0] sm:$0xff]
          %v1521 = vld [vmem:[#allocation6 + $0x4f8] sm:$0xff]
          %v1522 = vld [vmem:[#allocation6 + $0x500] sm:$0xff]
          %v1523 = vld [vmem:[#allocation6 + $0x508] sm:$0xff]
          %v1524 = vld [vmem:[#allocation6 + $0x510] sm:$0xff]
          %v1525 = vld [vmem:[#allocation6 + $0x518] sm:$0xff]
          %v1526 = vld [vmem:[#allocation6 + $0x520] sm:$0xff]
          %v1527 = vld [vmem:[#allocation6 + $0x528] sm:$0xff]
          %v1528 = vld [vmem:[#allocation6 + $0x530] sm:$0xff]
          %v1529 = vld [vmem:[#allocation6 + $0x538] sm:$0xff]
          %v1530 = vld [vmem:[#allocation6 + $0x540] sm:$0xff]
          %v1531 = vld [vmem:[#allocation6 + $0x548] sm:$0xff]
          %v1532 = vld [vmem:[#allocation6 + $0x550] sm:$0xff]
          %v1533 = vld [vmem:[#allocation6 + $0x558] sm:$0xff]
          %v1534 = vld [vmem:[#allocation6 + $0x560] sm:$0xff]
          %v1535 = vld [vmem:[#allocation6 + $0x568] sm:$0xff]
          %v1536 = vld [vmem:[#allocation6 + $0x570] sm:$0xff]
          %v1537 = vld [vmem:[#allocation6 + $0x578] sm:$0xff]
          %v1538 = vld [vmem:[#allocation6 + $0x580] sm:$0xff]
          %v1539 = vld [vmem:[#allocation6 + $0x588] sm:$0xff]
          %v1540 = vld [vmem:[#allocation6 + $0x590] sm:$0xff]
          %v1541 = vld [vmem:[#allocation6 + $0x598] sm:$0xff]
          %v1542 = vld [vmem:[#allocation6 + $0x5a0] sm:$0xff]
          %v1543 = vld [vmem:[#allocation6 + $0x5a8] sm:$0xff]
          %v1544 = vld [vmem:[#allocation6 + $0x5b0] sm:$0xff]
          %v1545 = vld [vmem:[#allocation6 + $0x5b8] sm:$0xff]
          %v1546 = vld [vmem:[#allocation6 + $0x5c0] sm:$0xff]
          %v1547 = vld [vmem:[#allocation6 + $0x5c8] sm:$0xff]
          %v1548 = vld [vmem:[#allocation6 + $0x5d0] sm:$0xff]
          %v1549 = vld [vmem:[#allocation6 + $0x5d8] sm:$0xff]
          %v1550 = vld [vmem:[#allocation6 + $0x5e0] sm:$0xff]
          %v1551 = vld [vmem:[#allocation6 + $0x5e8] sm:$0xff]
          %v1552 = vld [vmem:[#allocation6 + $0x5f0] sm:$0xff]
          %v1553 = vld [vmem:[#allocation6 + $0x5f8] sm:$0xff]
          %v1554 = vld [vmem:[#allocation6 + $0x600] sm:$0xff]
          %v1555 = vld [vmem:[#allocation6 + $0x608] sm:$0xff]
          %v1556 = vld [vmem:[#allocation6 + $0x610] sm:$0xff]
          %v1557 = vld [vmem:[#allocation6 + $0x618] sm:$0xff]
          %v1558 = vld [vmem:[#allocation6 + $0x620] sm:$0xff]
          %v1559 = vld [vmem:[#allocation6 + $0x628] sm:$0xff]
          %v1560 = vld [vmem:[#allocation6 + $0x630] sm:$0xff]
          %v1561 = vld [vmem:[#allocation6 + $0x638] sm:$0xff]
          %v1562 = vld [vmem:[#allocation6 + $0x640] sm:$0xff]
          %v1563 = vld [vmem:[#allocation6 + $0x648] sm:$0xff]
          %v1564 = vld [vmem:[#allocation6 + $0x650] sm:$0xff]
          %v1565 = vld [vmem:[#allocation6 + $0x658] sm:$0xff]
          %v1566 = vld [vmem:[#allocation6 + $0x660] sm:$0xff]
          %v1567 = vld [vmem:[#allocation6 + $0x668] sm:$0xff]
          %v1568 = vld [vmem:[#allocation6 + $0x670] sm:$0xff]
          %v1569 = vld [vmem:[#allocation6 + $0x678] sm:$0xff]
          %v1570 = vld [vmem:[#allocation6 + $0x680] sm:$0xff]
          %v1571 = vld [vmem:[#allocation6 + $0x688] sm:$0xff]
          %v1572 = vld [vmem:[#allocation6 + $0x690] sm:$0xff]
          %v1573 = vld [vmem:[#allocation6 + $0x698] sm:$0xff]
          %v1574 = vld [vmem:[#allocation6 + $0x6a0] sm:$0xff]
          %v1575 = vld [vmem:[#allocation6 + $0x6a8] sm:$0xff]
          %v1576 = vld [vmem:[#allocation6 + $0x6b0] sm:$0xff]
          %v1577 = vld [vmem:[#allocation6 + $0x6b8] sm:$0xff]
          %v1578 = vld [vmem:[#allocation6 + $0x6c0] sm:$0xff]
          %v1579 = vld [vmem:[#allocation6 + $0x6c8] sm:$0xff]
          %v1580 = vld [vmem:[#allocation6 + $0x6d0] sm:$0xff]
          %v1581 = vld [vmem:[#allocation6 + $0x6d8] sm:$0xff]
          %v1582 = vld [vmem:[#allocation6 + $0x6e0] sm:$0xff]
          %v1583 = vld [vmem:[#allocation6 + $0x6e8] sm:$0xff]
          %v1584 = vld [vmem:[#allocation6 + $0x6f0] sm:$0xff]
          %v1585 = vld [vmem:[#allocation6 + $0x6f8] sm:$0xff]
          %v1586 = vld [vmem:[#allocation6 + $0x700] sm:$0xff]
          %v1587 = vld [vmem:[#allocation6 + $0x708] sm:$0xff]
          %v1588 = vld [vmem:[#allocation6 + $0x710] sm:$0xff]
          %v1589 = vld [vmem:[#allocation6 + $0x718] sm:$0xff]
          %v1590 = vld [vmem:[#allocation6 + $0x720] sm:$0xff]
          %v1591 = vld [vmem:[#allocation6 + $0x728] sm:$0xff]
          %v1592 = vld [vmem:[#allocation6 + $0x730] sm:$0xff]
          %v1593 = vld [vmem:[#allocation6 + $0x738] sm:$0xff]
          %v1594 = vld [vmem:[#allocation6 + $0x740] sm:$0xff]
          %v1595 = vld [vmem:[#allocation6 + $0x748] sm:$0xff]
          %v1596 = vld [vmem:[#allocation6 + $0x750] sm:$0xff]
          %v1597 = vld [vmem:[#allocation6 + $0x758] sm:$0xff]
          %v1598 = vld [vmem:[#allocation6 + $0x760] sm:$0xff]
          %v1599 = vld [vmem:[#allocation6 + $0x768] sm:$0xff]
          %v1600 = vld [vmem:[#allocation6 + $0x770] sm:$0xff]
          %v1601 = vld [vmem:[#allocation6 + $0x778] sm:$0xff]
          %v1602 = vld [vmem:[#allocation6 + $0x780] sm:$0xff]
          %v1603 = vld [vmem:[#allocation6 + $0x788] sm:$0xff]
          %v1604 = vld [vmem:[#allocation6 + $0x790] sm:$0xff]
          %v1605 = vld [vmem:[#allocation6 + $0x798] sm:$0xff]
          %v1606 = vld [vmem:[#allocation6 + $0x7a0] sm:$0xff]
          %v1607 = vld [vmem:[#allocation6 + $0x7a8] sm:$0xff]
          %v1608 = vld [vmem:[#allocation6 + $0x7b0] sm:$0xff]
          %v1609 = vld [vmem:[#allocation6 + $0x7b8] sm:$0xff]
          %v1610 = vld [vmem:[#allocation6 + $0x7c0] sm:$0xff]
          %v1611 = vld [vmem:[#allocation6 + $0x7c8] sm:$0xff]
          %v1612 = vld [vmem:[#allocation6 + $0x7d0] sm:$0xff]
          %v1613 = vld [vmem:[#allocation6 + $0x7d8] sm:$0xff]
          %v1614 = vld [vmem:[#allocation6 + $0x7e0] sm:$0xff]
          %v1615 = vld [vmem:[#allocation6 + $0x7e8] sm:$0xff]
          %v1616 = vld [vmem:[#allocation6 + $0x7f0] sm:$0xff]
          %v1617 = vld [vmem:[#allocation6 + $0x7f8] sm:$0xff]
          %v1618 = vld [vmem:[#allocation6 + $0x800] sm:$0xff]
          %v1619 = vld [vmem:[#allocation6 + $0x808] sm:$0xff]
          %v1620 = vld [vmem:[#allocation6 + $0x810] sm:$0xff]
          %v1621 = vld [vmem:[#allocation6 + $0x818] sm:$0xff]
          %v1622 = vld [vmem:[#allocation6 + $0x820] sm:$0xff]
          %v1623 = vld [vmem:[#allocation6 + $0x828] sm:$0xff]
          %v1624 = vld [vmem:[#allocation6 + $0x830] sm:$0xff]
          %v1625 = vld [vmem:[#allocation6 + $0x838] sm:$0xff]
          %v1626 = vld [vmem:[#allocation6 + $0x840] sm:$0xff]
          %v1627 = vld [vmem:[#allocation6 + $0x848] sm:$0xff]
          %v1628 = vld [vmem:[#allocation6 + $0x850] sm:$0xff]
          %v1629 = vld [vmem:[#allocation6 + $0x858] sm:$0xff]
          %v1630 = vld [vmem:[#allocation6 + $0x860] sm:$0xff]
          %v1631 = vld [vmem:[#allocation6 + $0x868] sm:$0xff]
          %v1632 = vld [vmem:[#allocation6 + $0x870] sm:$0xff]
          %v1633 = vld [vmem:[#allocation6 + $0x878] sm:$0xff]
          %v1634 = vld [vmem:[#allocation6 + $0x880] sm:$0xff]
          %v1635 = vld [vmem:[#allocation6 + $0x888] sm:$0xff]
          %v1636 = vld [vmem:[#allocation6 + $0x890] sm:$0xff]
          %v1637 = vld [vmem:[#allocation6 + $0x898] sm:$0xff]
          %v1638 = vld [vmem:[#allocation6 + $0x8a0] sm:$0xff]
          %v1639 = vld [vmem:[#allocation6 + $0x8a8] sm:$0xff]
          %v1640 = vld [vmem:[#allocation6 + $0x8b0] sm:$0xff]
          %v1641 = vld [vmem:[#allocation6 + $0x8b8] sm:$0xff]
          %v1642 = vld [vmem:[#allocation6 + $0x8c0] sm:$0xff]
          %v1643 = vld [vmem:[#allocation6 + $0x8c8] sm:$0xff]
          %v1644 = vld [vmem:[#allocation6 + $0x8d0] sm:$0xff]
          %v1645 = vld [vmem:[#allocation6 + $0x8d8] sm:$0xff]
          %v1646 = vld [vmem:[#allocation6 + $0x8e0] sm:$0xff]
          %v1647 = vld [vmem:[#allocation6 + $0x8e8] sm:$0xff]
          %v1648 = vld [vmem:[#allocation6 + $0x8f0] sm:$0xff]
          %v1649 = vld [vmem:[#allocation6 + $0x8f8] sm:$0xff]
          %v1650 = vld [vmem:[#allocation8] sm:$0x3f]
          %v1652 = vlaneseq
          %v1653 = vshrl.u32 %v1652, 7
          %v1654 = vsub.s32 0, %v1653
          %v1655 = vrot.slane %v1650, %v1654
          %v1656 = vlaneseq
          %v1657 = vshrl.u32 %v1656, 7
          %v1658 = vsub.s32 1, %v1657
          %v1659 = vrot.slane %v1650, %v1658
          %v1660 = vlaneseq
          %v1661 = vshrl.u32 %v1660, 7
          %v1662 = vsub.s32 2, %v1661
          %v1663 = vrot.slane %v1650, %v1662
          %v1664 = vlaneseq
          %v1665 = vshrl.u32 %v1664, 7
          %v1666 = vsub.s32 3, %v1665
          %v1667 = vrot.slane %v1650, %v1666
          %v1668 = vlaneseq
          %v1669 = vshrl.u32 %v1668, 7
          %v1670 = vsub.s32 4, %v1669
          %v1671 = vrot.slane %v1650, %v1670
          %v1672 = vlaneseq
          %v1673 = vshrl.u32 %v1672, 7
          %v1674 = vsub.s32 5, %v1673
          %v1675 = vrot.slane %v1650, %v1674
          %v1970 = vunpack.c.l.b16 %v1362
          %v1971 = vunpack.c.h.b16 %v1362
          %v1972 = vunpack.c.l.b16 %v1363
          %v1973 = vunpack.c.h.b16 %v1363
          %v1974 = vunpack.c.l.b16 %v1364
          %v1975 = vunpack.c.h.b16 %v1364
          %v1976 = vunpack.c.l.b16 %v1365
          %v1977 = vunpack.c.h.b16 %v1365
          %v1978 = vunpack.c.l.b16 %v1366
          %v1979 = vunpack.c.h.b16 %v1366
          %v1980 = vunpack.c.l.b16 %v1367
          %v1981 = vunpack.c.h.b16 %v1367
          %v1982 = vunpack.c.l.b16 %v1368
          %v1983 = vunpack.c.h.b16 %v1368
          %v1984 = vunpack.c.l.b16 %v1369
          %v1985 = vunpack.c.h.b16 %v1369
          %v1986 = vunpack.c.l.b16 %v1370
          %v1987 = vunpack.c.h.b16 %v1370
          %v1988 = vunpack.c.l.b16 %v1371
          %v1989 = vunpack.c.h.b16 %v1371
          %v1990 = vunpack.c.l.b16 %v1372
          %v1991 = vunpack.c.h.b16 %v1372
          %v1992 = vunpack.c.l.b16 %v1373
          %v1993 = vunpack.c.h.b16 %v1373
          %v1994 = vunpack.c.l.b16 %v1374
          %v1995 = vunpack.c.h.b16 %v1374
          %v1996 = vunpack.c.l.b16 %v1375
          %v1997 = vunpack.c.h.b16 %v1375
          %v1998 = vunpack.c.l.b16 %v1376
          %v1999 = vunpack.c.h.b16 %v1376
          %v2000 = vunpack.c.l.b16 %v1377
          %v2001 = vunpack.c.h.b16 %v1377
          %v2002 = vunpack.c.l.b16 %v1378
          %v2003 = vunpack.c.h.b16 %v1378
          %v2004 = vunpack.c.l.b16 %v1379
          %v2005 = vunpack.c.h.b16 %v1379
          %v2006 = vunpack.c.l.b16 %v1380
          %v2007 = vunpack.c.h.b16 %v1380
          %v2008 = vunpack.c.l.b16 %v1381
          %v2009 = vunpack.c.h.b16 %v1381
          %v2010 = vunpack.c.l.b16 %v1382
          %v2011 = vunpack.c.h.b16 %v1382
          %v2012 = vunpack.c.l.b16 %v1383
          %v2013 = vunpack.c.h.b16 %v1383
          %v2014 = vunpack.c.l.b16 %v1384
          %v2015 = vunpack.c.h.b16 %v1384
          %v2016 = vunpack.c.l.b16 %v1385
          %v2017 = vunpack.c.h.b16 %v1385
          %v2018 = vunpack.c.l.b16 %v1386
          %v2019 = vunpack.c.h.b16 %v1386
          %v2020 = vunpack.c.l.b16 %v1387
          %v2021 = vunpack.c.h.b16 %v1387
          %v2022 = vunpack.c.l.b16 %v1388
          %v2023 = vunpack.c.h.b16 %v1388
          %v2024 = vunpack.c.l.b16 %v1389
          %v2025 = vunpack.c.h.b16 %v1389
          %v2026 = vunpack.c.l.b16 %v1390
          %v2027 = vunpack.c.h.b16 %v1390
          %v2028 = vunpack.c.l.b16 %v1391
          %v2029 = vunpack.c.h.b16 %v1391
          %v2030 = vunpack.c.l.b16 %v1392
          %v2031 = vunpack.c.h.b16 %v1392
          %v2032 = vunpack.c.l.b16 %v1393
          %v2033 = vunpack.c.h.b16 %v1393
          %v2034 = vunpack.c.l.b16 %v1394
          %v2035 = vunpack.c.h.b16 %v1394
          %v2036 = vunpack.c.l.b16 %v1395
          %v2037 = vunpack.c.h.b16 %v1395
          %v2038 = vunpack.c.l.b16 %v1396
          %v2039 = vunpack.c.h.b16 %v1396
          %v2040 = vunpack.c.l.b16 %v1397
          %v2041 = vunpack.c.h.b16 %v1397
          %v2042 = vunpack.c.l.b16 %v1398
          %v2043 = vunpack.c.h.b16 %v1398
          %v2044 = vunpack.c.l.b16 %v1399
          %v2045 = vunpack.c.h.b16 %v1399
          %v2046 = vunpack.c.l.b16 %v1400
          %v2047 = vunpack.c.h.b16 %v1400
          %v2048 = vunpack.c.l.b16 %v1401
          %v2049 = vunpack.c.h.b16 %v1401
          %v2050 = vunpack.c.l.b16 %v1402
          %v2051 = vunpack.c.h.b16 %v1402
          %v2052 = vunpack.c.l.b16 %v1403
          %v2053 = vunpack.c.h.b16 %v1403
          %v2054 = vunpack.c.l.b16 %v1404
          %v2055 = vunpack.c.h.b16 %v1404
          %v2056 = vunpack.c.l.b16 %v1405
          %v2057 = vunpack.c.h.b16 %v1405
          %v2058 = vunpack.c.l.b16 %v1406
          %v2059 = vunpack.c.h.b16 %v1406
          %v2060 = vunpack.c.l.b16 %v1407
          %v2061 = vunpack.c.h.b16 %v1407
          %v2062 = vunpack.c.l.b16 %v1408
          %v2063 = vunpack.c.h.b16 %v1408
          %v2064 = vunpack.c.l.b16 %v1409
          %v2065 = vunpack.c.h.b16 %v1409
          %v2066 = vunpack.c.l.b16 %v1410
          %v2067 = vunpack.c.h.b16 %v1410
          %v2068 = vunpack.c.l.b16 %v1411
          %v2069 = vunpack.c.h.b16 %v1411
          %v2070 = vunpack.c.l.b16 %v1412
          %v2071 = vunpack.c.h.b16 %v1412
          %v2072 = vunpack.c.l.b16 %v1413
          %v2073 = vunpack.c.h.b16 %v1413
          %v2074 = vunpack.c.l.b16 %v1414
          %v2075 = vunpack.c.h.b16 %v1414
          %v2076 = vunpack.c.l.b16 %v1415
          %v2077 = vunpack.c.h.b16 %v1415
          %v2078 = vunpack.c.l.b16 %v1416
          %v2079 = vunpack.c.h.b16 %v1416
          %v2080 = vunpack.c.l.b16 %v1417
          %v2081 = vunpack.c.h.b16 %v1417
          %v2082 = vunpack.c.l.b16 %v1418
          %v2083 = vunpack.c.h.b16 %v1418
          %v2084 = vunpack.c.l.b16 %v1419
          %v2085 = vunpack.c.h.b16 %v1419
          %v2086 = vunpack.c.l.b16 %v1420
          %v2087 = vunpack.c.h.b16 %v1420
          %v2088 = vunpack.c.l.b16 %v1421
          %v2089 = vunpack.c.h.b16 %v1421
          %v2090 = vunpack.c.l.b16 %v1422
          %v2091 = vunpack.c.h.b16 %v1422
          %v2092 = vunpack.c.l.b16 %v1423
          %v2093 = vunpack.c.h.b16 %v1423
          %v2094 = vunpack.c.l.b16 %v1424
          %v2095 = vunpack.c.h.b16 %v1424
          %v2096 = vunpack.c.l.b16 %v1425
          %v2097 = vunpack.c.h.b16 %v1425
          %v2098 = vunpack.c.l.b16 %v1426
          %v2099 = vunpack.c.h.b16 %v1426
          %v2100 = vunpack.c.l.b16 %v1427
          %v2101 = vunpack.c.h.b16 %v1427
          %v2102 = vunpack.c.l.b16 %v1428
          %v2103 = vunpack.c.h.b16 %v1428
          %v2104 = vunpack.c.l.b16 %v1429
          %v2105 = vunpack.c.h.b16 %v1429
          %v2106 = vunpack.c.l.b16 %v1430
          %v2107 = vunpack.c.h.b16 %v1430
          %v2108 = vunpack.c.l.b16 %v1431
          %v2109 = vunpack.c.h.b16 %v1431
          %v2110 = vunpack.c.l.b16 %v1432
          %v2111 = vunpack.c.h.b16 %v1432
          %v2112 = vunpack.c.l.b16 %v1433
          %v2113 = vunpack.c.h.b16 %v1433
          %v2114 = vunpack.c.l.b16 %v1434
          %v2115 = vunpack.c.h.b16 %v1434
          %v2116 = vunpack.c.l.b16 %v1435
          %v2117 = vunpack.c.h.b16 %v1435
          %v2118 = vunpack.c.l.b16 %v1436
          %v2119 = vunpack.c.h.b16 %v1436
          %v2120 = vunpack.c.l.b16 %v1437
          %v2121 = vunpack.c.h.b16 %v1437
          %v2122 = vunpack.c.l.b16 %v1438
          %v2123 = vunpack.c.h.b16 %v1438
          %v2124 = vunpack.c.l.b16 %v1439
          %v2125 = vunpack.c.h.b16 %v1439
          %v2126 = vunpack.c.l.b16 %v1440
          %v2127 = vunpack.c.h.b16 %v1440
          %v2128 = vunpack.c.l.b16 %v1441
          %v2129 = vunpack.c.h.b16 %v1441
          %v2130 = vunpack.c.l.b16 %v1442
          %v2131 = vunpack.c.h.b16 %v1442
          %v2132 = vunpack.c.l.b16 %v1443
          %v2133 = vunpack.c.h.b16 %v1443
          %v2134 = vunpack.c.l.b16 %v1444
          %v2135 = vunpack.c.h.b16 %v1444
          %v2136 = vunpack.c.l.b16 %v1445
          %v2137 = vunpack.c.h.b16 %v1445
          %v2138 = vunpack.c.l.b16 %v1446
          %v2139 = vunpack.c.h.b16 %v1446
          %v2140 = vunpack.c.l.b16 %v1447
          %v2141 = vunpack.c.h.b16 %v1447
          %v2142 = vunpack.c.l.b16 %v1448
          %v2143 = vunpack.c.h.b16 %v1448
          %v2144 = vunpack.c.l.b16 %v1449
          %v2145 = vunpack.c.h.b16 %v1449
          %v2146 = vunpack.c.l.b16 %v1450
          %v2147 = vunpack.c.h.b16 %v1450
          %v2148 = vunpack.c.l.b16 %v1451
          %v2149 = vunpack.c.h.b16 %v1451
          %v2150 = vunpack.c.l.b16 %v1452
          %v2151 = vunpack.c.h.b16 %v1452
          %v2152 = vunpack.c.l.b16 %v1453
          %v2153 = vunpack.c.h.b16 %v1453
          %v2154 = vunpack.c.l.b16 %v1454
          %v2155 = vunpack.c.h.b16 %v1454
          %v2156 = vunpack.c.l.b16 %v1455
          %v2157 = vunpack.c.h.b16 %v1455
          %v2158 = vunpack.c.l.b16 %v1456
          %v2159 = vunpack.c.h.b16 %v1456
          %v2160 = vunpack.c.l.b16 %v1457
          %v2161 = vunpack.c.h.b16 %v1457
          %v2162 = vunpack.c.l.b16 %v1458
          %v2163 = vunpack.c.h.b16 %v1458
          %v2164 = vunpack.c.l.b16 %v1459
          %v2165 = vunpack.c.h.b16 %v1459
          %v2166 = vunpack.c.l.b16 %v1460
          %v2167 = vunpack.c.h.b16 %v1460
          %v2168 = vunpack.c.l.b16 %v1461
          %v2169 = vunpack.c.h.b16 %v1461
          %v2170 = vunpack.c.l.b16 %v1462
          %v2171 = vunpack.c.h.b16 %v1462
          %v2172 = vunpack.c.l.b16 %v1463
          %v2173 = vunpack.c.h.b16 %v1463
          %v2174 = vunpack.c.l.b16 %v1464
          %v2175 = vunpack.c.h.b16 %v1464
          %v2176 = vunpack.c.l.b16 %v1465
          %v2177 = vunpack.c.h.b16 %v1465
          %v2178 = vunpack.c.l.b16 %v1466
          %v2179 = vunpack.c.h.b16 %v1466
          %v2180 = vunpack.c.l.b16 %v1467
          %v2181 = vunpack.c.h.b16 %v1467
          %v2182 = vunpack.c.l.b16 %v1468
          %v2183 = vunpack.c.h.b16 %v1468
          %v2184 = vunpack.c.l.b16 %v1469
          %v2185 = vunpack.c.h.b16 %v1469
          %v2186 = vunpack.c.l.b16 %v1470
          %v2187 = vunpack.c.h.b16 %v1470
          %v2188 = vunpack.c.l.b16 %v1471
          %v2189 = vunpack.c.h.b16 %v1471
          %v2190 = vunpack.c.l.b16 %v1472
          %v2191 = vunpack.c.h.b16 %v1472
          %v2192 = vunpack.c.l.b16 %v1473
          %v2193 = vunpack.c.h.b16 %v1473
          %v2194 = vunpack.c.l.b16 %v1474
          %v2195 = vunpack.c.h.b16 %v1474
          %v2196 = vunpack.c.l.b16 %v1475
          %v2197 = vunpack.c.h.b16 %v1475
          %v2198 = vunpack.c.l.b16 %v1476
          %v2199 = vunpack.c.h.b16 %v1476
          %v2200 = vunpack.c.l.b16 %v1477
          %v2201 = vunpack.c.h.b16 %v1477
          %v2202 = vunpack.c.l.b16 %v1478
          %v2203 = vunpack.c.h.b16 %v1478
          %v2204 = vunpack.c.l.b16 %v1479
          %v2205 = vunpack.c.h.b16 %v1479
          %v2206 = vunpack.c.l.b16 %v1480
          %v2207 = vunpack.c.h.b16 %v1480
          %v2208 = vunpack.c.l.b16 %v1481
          %v2209 = vunpack.c.h.b16 %v1481
          %v2210 = vunpack.c.l.b16 %v1482
          %v2211 = vunpack.c.h.b16 %v1482
          %v2212 = vunpack.c.l.b16 %v1483
          %v2213 = vunpack.c.h.b16 %v1483
          %v2214 = vunpack.c.l.b16 %v1484
          %v2215 = vunpack.c.h.b16 %v1484
          %v2216 = vunpack.c.l.b16 %v1485
          %v2217 = vunpack.c.h.b16 %v1485
          %v2218 = vunpack.c.l.b16 %v1486
          %v2219 = vunpack.c.h.b16 %v1486
          %v2220 = vunpack.c.l.b16 %v1487
          %v2221 = vunpack.c.h.b16 %v1487
          %v2222 = vunpack.c.l.b16 %v1488
          %v2223 = vunpack.c.h.b16 %v1488
          %v2224 = vunpack.c.l.b16 %v1489
          %v2225 = vunpack.c.h.b16 %v1489
          %v2226 = vunpack.c.l.b16 %v1490
          %v2227 = vunpack.c.h.b16 %v1490
          %v2228 = vunpack.c.l.b16 %v1491
          %v2229 = vunpack.c.h.b16 %v1491
          %v2230 = vunpack.c.l.b16 %v1492
          %v2231 = vunpack.c.h.b16 %v1492
          %v2232 = vunpack.c.l.b16 %v1493
          %v2233 = vunpack.c.h.b16 %v1493
          %v2234 = vunpack.c.l.b16 %v1494
          %v2235 = vunpack.c.h.b16 %v1494
          %v2236 = vunpack.c.l.b16 %v1495
          %v2237 = vunpack.c.h.b16 %v1495
          %v2238 = vunpack.c.l.b16 %v1496
          %v2239 = vunpack.c.h.b16 %v1496
          %v2240 = vunpack.c.l.b16 %v1497
          %v2241 = vunpack.c.h.b16 %v1497
          %v2242 = vunpack.c.l.b16 %v1498
          %v2243 = vunpack.c.h.b16 %v1498
          %v2244 = vunpack.c.l.b16 %v1499
          %v2245 = vunpack.c.h.b16 %v1499
          %v2246 = vunpack.c.l.b16 %v1500
          %v2247 = vunpack.c.h.b16 %v1500
          %v2248 = vunpack.c.l.b16 %v1501
          %v2249 = vunpack.c.h.b16 %v1501
          %v2250 = vunpack.c.l.b16 %v1502
          %v2251 = vunpack.c.h.b16 %v1502
          %v2252 = vunpack.c.l.b16 %v1503
          %v2253 = vunpack.c.h.b16 %v1503
          %v2254 = vunpack.c.l.b16 %v1504
          %v2255 = vunpack.c.h.b16 %v1504
          %v2256 = vunpack.c.l.b16 %v1505
          %v2257 = vunpack.c.h.b16 %v1505
          %v2258 = vunpack.c.l.b16 %v1506
          %v2259 = vunpack.c.h.b16 %v1506
          %v2260 = vunpack.c.l.b16 %v1507
          %v2261 = vunpack.c.h.b16 %v1507
          %v2262 = vunpack.c.l.b16 %v1508
          %v2263 = vunpack.c.h.b16 %v1508
          %v2264 = vunpack.c.l.b16 %v1509
          %v2265 = vunpack.c.h.b16 %v1509
          %v2266 = vunpack.c.l.b16 %v1510
          %v2267 = vunpack.c.h.b16 %v1510
          %v2268 = vunpack.c.l.b16 %v1511
          %v2269 = vunpack.c.h.b16 %v1511
          %v2270 = vunpack.c.l.b16 %v1512
          %v2271 = vunpack.c.h.b16 %v1512
          %v2272 = vunpack.c.l.b16 %v1513
          %v2273 = vunpack.c.h.b16 %v1513
          %v2274 = vunpack.c.l.b16 %v1514
          %v2275 = vunpack.c.h.b16 %v1514
          %v2276 = vunpack.c.l.b16 %v1515
          %v2277 = vunpack.c.h.b16 %v1515
          %v2278 = vunpack.c.l.b16 %v1516
          %v2279 = vunpack.c.h.b16 %v1516
          %v2280 = vunpack.c.l.b16 %v1517
          %v2281 = vunpack.c.h.b16 %v1517
          %v2282 = vunpack.c.l.b16 %v1518
          %v2283 = vunpack.c.h.b16 %v1518
          %v2284 = vunpack.c.l.b16 %v1519
          %v2285 = vunpack.c.h.b16 %v1519
          %v2286 = vunpack.c.l.b16 %v1520
          %v2287 = vunpack.c.h.b16 %v1520
          %v2288 = vunpack.c.l.b16 %v1521
          %v2289 = vunpack.c.h.b16 %v1521
          %v2290 = vunpack.c.l.b16 %v1522
          %v2291 = vunpack.c.h.b16 %v1522
          %v2292 = vunpack.c.l.b16 %v1523
          %v2293 = vunpack.c.h.b16 %v1523
          %v2294 = vunpack.c.l.b16 %v1524
          %v2295 = vunpack.c.h.b16 %v1524
          %v2296 = vunpack.c.l.b16 %v1525
          %v2297 = vunpack.c.h.b16 %v1525
          %v2298 = vunpack.c.l.b16 %v1526
          %v2299 = vunpack.c.h.b16 %v1526
          %v2300 = vunpack.c.l.b16 %v1527
          %v2301 = vunpack.c.h.b16 %v1527
          %v2302 = vunpack.c.l.b16 %v1528
          %v2303 = vunpack.c.h.b16 %v1528
          %v2304 = vunpack.c.l.b16 %v1529
          %v2305 = vunpack.c.h.b16 %v1529
          %v2306 = vunpack.c.l.b16 %v1530
          %v2307 = vunpack.c.h.b16 %v1530
          %v2308 = vunpack.c.l.b16 %v1531
          %v2309 = vunpack.c.h.b16 %v1531
          %v2310 = vunpack.c.l.b16 %v1532
          %v2311 = vunpack.c.h.b16 %v1532
          %v2312 = vunpack.c.l.b16 %v1533
          %v2313 = vunpack.c.h.b16 %v1533
          %v2314 = vunpack.c.l.b16 %v1534
          %v2315 = vunpack.c.h.b16 %v1534
          %v2316 = vunpack.c.l.b16 %v1535
          %v2317 = vunpack.c.h.b16 %v1535
          %v2318 = vunpack.c.l.b16 %v1536
          %v2319 = vunpack.c.h.b16 %v1536
          %v2320 = vunpack.c.l.b16 %v1537
          %v2321 = vunpack.c.h.b16 %v1537
          %v2322 = vunpack.c.l.b16 %v1538
          %v2323 = vunpack.c.h.b16 %v1538
          %v2324 = vunpack.c.l.b16 %v1539
          %v2325 = vunpack.c.h.b16 %v1539
          %v2326 = vunpack.c.l.b16 %v1540
          %v2327 = vunpack.c.h.b16 %v1540
          %v2328 = vunpack.c.l.b16 %v1541
          %v2329 = vunpack.c.h.b16 %v1541
          %v2330 = vunpack.c.l.b16 %v1542
          %v2331 = vunpack.c.h.b16 %v1542
          %v2332 = vunpack.c.l.b16 %v1543
          %v2333 = vunpack.c.h.b16 %v1543
          %v2334 = vunpack.c.l.b16 %v1544
          %v2335 = vunpack.c.h.b16 %v1544
          %v2336 = vunpack.c.l.b16 %v1545
          %v2337 = vunpack.c.h.b16 %v1545
          %v2338 = vunpack.c.l.b16 %v1546
          %v2339 = vunpack.c.h.b16 %v1546
          %v2340 = vunpack.c.l.b16 %v1547
          %v2341 = vunpack.c.h.b16 %v1547
          %v2342 = vunpack.c.l.b16 %v1548
          %v2343 = vunpack.c.h.b16 %v1548
          %v2344 = vunpack.c.l.b16 %v1549
          %v2345 = vunpack.c.h.b16 %v1549
          %v2346 = vunpack.c.l.b16 %v1550
          %v2347 = vunpack.c.h.b16 %v1550
          %v2348 = vunpack.c.l.b16 %v1551
          %v2349 = vunpack.c.h.b16 %v1551
          %v2350 = vunpack.c.l.b16 %v1552
          %v2351 = vunpack.c.h.b16 %v1552
          %v2352 = vunpack.c.l.b16 %v1553
          %v2353 = vunpack.c.h.b16 %v1553
          %v2354 = vunpack.c.l.b16 %v1554
          %v2355 = vunpack.c.h.b16 %v1554
          %v2356 = vunpack.c.l.b16 %v1555
          %v2357 = vunpack.c.h.b16 %v1555
          %v2358 = vunpack.c.l.b16 %v1556
          %v2359 = vunpack.c.h.b16 %v1556
          %v2360 = vunpack.c.l.b16 %v1557
          %v2361 = vunpack.c.h.b16 %v1557
          %v2362 = vunpack.c.l.b16 %v1558
          %v2363 = vunpack.c.h.b16 %v1558
          %v2364 = vunpack.c.l.b16 %v1559
          %v2365 = vunpack.c.h.b16 %v1559
          %v2366 = vunpack.c.l.b16 %v1560
          %v2367 = vunpack.c.h.b16 %v1560
          %v2368 = vunpack.c.l.b16 %v1561
          %v2369 = vunpack.c.h.b16 %v1561
          %v2370 = vunpack.c.l.b16 %v1562
          %v2371 = vunpack.c.h.b16 %v1562
          %v2372 = vunpack.c.l.b16 %v1563
          %v2373 = vunpack.c.h.b16 %v1563
          %v2374 = vunpack.c.l.b16 %v1564
          %v2375 = vunpack.c.h.b16 %v1564
          %v2376 = vunpack.c.l.b16 %v1565
          %v2377 = vunpack.c.h.b16 %v1565
          %v2378 = vunpack.c.l.b16 %v1566
          %v2379 = vunpack.c.h.b16 %v1566
          %v2380 = vunpack.c.l.b16 %v1567
          %v2381 = vunpack.c.h.b16 %v1567
          %v2382 = vunpack.c.l.b16 %v1568
          %v2383 = vunpack.c.h.b16 %v1568
          %v2384 = vunpack.c.l.b16 %v1569
          %v2385 = vunpack.c.h.b16 %v1569
          %v2386 = vunpack.c.l.b16 %v1570
          %v2387 = vunpack.c.h.b16 %v1570
          %v2388 = vunpack.c.l.b16 %v1571
          %v2389 = vunpack.c.h.b16 %v1571
          %v2390 = vunpack.c.l.b16 %v1572
          %v2391 = vunpack.c.h.b16 %v1572
          %v2392 = vunpack.c.l.b16 %v1573
          %v2393 = vunpack.c.h.b16 %v1573
          %v2394 = vunpack.c.l.b16 %v1574
          %v2395 = vunpack.c.h.b16 %v1574
          %v2396 = vunpack.c.l.b16 %v1575
          %v2397 = vunpack.c.h.b16 %v1575
          %v2398 = vunpack.c.l.b16 %v1576
          %v2399 = vunpack.c.h.b16 %v1576
          %v2400 = vunpack.c.l.b16 %v1577
          %v2401 = vunpack.c.h.b16 %v1577
          %v2402 = vunpack.c.l.b16 %v1578
          %v2403 = vunpack.c.h.b16 %v1578
          %v2404 = vunpack.c.l.b16 %v1579
          %v2405 = vunpack.c.h.b16 %v1579
          %v2406 = vunpack.c.l.b16 %v1580
          %v2407 = vunpack.c.h.b16 %v1580
          %v2408 = vunpack.c.l.b16 %v1581
          %v2409 = vunpack.c.h.b16 %v1581
          %v2410 = vunpack.c.l.b16 %v1582
          %v2411 = vunpack.c.h.b16 %v1582
          %v2412 = vunpack.c.l.b16 %v1583
          %v2413 = vunpack.c.h.b16 %v1583
          %v2414 = vunpack.c.l.b16 %v1584
          %v2415 = vunpack.c.h.b16 %v1584
          %v2416 = vunpack.c.l.b16 %v1585
          %v2417 = vunpack.c.h.b16 %v1585
          %v2418 = vunpack.c.l.b16 %v1586
          %v2419 = vunpack.c.h.b16 %v1586
          %v2420 = vunpack.c.l.b16 %v1587
          %v2421 = vunpack.c.h.b16 %v1587
          %v2422 = vunpack.c.l.b16 %v1588
          %v2423 = vunpack.c.h.b16 %v1588
          %v2424 = vunpack.c.l.b16 %v1589
          %v2425 = vunpack.c.h.b16 %v1589
          %v2426 = vunpack.c.l.b16 %v1590
          %v2427 = vunpack.c.h.b16 %v1590
          %v2428 = vunpack.c.l.b16 %v1591
          %v2429 = vunpack.c.h.b16 %v1591
          %v2430 = vunpack.c.l.b16 %v1592
          %v2431 = vunpack.c.h.b16 %v1592
          %v2432 = vunpack.c.l.b16 %v1593
          %v2433 = vunpack.c.h.b16 %v1593
          %v2434 = vunpack.c.l.b16 %v1594
          %v2435 = vunpack.c.h.b16 %v1594
          %v2436 = vunpack.c.l.b16 %v1595
          %v2437 = vunpack.c.h.b16 %v1595
          %v2438 = vunpack.c.l.b16 %v1596
          %v2439 = vunpack.c.h.b16 %v1596
          %v2440 = vunpack.c.l.b16 %v1597
          %v2441 = vunpack.c.h.b16 %v1597
          %v2442 = vunpack.c.l.b16 %v1598
          %v2443 = vunpack.c.h.b16 %v1598
          %v2444 = vunpack.c.l.b16 %v1599
          %v2445 = vunpack.c.h.b16 %v1599
          %v2446 = vunpack.c.l.b16 %v1600
          %v2447 = vunpack.c.h.b16 %v1600
          %v2448 = vunpack.c.l.b16 %v1601
          %v2449 = vunpack.c.h.b16 %v1601
          %v2450 = vunpack.c.l.b16 %v1602
          %v2451 = vunpack.c.h.b16 %v1602
          %v2452 = vunpack.c.l.b16 %v1603
          %v2453 = vunpack.c.h.b16 %v1603
          %v2454 = vunpack.c.l.b16 %v1604
          %v2455 = vunpack.c.h.b16 %v1604
          %v2456 = vunpack.c.l.b16 %v1605
          %v2457 = vunpack.c.h.b16 %v1605
          %v2458 = vunpack.c.l.b16 %v1606
          %v2459 = vunpack.c.h.b16 %v1606
          %v2460 = vunpack.c.l.b16 %v1607
          %v2461 = vunpack.c.h.b16 %v1607
          %v2462 = vunpack.c.l.b16 %v1608
          %v2463 = vunpack.c.h.b16 %v1608
          %v2464 = vunpack.c.l.b16 %v1609
          %v2465 = vunpack.c.h.b16 %v1609
          %v2466 = vunpack.c.l.b16 %v1610
          %v2467 = vunpack.c.h.b16 %v1610
          %v2468 = vunpack.c.l.b16 %v1611
          %v2469 = vunpack.c.h.b16 %v1611
          %v2470 = vunpack.c.l.b16 %v1612
          %v2471 = vunpack.c.h.b16 %v1612
          %v2472 = vunpack.c.l.b16 %v1613
          %v2473 = vunpack.c.h.b16 %v1613
          %v2474 = vunpack.c.l.b16 %v1614
          %v2475 = vunpack.c.h.b16 %v1614
          %v2476 = vunpack.c.l.b16 %v1615
          %v2477 = vunpack.c.h.b16 %v1615
          %v2478 = vunpack.c.l.b16 %v1616
          %v2479 = vunpack.c.h.b16 %v1616
          %v2480 = vunpack.c.l.b16 %v1617
          %v2481 = vunpack.c.h.b16 %v1617
          %v2482 = vunpack.c.l.b16 %v1618
          %v2483 = vunpack.c.h.b16 %v1618
          %v2484 = vunpack.c.l.b16 %v1619
          %v2485 = vunpack.c.h.b16 %v1619
          %v2486 = vunpack.c.l.b16 %v1620
          %v2487 = vunpack.c.h.b16 %v1620
          %v2488 = vunpack.c.l.b16 %v1621
          %v2489 = vunpack.c.h.b16 %v1621
          %v2490 = vunpack.c.l.b16 %v1622
          %v2491 = vunpack.c.h.b16 %v1622
          %v2492 = vunpack.c.l.b16 %v1623
          %v2493 = vunpack.c.h.b16 %v1623
          %v2494 = vunpack.c.l.b16 %v1624
          %v2495 = vunpack.c.h.b16 %v1624
          %v2496 = vunpack.c.l.b16 %v1625
          %v2497 = vunpack.c.h.b16 %v1625
          %v2498 = vunpack.c.l.b16 %v1626
          %v2499 = vunpack.c.h.b16 %v1626
          %v2500 = vunpack.c.l.b16 %v1627
          %v2501 = vunpack.c.h.b16 %v1627
          %v2502 = vunpack.c.l.b16 %v1628
          %v2503 = vunpack.c.h.b16 %v1628
          %v2504 = vunpack.c.l.b16 %v1629
          %v2505 = vunpack.c.h.b16 %v1629
          %v2506 = vunpack.c.l.b16 %v1630
          %v2507 = vunpack.c.h.b16 %v1630
          %v2508 = vunpack.c.l.b16 %v1631
          %v2509 = vunpack.c.h.b16 %v1631
          %v2510 = vunpack.c.l.b16 %v1632
          %v2511 = vunpack.c.h.b16 %v1632
          %v2512 = vunpack.c.l.b16 %v1633
          %v2513 = vunpack.c.h.b16 %v1633
          %v2514 = vunpack.c.l.b16 %v1634
          %v2515 = vunpack.c.h.b16 %v1634
          %v2516 = vunpack.c.l.b16 %v1635
          %v2517 = vunpack.c.h.b16 %v1635
          %v2518 = vunpack.c.l.b16 %v1636
          %v2519 = vunpack.c.h.b16 %v1636
          %v2520 = vunpack.c.l.b16 %v1637
          %v2521 = vunpack.c.h.b16 %v1637
          %v2522 = vunpack.c.l.b16 %v1638
          %v2523 = vunpack.c.h.b16 %v1638
          %v2524 = vunpack.c.l.b16 %v1639
          %v2525 = vunpack.c.h.b16 %v1639
          %v2526 = vunpack.c.l.b16 %v1640
          %v2527 = vunpack.c.h.b16 %v1640
          %v2528 = vunpack.c.l.b16 %v1641
          %v2529 = vunpack.c.h.b16 %v1641
          %v2530 = vunpack.c.l.b16 %v1642
          %v2531 = vunpack.c.h.b16 %v1642
          %v2532 = vunpack.c.l.b16 %v1643
          %v2533 = vunpack.c.h.b16 %v1643
          %v2534 = vunpack.c.l.b16 %v1644
          %v2535 = vunpack.c.h.b16 %v1644
          %v2536 = vunpack.c.l.b16 %v1645
          %v2537 = vunpack.c.h.b16 %v1645
          %v2538 = vunpack.c.l.b16 %v1646
          %v2539 = vunpack.c.h.b16 %v1646
          %v2540 = vunpack.c.l.b16 %v1647
          %v2541 = vunpack.c.h.b16 %v1647
          %v2542 = vunpack.c.l.b16 %v1648
          %v2543 = vunpack.c.h.b16 %v1648
          %v2544 = vunpack.c.l.b16 %v1649
          %v2545 = vunpack.c.h.b16 %v1649
          %v2546 = vpack.c.b16 %v1976, %v1970
          %v2547 = vpack.c.b16 %v1977, %v1971
          %v2548 = vpack.c.b16 %v1978, %v1972
          %v2549 = vpack.c.b16 %v1979, %v1973
          %v2550 = vpack.c.b16 %v1980, %v1974
          %v2551 = vpack.c.b16 %v1981, %v1975
          %v2552 = vpack.c.b16 %v1988, %v1982
          %v2553 = vpack.c.b16 %v1989, %v1983
          %v2554 = vpack.c.b16 %v1990, %v1984
          %v2555 = vpack.c.b16 %v1991, %v1985
          %v2556 = vpack.c.b16 %v1992, %v1986
          %v2557 = vpack.c.b16 %v1993, %v1987
          %v2558 = vpack.c.b16 %v2000, %v1994
          %v2559 = vpack.c.b16 %v2001, %v1995
          %v2560 = vpack.c.b16 %v2002, %v1996
          %v2561 = vpack.c.b16 %v2003, %v1997
          %v2562 = vpack.c.b16 %v2004, %v1998
          %v2563 = vpack.c.b16 %v2005, %v1999
          %v2564 = vpack.c.b16 %v2012, %v2006
          %v2565 = vpack.c.b16 %v2013, %v2007
          %v2566 = vpack.c.b16 %v2014, %v2008
          %v2567 = vpack.c.b16 %v2015, %v2009
          %v2568 = vpack.c.b16 %v2016, %v2010
          %v2569 = vpack.c.b16 %v2017, %v2011
          %v2570 = vpack.c.b16 %v2024, %v2018
          %v2571 = vpack.c.b16 %v2025, %v2019
          %v2572 = vpack.c.b16 %v2026, %v2020
          %v2573 = vpack.c.b16 %v2027, %v2021
          %v2574 = vpack.c.b16 %v2028, %v2022
          %v2575 = vpack.c.b16 %v2029, %v2023
          %v2576 = vpack.c.b16 %v2036, %v2030
          %v2577 = vpack.c.b16 %v2037, %v2031
          %v2578 = vpack.c.b16 %v2038, %v2032
          %v2579 = vpack.c.b16 %v2039, %v2033
          %v2580 = vpack.c.b16 %v2040, %v2034
          %v2581 = vpack.c.b16 %v2041, %v2035
          %v2582 = vpack.c.b16 %v2048, %v2042
          %v2583 = vpack.c.b16 %v2049, %v2043
          %v2584 = vpack.c.b16 %v2050, %v2044
          %v2585 = vpack.c.b16 %v2051, %v2045
          %v2586 = vpack.c.b16 %v2052, %v2046
          %v2587 = vpack.c.b16 %v2053, %v2047
          %v2588 = vpack.c.b16 %v2060, %v2054
          %v2589 = vpack.c.b16 %v2061, %v2055
          %v2590 = vpack.c.b16 %v2062, %v2056
          %v2591 = vpack.c.b16 %v2063, %v2057
          %v2592 = vpack.c.b16 %v2064, %v2058
          %v2593 = vpack.c.b16 %v2065, %v2059
          %v2594 = vpack.c.b16 %v2072, %v2066
          %v2595 = vpack.c.b16 %v2073, %v2067
          %v2596 = vpack.c.b16 %v2074, %v2068
          %v2597 = vpack.c.b16 %v2075, %v2069
          %v2598 = vpack.c.b16 %v2076, %v2070
          %v2599 = vpack.c.b16 %v2077, %v2071
          %v2600 = vpack.c.b16 %v2084, %v2078
          %v2601 = vpack.c.b16 %v2085, %v2079
          %v2602 = vpack.c.b16 %v2086, %v2080
          %v2603 = vpack.c.b16 %v2087, %v2081
          %v2604 = vpack.c.b16 %v2088, %v2082
          %v2605 = vpack.c.b16 %v2089, %v2083
          %v2606 = vpack.c.b16 %v2096, %v2090
          %v2607 = vpack.c.b16 %v2097, %v2091
          %v2608 = vpack.c.b16 %v2098, %v2092
          %v2609 = vpack.c.b16 %v2099, %v2093
          %v2610 = vpack.c.b16 %v2100, %v2094
          %v2611 = vpack.c.b16 %v2101, %v2095
          %v2612 = vpack.c.b16 %v2108, %v2102
          %v2613 = vpack.c.b16 %v2109, %v2103
          %v2614 = vpack.c.b16 %v2110, %v2104
          %v2615 = vpack.c.b16 %v2111, %v2105
          %v2616 = vpack.c.b16 %v2112, %v2106
          %v2617 = vpack.c.b16 %v2113, %v2107
          %v2618 = vpack.c.b16 %v2120, %v2114
          %v2619 = vpack.c.b16 %v2121, %v2115
          %v2620 = vpack.c.b16 %v2122, %v2116
          %v2621 = vpack.c.b16 %v2123, %v2117
          %v2622 = vpack.c.b16 %v2124, %v2118
          %v2623 = vpack.c.b16 %v2125, %v2119
          %v2624 = vpack.c.b16 %v2132, %v2126
          %v2625 = vpack.c.b16 %v2133, %v2127
          %v2626 = vpack.c.b16 %v2134, %v2128
          %v2627 = vpack.c.b16 %v2135, %v2129
          %v2628 = vpack.c.b16 %v2136, %v2130
          %v2629 = vpack.c.b16 %v2137, %v2131
          %v2630 = vpack.c.b16 %v2144, %v2138
          %v2631 = vpack.c.b16 %v2145, %v2139
          %v2632 = vpack.c.b16 %v2146, %v2140
          %v2633 = vpack.c.b16 %v2147, %v2141
          %v2634 = vpack.c.b16 %v2148, %v2142
          %v2635 = vpack.c.b16 %v2149, %v2143
          %v2636 = vpack.c.b16 %v2156, %v2150
          %v2637 = vpack.c.b16 %v2157, %v2151
          %v2638 = vpack.c.b16 %v2158, %v2152
          %v2639 = vpack.c.b16 %v2159, %v2153
          %v2640 = vpack.c.b16 %v2160, %v2154
          %v2641 = vpack.c.b16 %v2161, %v2155
          %v2642 = vpack.c.b16 %v2168, %v2162
          %v2643 = vpack.c.b16 %v2169, %v2163
          %v2644 = vpack.c.b16 %v2170, %v2164
          %v2645 = vpack.c.b16 %v2171, %v2165
          %v2646 = vpack.c.b16 %v2172, %v2166
          %v2647 = vpack.c.b16 %v2173, %v2167
          %v2648 = vpack.c.b16 %v2180, %v2174
          %v2649 = vpack.c.b16 %v2181, %v2175
          %v2650 = vpack.c.b16 %v2182, %v2176
          %v2651 = vpack.c.b16 %v2183, %v2177
          %v2652 = vpack.c.b16 %v2184, %v2178
          %v2653 = vpack.c.b16 %v2185, %v2179
          %v2654 = vpack.c.b16 %v2192, %v2186
          %v2655 = vpack.c.b16 %v2193, %v2187
          %v2656 = vpack.c.b16 %v2194, %v2188
          %v2657 = vpack.c.b16 %v2195, %v2189
          %v2658 = vpack.c.b16 %v2196, %v2190
          %v2659 = vpack.c.b16 %v2197, %v2191
          %v2660 = vpack.c.b16 %v2204, %v2198
          %v2661 = vpack.c.b16 %v2205, %v2199
          %v2662 = vpack.c.b16 %v2206, %v2200
          %v2663 = vpack.c.b16 %v2207, %v2201
          %v2664 = vpack.c.b16 %v2208, %v2202
          %v2665 = vpack.c.b16 %v2209, %v2203
          %v2666 = vpack.c.b16 %v2216, %v2210
          %v2667 = vpack.c.b16 %v2217, %v2211
          %v2668 = vpack.c.b16 %v2218, %v2212
          %v2669 = vpack.c.b16 %v2219, %v2213
          %v2670 = vpack.c.b16 %v2220, %v2214
          %v2671 = vpack.c.b16 %v2221, %v2215
          %v2672 = vpack.c.b16 %v2228, %v2222
          %v2673 = vpack.c.b16 %v2229, %v2223
          %v2674 = vpack.c.b16 %v2230, %v2224
          %v2675 = vpack.c.b16 %v2231, %v2225
          %v2676 = vpack.c.b16 %v2232, %v2226
          %v2677 = vpack.c.b16 %v2233, %v2227
          %v2678 = vpack.c.b16 %v2240, %v2234
          %v2679 = vpack.c.b16 %v2241, %v2235
          %v2680 = vpack.c.b16 %v2242, %v2236
          %v2681 = vpack.c.b16 %v2243, %v2237
          %v2682 = vpack.c.b16 %v2244, %v2238
          %v2683 = vpack.c.b16 %v2245, %v2239
          %v2684 = vpack.c.b16 %v2252, %v2246
          %v2685 = vpack.c.b16 %v2253, %v2247
          %v2686 = vpack.c.b16 %v2254, %v2248
          %v2687 = vpack.c.b16 %v2255, %v2249
          %v2688 = vpack.c.b16 %v2256, %v2250
          %v2689 = vpack.c.b16 %v2257, %v2251
          %v2690 = vpack.c.b16 %v2264, %v2258
          %v2691 = vpack.c.b16 %v2265, %v2259
          %v2692 = vpack.c.b16 %v2266, %v2260
          %v2693 = vpack.c.b16 %v2267, %v2261
          %v2694 = vpack.c.b16 %v2268, %v2262
          %v2695 = vpack.c.b16 %v2269, %v2263
          %v2696 = vpack.c.b16 %v2276, %v2270
          %v2697 = vpack.c.b16 %v2277, %v2271
          %v2698 = vpack.c.b16 %v2278, %v2272
          %v2699 = vpack.c.b16 %v2279, %v2273
          %v2700 = vpack.c.b16 %v2280, %v2274
          %v2701 = vpack.c.b16 %v2281, %v2275
          %v2702 = vpack.c.b16 %v2288, %v2282
          %v2703 = vpack.c.b16 %v2289, %v2283
          %v2704 = vpack.c.b16 %v2290, %v2284
          %v2705 = vpack.c.b16 %v2291, %v2285
          %v2706 = vpack.c.b16 %v2292, %v2286
          %v2707 = vpack.c.b16 %v2293, %v2287
          %v2708 = vpack.c.b16 %v2300, %v2294
          %v2709 = vpack.c.b16 %v2301, %v2295
          %v2710 = vpack.c.b16 %v2302, %v2296
          %v2711 = vpack.c.b16 %v2303, %v2297
          %v2712 = vpack.c.b16 %v2304, %v2298
          %v2713 = vpack.c.b16 %v2305, %v2299
          %v2714 = vpack.c.b16 %v2312, %v2306
          %v2715 = vpack.c.b16 %v2313, %v2307
          %v2716 = vpack.c.b16 %v2314, %v2308
          %v2717 = vpack.c.b16 %v2315, %v2309
          %v2718 = vpack.c.b16 %v2316, %v2310
          %v2719 = vpack.c.b16 %v2317, %v2311
          %v2720 = vpack.c.b16 %v2324, %v2318
          %v2721 = vpack.c.b16 %v2325, %v2319
          %v2722 = vpack.c.b16 %v2326, %v2320
          %v2723 = vpack.c.b16 %v2327, %v2321
          %v2724 = vpack.c.b16 %v2328, %v2322
          %v2725 = vpack.c.b16 %v2329, %v2323
          %v2726 = vpack.c.b16 %v2336, %v2330
          %v2727 = vpack.c.b16 %v2337, %v2331
          %v2728 = vpack.c.b16 %v2338, %v2332
          %v2729 = vpack.c.b16 %v2339, %v2333
          %v2730 = vpack.c.b16 %v2340, %v2334
          %v2731 = vpack.c.b16 %v2341, %v2335
          %v2732 = vpack.c.b16 %v2348, %v2342
          %v2733 = vpack.c.b16 %v2349, %v2343
          %v2734 = vpack.c.b16 %v2350, %v2344
          %v2735 = vpack.c.b16 %v2351, %v2345
          %v2736 = vpack.c.b16 %v2352, %v2346
          %v2737 = vpack.c.b16 %v2353, %v2347
          %v2738 = vpack.c.b16 %v2360, %v2354
          %v2739 = vpack.c.b16 %v2361, %v2355
          %v2740 = vpack.c.b16 %v2362, %v2356
          %v2741 = vpack.c.b16 %v2363, %v2357
          %v2742 = vpack.c.b16 %v2364, %v2358
          %v2743 = vpack.c.b16 %v2365, %v2359
          %v2744 = vpack.c.b16 %v2372, %v2366
          %v2745 = vpack.c.b16 %v2373, %v2367
          %v2746 = vpack.c.b16 %v2374, %v2368
          %v2747 = vpack.c.b16 %v2375, %v2369
          %v2748 = vpack.c.b16 %v2376, %v2370
          %v2749 = vpack.c.b16 %v2377, %v2371
          %v2750 = vpack.c.b16 %v2384, %v2378
          %v2751 = vpack.c.b16 %v2385, %v2379
          %v2752 = vpack.c.b16 %v2386, %v2380
          %v2753 = vpack.c.b16 %v2387, %v2381
          %v2754 = vpack.c.b16 %v2388, %v2382
          %v2755 = vpack.c.b16 %v2389, %v2383
          %v2756 = vpack.c.b16 %v2396, %v2390
          %v2757 = vpack.c.b16 %v2397, %v2391
          %v2758 = vpack.c.b16 %v2398, %v2392
          %v2759 = vpack.c.b16 %v2399, %v2393
          %v2760 = vpack.c.b16 %v2400, %v2394
          %v2761 = vpack.c.b16 %v2401, %v2395
          %v2762 = vpack.c.b16 %v2408, %v2402
          %v2763 = vpack.c.b16 %v2409, %v2403
          %v2764 = vpack.c.b16 %v2410, %v2404
          %v2765 = vpack.c.b16 %v2411, %v2405
          %v2766 = vpack.c.b16 %v2412, %v2406
          %v2767 = vpack.c.b16 %v2413, %v2407
          %v2768 = vpack.c.b16 %v2420, %v2414
          %v2769 = vpack.c.b16 %v2421, %v2415
          %v2770 = vpack.c.b16 %v2422, %v2416
          %v2771 = vpack.c.b16 %v2423, %v2417
          %v2772 = vpack.c.b16 %v2424, %v2418
          %v2773 = vpack.c.b16 %v2425, %v2419
          %v2774 = vpack.c.b16 %v2432, %v2426
          %v2775 = vpack.c.b16 %v2433, %v2427
          %v2776 = vpack.c.b16 %v2434, %v2428
          %v2777 = vpack.c.b16 %v2435, %v2429
          %v2778 = vpack.c.b16 %v2436, %v2430
          %v2779 = vpack.c.b16 %v2437, %v2431
          %v2780 = vpack.c.b16 %v2444, %v2438
          %v2781 = vpack.c.b16 %v2445, %v2439
          %v2782 = vpack.c.b16 %v2446, %v2440
          %v2783 = vpack.c.b16 %v2447, %v2441
          %v2784 = vpack.c.b16 %v2448, %v2442
          %v2785 = vpack.c.b16 %v2449, %v2443
          %v2786 = vpack.c.b16 %v2456, %v2450
          %v2787 = vpack.c.b16 %v2457, %v2451
          %v2788 = vpack.c.b16 %v2458, %v2452
          %v2789 = vpack.c.b16 %v2459, %v2453
          %v2790 = vpack.c.b16 %v2460, %v2454
          %v2791 = vpack.c.b16 %v2461, %v2455
          %v2792 = vpack.c.b16 %v2468, %v2462
          %v2793 = vpack.c.b16 %v2469, %v2463
          %v2794 = vpack.c.b16 %v2470, %v2464
          %v2795 = vpack.c.b16 %v2471, %v2465
          %v2796 = vpack.c.b16 %v2472, %v2466
          %v2797 = vpack.c.b16 %v2473, %v2467
          %v2798 = vpack.c.b16 %v2480, %v2474
          %v2799 = vpack.c.b16 %v2481, %v2475
          %v2800 = vpack.c.b16 %v2482, %v2476
          %v2801 = vpack.c.b16 %v2483, %v2477
          %v2802 = vpack.c.b16 %v2484, %v2478
          %v2803 = vpack.c.b16 %v2485, %v2479
          %v2804 = vpack.c.b16 %v2492, %v2486
          %v2805 = vpack.c.b16 %v2493, %v2487
          %v2806 = vpack.c.b16 %v2494, %v2488
          %v2807 = vpack.c.b16 %v2495, %v2489
          %v2808 = vpack.c.b16 %v2496, %v2490
          %v2809 = vpack.c.b16 %v2497, %v2491
          %v2810 = vpack.c.b16 %v2504, %v2498
          %v2811 = vpack.c.b16 %v2505, %v2499
          %v2812 = vpack.c.b16 %v2506, %v2500
          %v2813 = vpack.c.b16 %v2507, %v2501
          %v2814 = vpack.c.b16 %v2508, %v2502
          %v2815 = vpack.c.b16 %v2509, %v2503
          %v2816 = vpack.c.b16 %v2516, %v2510
          %v2817 = vpack.c.b16 %v2517, %v2511
          %v2818 = vpack.c.b16 %v2518, %v2512
          %v2819 = vpack.c.b16 %v2519, %v2513
          %v2820 = vpack.c.b16 %v2520, %v2514
          %v2821 = vpack.c.b16 %v2521, %v2515
          %v2822 = vpack.c.b16 %v2528, %v2522
          %v2823 = vpack.c.b16 %v2529, %v2523
          %v2824 = vpack.c.b16 %v2530, %v2524
          %v2825 = vpack.c.b16 %v2531, %v2525
          %v2826 = vpack.c.b16 %v2532, %v2526
          %v2827 = vpack.c.b16 %v2533, %v2527
          %v2828 = vpack.c.b16 %v2540, %v2534
          %v2829 = vpack.c.b16 %v2541, %v2535
          %v2830 = vpack.c.b16 %v2542, %v2536
          %v2831 = vpack.c.b16 %v2543, %v2537
          %v2832 = vpack.c.b16 %v2544, %v2538
          %v2833 = vpack.c.b16 %v2545, %v2539
          %3122 = vmatprep.subr.bf16.mxu0 %v2547
          %3123 = vmatpush1.bf16.msra.mxu0 %v2546
          %3124 = vmatprep.subr.bf16.mxu0 %v2553
          %3125 = vmatpush1.bf16.msra.mxu0 %v2552
          %3126 = vmatprep.subr.bf16.mxu0 %v2559
          %3127 = vmatpush1.bf16.msra.mxu0 %v2558
          %3128 = vmatprep.subr.bf16.mxu0 %v2565
          %3129 = vmatpush1.bf16.msra.mxu0 %v2564
          %3130 = vmatprep.subr.bf16.mxu0 %v2571
          %3131 = vmatpush1.bf16.msra.mxu0 %v2570
          %3132 = vmatprep.subr.bf16.mxu0 %v2577
          %3133 = vmatpush1.bf16.msra.mxu0 %v2576
          %3134 = vmatprep.subr.bf16.mxu0 %v2583
          %3135 = vmatpush1.bf16.msra.mxu0 %v2582
          %3136 = vmatprep.subr.bf16.mxu0 %v2589
          %3137 = vmatpush1.bf16.msra.mxu0 %v2588
          %3138 = vmatprep.subr.bf16.mxu0 %v2595
          %3139 = vmatpush1.bf16.msra.mxu0 %v2594
          %3140 = vmatprep.subr.bf16.mxu0 %v2601
          %3141 = vmatpush1.bf16.msra.mxu0 %v2600
          %3142 = vmatprep.subr.bf16.mxu0 %v2607
          %3143 = vmatpush1.bf16.msra.mxu0 %v2606
          %3144 = vmatprep.subr.bf16.mxu0 %v2613
          %3145 = vmatpush1.bf16.msra.mxu0 %v2612
          %3146 = vmatprep.subr.bf16.mxu0 %v2619
          %3147 = vmatpush1.bf16.msra.mxu0 %v2618
          %3148 = vmatprep.subr.bf16.mxu0 %v2625
          %3149 = vmatpush1.bf16.msra.mxu0 %v2624
          %3150 = vmatprep.subr.bf16.mxu0 %v2631
          %3151 = vmatpush1.bf16.msra.mxu0 %v2630
          %3152 = vmatprep.subr.bf16.mxu0 %v2637
          %3153 = vmatpush1.bf16.msra.mxu0 %v2636
          %3154 = vmatprep.mubr.bf16.mxu0 %v1357
          %3155 = vmatmul.mubr.bf16.gmra.mrb[0].mxu0 %v1356
          %v3156 = vpop.f32.mrb[0].mxu0
          %v3157 = vadd.f32 %v1655, %v3156
          %v3158 = vpop.f32.mrb[0].mxu0
          %v3159 = vadd.f32 %v1659, %v3158
          %v3160 = vpop.f32.mrb[0].mxu0
          %v3161 = vpop.f32.mrb[0].mxu0
          %3162 = vdwg.mxu0
          %3163 = vmatprep.subr.bf16.mxu0 %v2643
          %3164 = vmatpush1.bf16.msra.mxu0 %v2642
          %3165 = vmatprep.subr.bf16.mxu0 %v2649
          %3166 = vmatpush1.bf16.msra.mxu0 %v2648
          %3167 = vmatprep.subr.bf16.mxu0 %v2655
          %3168 = vmatpush1.bf16.msra.mxu0 %v2654
          %3169 = vmatprep.subr.bf16.mxu0 %v2661
          %3170 = vmatpush1.bf16.msra.mxu0 %v2660
          %3171 = vmatprep.subr.bf16.mxu0 %v2667
          %3172 = vmatpush1.bf16.msra.mxu0 %v2666
          %3173 = vmatprep.subr.bf16.mxu0 %v2673
          %3174 = vmatpush1.bf16.msra.mxu0 %v2672
          %3175 = vmatprep.subr.bf16.mxu0 %v2679
          %3176 = vmatpush1.bf16.msra.mxu0 %v2678
          %3177 = vmatprep.subr.bf16.mxu0 %v2685
          %3178 = vmatpush1.bf16.msra.mxu0 %v2684
          %3179 = vmatprep.subr.bf16.mxu0 %v2691
          %3180 = vmatpush1.bf16.msra.mxu0 %v2690
          %3181 = vmatprep.subr.bf16.mxu0 %v2697
          %3182 = vmatpush1.bf16.msra.mxu0 %v2696
          %3183 = vmatprep.subr.bf16.mxu0 %v2703
          %3184 = vmatpush1.bf16.msra.mxu0 %v2702
          %3185 = vmatprep.subr.bf16.mxu0 %v2709
          %3186 = vmatpush1.bf16.msra.mxu0 %v2708
          %3187 = vmatprep.subr.bf16.mxu0 %v2715
          %3188 = vmatpush1.bf16.msra.mxu0 %v2714
          %3189 = vmatprep.subr.bf16.mxu0 %v2721
          %3190 = vmatpush1.bf16.msra.mxu0 %v2720
          %3191 = vmatprep.subr.bf16.mxu0 %v2727
          %3192 = vmatpush1.bf16.msra.mxu0 %v2726
          %3193 = vmatprep.subr.bf16.mxu0 %v2733
          %3194 = vmatpush1.bf16.msra.mxu0 %v2732
          %3195 = vmatprep.mubr.bf16.mxu0 %v1359
          %3196 = vmatmul.mubr.bf16.gmra.mrb[0].mxu0 %v1358
          %v3197 = vpop.f32.mrb[0].mxu0
          %v3198 = vadd.f32 %v3157, %v3197
          %v3199 = vpop.f32.mrb[0].mxu0
          %v3200 = vadd.f32 %v3159, %v3199
          %v3201 = vpop.f32.mrb[0].mxu0
          %v3202 = vpop.f32.mrb[0].mxu0
          %3203 = vdwg.mxu0
          %3204 = vmatprep.subr.bf16.mxu0 %v2739
          %3205 = vmatpush1.bf16.msra.mxu0 %v2738
          %3206 = vmatprep.subr.bf16.mxu0 %v2745
          %3207 = vmatpush1.bf16.msra.mxu0 %v2744
          %3208 = vmatprep.subr.bf16.mxu0 %v2751
          %3209 = vmatpush1.bf16.msra.mxu0 %v2750
          %3210 = vmatprep.subr.bf16.mxu0 %v2757
          %3211 = vmatpush1.bf16.msra.mxu0 %v2756
          %3212 = vmatprep.subr.bf16.mxu0 %v2763
          %3213 = vmatpush1.bf16.msra.mxu0 %v2762
          %3214 = vmatprep.subr.bf16.mxu0 %v2769
          %3215 = vmatpush1.bf16.msra.mxu0 %v2768
          %3216 = vmatprep.subr.bf16.mxu0 %v2775
          %3217 = vmatpush1.bf16.msra.mxu0 %v2774
          %3218 = vmatprep.subr.bf16.mxu0 %v2781
          %3219 = vmatpush1.bf16.msra.mxu0 %v2780
          %3220 = vmatprep.subr.bf16.mxu0 %v2787
          %3221 = vmatpush1.bf16.msra.mxu0 %v2786
          %3222 = vmatprep.subr.bf16.mxu0 %v2793
          %3223 = vmatpush1.bf16.msra.mxu0 %v2792
          %3224 = vmatprep.subr.bf16.mxu0 %v2799
          %3225 = vmatpush1.bf16.msra.mxu0 %v2798
          %3226 = vmatprep.subr.bf16.mxu0 %v2805
          %3227 = vmatpush1.bf16.msra.mxu0 %v2804
          %3228 = vmatprep.subr.bf16.mxu0 %v2811
          %3229 = vmatpush1.bf16.msra.mxu0 %v2810
          %3230 = vmatprep.subr.bf16.mxu0 %v2817
          %3231 = vmatpush1.bf16.msra.mxu0 %v2816
          %3232 = vmatprep.subr.bf16.mxu0 %v2823
          %3233 = vmatpush1.bf16.msra.mxu0 %v2822
          %3234 = vmatprep.subr.bf16.mxu0 %v2829
          %3235 = vmatpush1.bf16.msra.mxu0 %v2828
          %3236 = vmatprep.mubr.bf16.mxu0 %v1361
          %3237 = vmatmul.mubr.bf16.gmra.mrb[0].mxu0 %v1360
          %v3238 = vpop.f32.mrb[0].mxu0
          %v3239 = vadd.f32 %v3198, %v3238
          %v3240 = vpop.f32.mrb[0].mxu0
          %v3241 = vadd.f32 %v3200, %v3240
          %v3242 = vpop.f32.mrb[0].mxu0
          %v3243 = vpop.f32.mrb[0].mxu0
          %3244 = vdwg.mxu0
          %3245 = vmatprep.subr.bf16.mxu0 %v2549
          %3246 = vmatpush1.bf16.msra.mxu0 %v2548
          %3247 = vmatprep.subr.bf16.mxu0 %v2555
          %3248 = vmatpush1.bf16.msra.mxu0 %v2554
          %3249 = vmatprep.subr.bf16.mxu0 %v2561
          %3250 = vmatpush1.bf16.msra.mxu0 %v2560
          %3251 = vmatprep.subr.bf16.mxu0 %v2567
          %3252 = vmatpush1.bf16.msra.mxu0 %v2566
          %3253 = vmatprep.subr.bf16.mxu0 %v2573
          %3254 = vmatpush1.bf16.msra.mxu0 %v2572
          %3255 = vmatprep.subr.bf16.mxu0 %v2579
          %3256 = vmatpush1.bf16.msra.mxu0 %v2578
          %3257 = vmatprep.subr.bf16.mxu0 %v2585
          %3258 = vmatpush1.bf16.msra.mxu0 %v2584
          %3259 = vmatprep.subr.bf16.mxu0 %v2591
          %3260 = vmatpush1.bf16.msra.mxu0 %v2590
          %3261 = vmatprep.subr.bf16.mxu0 %v2597
          %3262 = vmatpush1.bf16.msra.mxu0 %v2596
          %3263 = vmatprep.subr.bf16.mxu0 %v2603
          %3264 = vmatpush1.bf16.msra.mxu0 %v2602
          %3265 = vmatprep.subr.bf16.mxu0 %v2609
          %3266 = vmatpush1.bf16.msra.mxu0 %v2608
          %3267 = vmatprep.subr.bf16.mxu0 %v2615
          %3268 = vmatpush1.bf16.msra.mxu0 %v2614
          %3269 = vmatprep.subr.bf16.mxu0 %v2621
          %3270 = vmatpush1.bf16.msra.mxu0 %v2620
          %3271 = vmatprep.subr.bf16.mxu0 %v2627
          %3272 = vmatpush1.bf16.msra.mxu0 %v2626
          %3273 = vmatprep.subr.bf16.mxu0 %v2633
          %3274 = vmatpush1.bf16.msra.mxu0 %v2632
          %3275 = vmatprep.subr.bf16.mxu0 %v2639
          %3276 = vmatpush1.bf16.msra.mxu0 %v2638
          %3277 = vmatprep.mubr.bf16.mxu0 %v1357
          %3278 = vmatmul.mubr.bf16.gmra.mrb[0].mxu0 %v1356
          %v3279 = vpop.f32.mrb[0].mxu0
          %v3280 = vadd.f32 %v1663, %v3279
          %v3281 = vpop.f32.mrb[0].mxu0
          %v3282 = vadd.f32 %v1667, %v3281
          %v3283 = vpop.f32.mrb[0].mxu0
          %v3284 = vpop.f32.mrb[0].mxu0
          %3285 = vdwg.mxu0
          %3286 = vmatprep.subr.bf16.mxu0 %v2645
          %3287 = vmatpush1.bf16.msra.mxu0 %v2644
          %3288 = vmatprep.subr.bf16.mxu0 %v2651
          %3289 = vmatpush1.bf16.msra.mxu0 %v2650
          %3290 = vmatprep.subr.bf16.mxu0 %v2657
          %3291 = vmatpush1.bf16.msra.mxu0 %v2656
          %3292 = vmatprep.subr.bf16.mxu0 %v2663
          %3293 = vmatpush1.bf16.msra.mxu0 %v2662
          %3294 = vmatprep.subr.bf16.mxu0 %v2669
          %3295 = vmatpush1.bf16.msra.mxu0 %v2668
          %3296 = vmatprep.subr.bf16.mxu0 %v2675
          %3297 = vmatpush1.bf16.msra.mxu0 %v2674
          %3298 = vmatprep.subr.bf16.mxu0 %v2681
          %3299 = vmatpush1.bf16.msra.mxu0 %v2680
          %3300 = vmatprep.subr.bf16.mxu0 %v2687
          %3301 = vmatpush1.bf16.msra.mxu0 %v2686
          %3302 = vmatprep.subr.bf16.mxu0 %v2693
          %3303 = vmatpush1.bf16.msra.mxu0 %v2692
          %3304 = vmatprep.subr.bf16.mxu0 %v2699
          %3305 = vmatpush1.bf16.msra.mxu0 %v2698
          %3306 = vmatprep.subr.bf16.mxu0 %v2705
          %3307 = vmatpush1.bf16.msra.mxu0 %v2704
          %3308 = vmatprep.subr.bf16.mxu0 %v2711
          %3309 = vmatpush1.bf16.msra.mxu0 %v2710
          %3310 = vmatprep.subr.bf16.mxu0 %v2717
          %3311 = vmatpush1.bf16.msra.mxu0 %v2716
          %3312 = vmatprep.subr.bf16.mxu0 %v2723
          %3313 = vmatpush1.bf16.msra.mxu0 %v2722
          %3314 = vmatprep.subr.bf16.mxu0 %v2729
          %3315 = vmatpush1.bf16.msra.mxu0 %v2728
          %3316 = vmatprep.subr.bf16.mxu0 %v2735
          %3317 = vmatpush1.bf16.msra.mxu0 %v2734
          %3318 = vmatprep.mubr.bf16.mxu0 %v1359
          %3319 = vmatmul.mubr.bf16.gmra.mrb[0].mxu0 %v1358
          %v3320 = vpop.f32.mrb[0].mxu0
          %v3321 = vadd.f32 %v3280, %v3320
          %v3322 = vpop.f32.mrb[0].mxu0
          %v3323 = vadd.f32 %v3282, %v3322
          %v3324 = vpop.f32.mrb[0].mxu0
          %v3325 = vpop.f32.mrb[0].mxu0
          %3326 = vdwg.mxu0
          %3327 = vmatprep.subr.bf16.mxu0 %v2741
          %3328 = vmatpush1.bf16.msra.mxu0 %v2740
          %3329 = vmatprep.subr.bf16.mxu0 %v2747
          %3330 = vmatpush1.bf16.msra.mxu0 %v2746
          %3331 = vmatprep.subr.bf16.mxu0 %v2753
          %3332 = vmatpush1.bf16.msra.mxu0 %v2752
          %3333 = vmatprep.subr.bf16.mxu0 %v2759
          %3334 = vmatpush1.bf16.msra.mxu0 %v2758
          %3335 = vmatprep.subr.bf16.mxu0 %v2765
          %3336 = vmatpush1.bf16.msra.mxu0 %v2764
          %3337 = vmatprep.subr.bf16.mxu0 %v2771
          %3338 = vmatpush1.bf16.msra.mxu0 %v2770
          %3339 = vmatprep.subr.bf16.mxu0 %v2777
          %3340 = vmatpush1.bf16.msra.mxu0 %v2776
          %3341 = vmatprep.subr.bf16.mxu0 %v2783
          %3342 = vmatpush1.bf16.msra.mxu0 %v2782
          %3343 = vmatprep.subr.bf16.mxu0 %v2789
          %3344 = vmatpush1.bf16.msra.mxu0 %v2788
          %3345 = vmatprep.subr.bf16.mxu0 %v2795
          %3346 = vmatpush1.bf16.msra.mxu0 %v2794
          %3347 = vmatprep.subr.bf16.mxu0 %v2801
          %3348 = vmatpush1.bf16.msra.mxu0 %v2800
          %3349 = vmatprep.subr.bf16.mxu0 %v2807
          %3350 = vmatpush1.bf16.msra.mxu0 %v2806
          %3351 = vmatprep.subr.bf16.mxu0 %v2813
          %3352 = vmatpush1.bf16.msra.mxu0 %v2812
          %3353 = vmatprep.subr.bf16.mxu0 %v2819
          %3354 = vmatpush1.bf16.msra.mxu0 %v2818
          %3355 = vmatprep.subr.bf16.mxu0 %v2825
          %3356 = vmatpush1.bf16.msra.mxu0 %v2824
          %3357 = vmatprep.subr.bf16.mxu0 %v2831
          %3358 = vmatpush1.bf16.msra.mxu0 %v2830
          %3359 = vmatprep.mubr.bf16.mxu0 %v1361
          %3360 = vmatmul.mubr.bf16.gmra.mrb[0].mxu0 %v1360
          %v3361 = vpop.f32.mrb[0].mxu0
          %v3362 = vadd.f32 %v3321, %v3361
          %v3363 = vpop.f32.mrb[0].mxu0
          %v3364 = vadd.f32 %v3323, %v3363
          %v3365 = vpop.f32.mrb[0].mxu0
          %v3366 = vpop.f32.mrb[0].mxu0
          %3367 = vdwg.mxu0
          %3368 = vmatprep.subr.bf16.mxu0 %v2551
          %3369 = vmatpush1.bf16.msra.mxu0 %v2550
          %3370 = vmatprep.subr.bf16.mxu0 %v2557
          %3371 = vmatpush1.bf16.msra.mxu0 %v2556
          %3372 = vmatprep.subr.bf16.mxu0 %v2563
          %3373 = vmatpush1.bf16.msra.mxu0 %v2562
          %3374 = vmatprep.subr.bf16.mxu0 %v2569
          %3375 = vmatpush1.bf16.msra.mxu0 %v2568
          %3376 = vmatprep.subr.bf16.mxu0 %v2575
          %3377 = vmatpush1.bf16.msra.mxu0 %v2574
          %3378 = vmatprep.subr.bf16.mxu0 %v2581
          %3379 = vmatpush1.bf16.msra.mxu0 %v2580
          %3380 = vmatprep.subr.bf16.mxu0 %v2587
          %3381 = vmatpush1.bf16.msra.mxu0 %v2586
          %3382 = vmatprep.subr.bf16.mxu0 %v2593
          %3383 = vmatpush1.bf16.msra.mxu0 %v2592
          %3384 = vmatprep.subr.bf16.mxu0 %v2599
          %3385 = vmatpush1.bf16.msra.mxu0 %v2598
          %3386 = vmatprep.subr.bf16.mxu0 %v2605
          %3387 = vmatpush1.bf16.msra.mxu0 %v2604
          %3388 = vmatprep.subr.bf16.mxu0 %v2611
          %3389 = vmatpush1.bf16.msra.mxu0 %v2610
          %3390 = vmatprep.subr.bf16.mxu0 %v2617
          %3391 = vmatpush1.bf16.msra.mxu0 %v2616
          %3392 = vmatprep.subr.bf16.mxu0 %v2623
          %3393 = vmatpush1.bf16.msra.mxu0 %v2622
          %3394 = vmatprep.subr.bf16.mxu0 %v2629
          %3395 = vmatpush1.bf16.msra.mxu0 %v2628
          %3396 = vmatprep.subr.bf16.mxu0 %v2635
          %3397 = vmatpush1.bf16.msra.mxu0 %v2634
          %3398 = vmatprep.subr.bf16.mxu0 %v2641
          %3399 = vmatpush1.bf16.msra.mxu0 %v2640
          %3400 = vmatprep.mubr.bf16.mxu0 %v1357
          %3401 = vmatmul.mubr.bf16.gmra.mrb[0].mxu0 %v1356
          %v3402 = vpop.f32.mrb[0].mxu0
          %v3403 = vadd.f32 %v1671, %v3402
          %v3404 = vpop.f32.mrb[0].mxu0
          %v3405 = vadd.f32 %v1675, %v3404
          %v3406 = vpop.f32.mrb[0].mxu0
          %v3407 = vpop.f32.mrb[0].mxu0
          %3408 = vdwg.mxu0
          %3409 = vmatprep.subr.bf16.mxu0 %v2647
          %3410 = vmatpush1.bf16.msra.mxu0 %v2646
          %3411 = vmatprep.subr.bf16.mxu0 %v2653
          %3412 = vmatpush1.bf16.msra.mxu0 %v2652
          %3413 = vmatprep.subr.bf16.mxu0 %v2659
          %3414 = vmatpush1.bf16.msra.mxu0 %v2658
          %3415 = vmatprep.subr.bf16.mxu0 %v2665
          %3416 = vmatpush1.bf16.msra.mxu0 %v2664
          %3417 = vmatprep.subr.bf16.mxu0 %v2671
          %3418 = vmatpush1.bf16.msra.mxu0 %v2670
          %3419 = vmatprep.subr.bf16.mxu0 %v2677
          %3420 = vmatpush1.bf16.msra.mxu0 %v2676
          %3421 = vmatprep.subr.bf16.mxu0 %v2683
          %3422 = vmatpush1.bf16.msra.mxu0 %v2682
          %3423 = vmatprep.subr.bf16.mxu0 %v2689
          %3424 = vmatpush1.bf16.msra.mxu0 %v2688
          %3425 = vmatprep.subr.bf16.mxu0 %v2695
          %3426 = vmatpush1.bf16.msra.mxu0 %v2694
          %3427 = vmatprep.subr.bf16.mxu0 %v2701
          %3428 = vmatpush1.bf16.msra.mxu0 %v2700
          %3429 = vmatprep.subr.bf16.mxu0 %v2707
          %3430 = vmatpush1.bf16.msra.mxu0 %v2706
          %3431 = vmatprep.subr.bf16.mxu0 %v2713
          %3432 = vmatpush1.bf16.msra.mxu0 %v2712
          %3433 = vmatprep.subr.bf16.mxu0 %v2719
          %3434 = vmatpush1.bf16.msra.mxu0 %v2718
          %3435 = vmatprep.subr.bf16.mxu0 %v2725
          %3436 = vmatpush1.bf16.msra.mxu0 %v2724
          %3437 = vmatprep.subr.bf16.mxu0 %v2731
          %3438 = vmatpush1.bf16.msra.mxu0 %v2730
          %3439 = vmatprep.subr.bf16.mxu0 %v2737
          %3440 = vmatpush1.bf16.msra.mxu0 %v2736
          %3441 = vmatprep.mubr.bf16.mxu0 %v1359
          %3442 = vmatmul.mubr.bf16.gmra.mrb[0].mxu0 %v1358
          %v3443 = vpop.f32.mrb[0].mxu0
          %v3444 = vadd.f32 %v3403, %v3443
          %v3445 = vpop.f32.mrb[0].mxu0
          %v3446 = vadd.f32 %v3405, %v3445
          %v3447 = vpop.f32.mrb[0].mxu0
          %v3448 = vpop.f32.mrb[0].mxu0
          %3449 = vdwg.mxu0
          %3450 = vmatprep.subr.bf16.mxu0 %v2743
          %3451 = vmatpush1.bf16.msra.mxu0 %v2742
          %3452 = vmatprep.subr.bf16.mxu0 %v2749
          %3453 = vmatpush1.bf16.msra.mxu0 %v2748
          %3454 = vmatprep.subr.bf16.mxu0 %v2755
          %3455 = vmatpush1.bf16.msra.mxu0 %v2754
          %3456 = vmatprep.subr.bf16.mxu0 %v2761
          %3457 = vmatpush1.bf16.msra.mxu0 %v2760
          %3458 = vmatprep.subr.bf16.mxu0 %v2767
          %3459 = vmatpush1.bf16.msra.mxu0 %v2766
          %3460 = vmatprep.subr.bf16.mxu0 %v2773
          %3461 = vmatpush1.bf16.msra.mxu0 %v2772
          %3462 = vmatprep.subr.bf16.mxu0 %v2779
          %3463 = vmatpush1.bf16.msra.mxu0 %v2778
          %3464 = vmatprep.subr.bf16.mxu0 %v2785
          %3465 = vmatpush1.bf16.msra.mxu0 %v2784
          %3466 = vmatprep.subr.bf16.mxu0 %v2791
          %3467 = vmatpush1.bf16.msra.mxu0 %v2790
          %3468 = vmatprep.subr.bf16.mxu0 %v2797
          %3469 = vmatpush1.bf16.msra.mxu0 %v2796
          %3470 = vmatprep.subr.bf16.mxu0 %v2803
          %3471 = vmatpush1.bf16.msra.mxu0 %v2802
          %3472 = vmatprep.subr.bf16.mxu0 %v2809
          %3473 = vmatpush1.bf16.msra.mxu0 %v2808
          %3474 = vmatprep.subr.bf16.mxu0 %v2815
          %3475 = vmatpush1.bf16.msra.mxu0 %v2814
          %3476 = vmatprep.subr.bf16.mxu0 %v2821
          %3477 = vmatpush1.bf16.msra.mxu0 %v2820
          %3478 = vmatprep.subr.bf16.mxu0 %v2827
          %3479 = vmatpush1.bf16.msra.mxu0 %v2826
          %3480 = vmatprep.subr.bf16.mxu0 %v2833
          %3481 = vmatpush1.bf16.msra.mxu0 %v2832
          %3482 = vmatprep.mubr.bf16.mxu0 %v1361
          %3483 = vmatmul.mubr.bf16.gmra.mrb[0].mxu0 %v1360
          %v3484 = vpop.f32.mrb[0].mxu0
          %v3485 = vadd.f32 %v3444, %v3484
          %v3486 = vpop.f32.mrb[0].mxu0
          %v3487 = vadd.f32 %v3446, %v3486
          %v3488 = vpop.f32.mrb[0].mxu0
          %v3489 = vpop.f32.mrb[0].mxu0
          %3490 = vdwg.mxu0
          %v3491 = vmax.f32 %v3239, 0.0
          %v3492 = vmax.f32 %v3241, 0.0
          %v3493 = vmax.f32 %v3362, 0.0
          %v3494 = vmax.f32 %v3364, 0.0
          %v3495 = vmax.f32 %v3485, 0.0
          %v3496 = vmax.f32 %v3487, 0.0
          %v3497 = vld [vmem:[%s433] sm:$0xff]
          %v3498 = vld [vmem:[%s433 + $0x8] sm:$0xff]
          %v3499 = vld [vmem:[%s433 + $0x10] sm:$0xff]
          %v3500 = vld [vmem:[%s433 + $0x18] sm:$0xff]
          %v3501 = vld [vmem:[%s433 + $0x20] sm:$0xff]
          %v3502 = vld [vmem:[%s433 + $0x28] sm:$0xff]
          %v3503 = vmul.f32 %v3491, %v3497
          %v3504 = vmul.f32 %v3492, %v3498
          %v3505 = vmul.f32 %v3493, %v3499
          %v3506 = vmul.f32 %v3494, %v3500
          %v3507 = vmul.f32 %v3495, %v3501
          %v3508 = vmul.f32 %v3496, %v3502
          %v3509 = vld [vmem:[#allocation9] sm:$0xff]
          %v3510 = vld [vmem:[#allocation9 + $0x8] sm:$0xff]
          %v3511 = vld [vmem:[#allocation9 + $0x10] sm:$0xff]
          %v3512 = vld [vmem:[#allocation9 + $0x18] sm:$0xff]
          %v3513 = vld [vmem:[#allocation9 + $0x20] sm:$0xff]
          %v3514 = vld [vmem:[#allocation9 + $0x28] sm:$0xff]
          %v3515 = vld [vmem:[#allocation9 + $0x30] sm:$0xff]
          %v3516 = vld [vmem:[#allocation9 + $0x38] sm:$0xff]
          %v3517 = vld [vmem:[#allocation9 + $0x40] sm:$0xff]
          %v3518 = vld [vmem:[#allocation9 + $0x48] sm:$0xff]
          %v3519 = vld [vmem:[#allocation9 + $0x50] sm:$0xff]
          %v3520 = vld [vmem:[#allocation9 + $0x58] sm:$0xff]
          %v3521 = vld [vmem:[#allocation9 + $0x60] sm:$0xff]
          %v3522 = vld [vmem:[#allocation9 + $0x68] sm:$0xff]
          %v3523 = vld [vmem:[#allocation9 + $0x70] sm:$0xff]
          %v3524 = vld [vmem:[#allocation9 + $0x78] sm:$0xff]
          %v3525 = vld [vmem:[#allocation9 + $0x80] sm:$0xff]
          %v3526 = vld [vmem:[#allocation9 + $0x88] sm:$0xff]
          %v3527 = vld [vmem:[#allocation9 + $0x90] sm:$0xff]
          %v3528 = vld [vmem:[#allocation9 + $0x98] sm:$0xff]
          %v3529 = vld [vmem:[#allocation9 + $0xa0] sm:$0xff]
          %v3530 = vld [vmem:[#allocation9 + $0xa8] sm:$0xff]
          %v3531 = vld [vmem:[#allocation9 + $0xb0] sm:$0xff]
          %v3532 = vld [vmem:[#allocation9 + $0xb8] sm:$0xff]
          %v3533 = vld [vmem:[#allocation9 + $0xc0] sm:$0xff]
          %v3534 = vld [vmem:[#allocation9 + $0xc8] sm:$0xff]
          %v3535 = vld [vmem:[#allocation9 + $0xd0] sm:$0xff]
          %v3536 = vld [vmem:[#allocation9 + $0xd8] sm:$0xff]
          %v3537 = vld [vmem:[#allocation9 + $0xe0] sm:$0xff]
          %v3538 = vld [vmem:[#allocation9 + $0xe8] sm:$0xff]
          %v3539 = vld [vmem:[#allocation9 + $0xf0] sm:$0xff]
          %v3540 = vld [vmem:[#allocation9 + $0xf8] sm:$0xff]
          %v3541 = vld [vmem:[#allocation9 + $0x100] sm:$0xff]
          %v3542 = vld [vmem:[#allocation9 + $0x108] sm:$0xff]
          %v3543 = vld [vmem:[#allocation9 + $0x110] sm:$0xff]
          %v3544 = vld [vmem:[#allocation9 + $0x118] sm:$0xff]
          %v3545 = vld [vmem:[#allocation9 + $0x120] sm:$0xff]
          %v3546 = vld [vmem:[#allocation9 + $0x128] sm:$0xff]
          %v3547 = vld [vmem:[#allocation9 + $0x130] sm:$0xff]
          %v3548 = vld [vmem:[#allocation9 + $0x138] sm:$0xff]
          %v3549 = vld [vmem:[#allocation9 + $0x140] sm:$0xff]
          %v3550 = vld [vmem:[#allocation9 + $0x148] sm:$0xff]
          %v3551 = vld [vmem:[#allocation9 + $0x150] sm:$0xff]
          %v3552 = vld [vmem:[#allocation9 + $0x158] sm:$0xff]
          %v3553 = vld [vmem:[#allocation9 + $0x160] sm:$0xff]
          %v3554 = vld [vmem:[#allocation9 + $0x168] sm:$0xff]
          %v3555 = vld [vmem:[#allocation9 + $0x170] sm:$0xff]
          %v3556 = vld [vmem:[#allocation9 + $0x178] sm:$0xff]
          %v3557 = vld [vmem:[#allocation9 + $0x180] sm:$0xff]
          %v3558 = vld [vmem:[#allocation9 + $0x188] sm:$0xff]
          %v3559 = vld [vmem:[#allocation9 + $0x190] sm:$0xff]
          %v3560 = vld [vmem:[#allocation9 + $0x198] sm:$0xff]
          %v3561 = vld [vmem:[#allocation9 + $0x1a0] sm:$0xff]
          %v3562 = vld [vmem:[#allocation9 + $0x1a8] sm:$0xff]
          %v3563 = vld [vmem:[#allocation9 + $0x1b0] sm:$0xff]
          %v3564 = vld [vmem:[#allocation9 + $0x1b8] sm:$0xff]
          %v3565 = vld [vmem:[#allocation9 + $0x1c0] sm:$0xff]
          %v3566 = vld [vmem:[#allocation9 + $0x1c8] sm:$0xff]
          %v3567 = vld [vmem:[#allocation9 + $0x1d0] sm:$0xff]
          %v3568 = vld [vmem:[#allocation9 + $0x1d8] sm:$0xff]
          %v3569 = vld [vmem:[#allocation9 + $0x1e0] sm:$0xff]
          %v3570 = vld [vmem:[#allocation9 + $0x1e8] sm:$0xff]
          %v3571 = vld [vmem:[#allocation9 + $0x1f0] sm:$0xff]
          %v3572 = vld [vmem:[#allocation9 + $0x1f8] sm:$0xff]
          %v3573 = vld [vmem:[#allocation9 + $0x200] sm:$0xff]
          %v3574 = vld [vmem:[#allocation9 + $0x208] sm:$0xff]
          %v3575 = vld [vmem:[#allocation9 + $0x210] sm:$0xff]
          %v3576 = vld [vmem:[#allocation9 + $0x218] sm:$0xff]
          %v3577 = vld [vmem:[#allocation9 + $0x220] sm:$0xff]
          %v3578 = vld [vmem:[#allocation9 + $0x228] sm:$0xff]
          %v3579 = vld [vmem:[#allocation9 + $0x230] sm:$0xff]
          %v3580 = vld [vmem:[#allocation9 + $0x238] sm:$0xff]
          %v3581 = vld [vmem:[#allocation9 + $0x240] sm:$0xff]
          %v3582 = vld [vmem:[#allocation9 + $0x248] sm:$0xff]
          %v3583 = vld [vmem:[#allocation9 + $0x250] sm:$0xff]
          %v3584 = vld [vmem:[#allocation9 + $0x258] sm:$0xff]
          %v3585 = vld [vmem:[#allocation9 + $0x260] sm:$0xff]
          %v3586 = vld [vmem:[#allocation9 + $0x268] sm:$0xff]
          %v3587 = vld [vmem:[#allocation9 + $0x270] sm:$0xff]
          %v3588 = vld [vmem:[#allocation9 + $0x278] sm:$0xff]
          %v3589 = vld [vmem:[#allocation9 + $0x280] sm:$0xff]
          %v3590 = vld [vmem:[#allocation9 + $0x288] sm:$0xff]
          %v3591 = vld [vmem:[#allocation9 + $0x290] sm:$0xff]
          %v3592 = vld [vmem:[#allocation9 + $0x298] sm:$0xff]
          %v3593 = vld [vmem:[#allocation9 + $0x2a0] sm:$0xff]
          %v3594 = vld [vmem:[#allocation9 + $0x2a8] sm:$0xff]
          %v3595 = vld [vmem:[#allocation9 + $0x2b0] sm:$0xff]
          %v3596 = vld [vmem:[#allocation9 + $0x2b8] sm:$0xff]
          %v3597 = vld [vmem:[#allocation9 + $0x2c0] sm:$0xff]
          %v3598 = vld [vmem:[#allocation9 + $0x2c8] sm:$0xff]
          %v3599 = vld [vmem:[#allocation9 + $0x2d0] sm:$0xff]
          %v3600 = vld [vmem:[#allocation9 + $0x2d8] sm:$0xff]
          %v3601 = vld [vmem:[#allocation9 + $0x2e0] sm:$0xff]
          %v3602 = vld [vmem:[#allocation9 + $0x2e8] sm:$0xff]
          %v3603 = vld [vmem:[#allocation9 + $0x2f0] sm:$0xff]
          %v3604 = vld [vmem:[#allocation9 + $0x2f8] sm:$0xff]
          %v3605 = vld [vmem:[#allocation11] sm:$0x1]
          %v3607 = vlaneseq
          %v3608 = vshrl.u32 %v3607, 7
          %v3609 = vsub.s32 0, %v3608
          %v3610 = vrot.slane %v3605, %v3609
          %3612 = vmatprep.subr.mxu0 0.0
          %3613 = vmatpush1.msra.mxu0 %v3509
          %3614 = vmatprep.subr.mxu0 0.0
          %3615 = vmatpush1.msra.mxu0 %v3510
          %3616 = vmatprep.subr.mxu0 0.0
          %3617 = vmatpush1.msra.mxu0 %v3511
          %3618 = vmatprep.subr.mxu0 0.0
          %3619 = vmatpush1.msra.mxu0 %v3512
          %3620 = vmatprep.subr.mxu0 0.0
          %3621 = vmatpush1.msra.mxu0 %v3513
          %3622 = vmatprep.subr.mxu0 0.0
          %3623 = vmatpush1.msra.mxu0 %v3514
          %3624 = vmatprep.subr.mxu0 0.0
          %3625 = vmatpush1.msra.mxu0 %v3515
          %3626 = vmatprep.subr.mxu0 0.0
          %3627 = vmatpush1.msra.mxu0 %v3516
          %3628 = vmatprep.subr.mxu0 0.0
          %3629 = vmatpush1.msra.mxu0 %v3517
          %3630 = vmatprep.subr.mxu0 0.0
          %3631 = vmatpush1.msra.mxu0 %v3518
          %3632 = vmatprep.subr.mxu0 0.0
          %3633 = vmatpush1.msra.mxu0 %v3519
          %3634 = vmatprep.subr.mxu0 0.0
          %3635 = vmatpush1.msra.mxu0 %v3520
          %3636 = vmatprep.subr.mxu0 0.0
          %3637 = vmatpush1.msra.mxu0 %v3521
          %3638 = vmatprep.subr.mxu0 0.0
          %3639 = vmatpush1.msra.mxu0 %v3522
          %3640 = vmatprep.subr.mxu0 0.0
          %3641 = vmatpush1.msra.mxu0 %v3523
          %3642 = vmatprep.subr.mxu0 0.0
          %3643 = vmatpush1.msra.mxu0 %v3524
          %3644 = vmatprep.subr.mxu0 0.0
          %3645 = vmatpush1.msra.mxu0 %v3525
          %3646 = vmatprep.subr.mxu0 0.0
          %3647 = vmatpush1.msra.mxu0 %v3526
          %3648 = vmatprep.subr.mxu0 0.0
          %3649 = vmatpush1.msra.mxu0 %v3527
          %3650 = vmatprep.subr.mxu0 0.0
          %3651 = vmatpush1.msra.mxu0 %v3528
          %3652 = vmatprep.subr.mxu0 0.0
          %3653 = vmatpush1.msra.mxu0 %v3529
          %3654 = vmatprep.subr.mxu0 0.0
          %3655 = vmatpush1.msra.mxu0 %v3530
          %3656 = vmatprep.subr.mxu0 0.0
          %3657 = vmatpush1.msra.mxu0 %v3531
          %3658 = vmatprep.subr.mxu0 0.0
          %3659 = vmatpush1.msra.mxu0 %v3532
          %3660 = vmatprep.subr.mxu0 0.0
          %3661 = vmatpush1.msra.mxu0 %v3533
          %3662 = vmatprep.subr.mxu0 0.0
          %3663 = vmatpush1.msra.mxu0 %v3534
          %3664 = vmatprep.subr.mxu0 0.0
          %3665 = vmatpush1.msra.mxu0 %v3535
          %3666 = vmatprep.subr.mxu0 0.0
          %3667 = vmatpush1.msra.mxu0 %v3536
          %3668 = vmatprep.subr.mxu0 0.0
          %3669 = vmatpush1.msra.mxu0 %v3537
          %3670 = vmatprep.subr.mxu0 0.0
          %3671 = vmatpush1.msra.mxu0 %v3538
          %3672 = vmatprep.subr.mxu0 0.0
          %3673 = vmatpush1.msra.mxu0 %v3539
          %3674 = vmatprep.subr.mxu0 0.0
          %3675 = vmatpush1.msra.mxu0 %v3540
          %3676 = vmatprep.mubr.f32.mxu0 %v3504
          %3677 = vmatmul.mubr.f32.gmra.mrb[0].mxu0 %v3503
          %v3678 = vpop.f32.mrb[0].mxu0
          %v3679 = vadd.f32 %v3610, %v3678
          %v3680 = vpop.f32.mrb[0].mxu0
          %3681 = vdwg.mxu0
          %3682 = vmatprep.subr.mxu0 0.0
          %3683 = vmatpush1.msra.mxu0 %v3541
          %3684 = vmatprep.subr.mxu0 0.0
          %3685 = vmatpush1.msra.mxu0 %v3542
          %3686 = vmatprep.subr.mxu0 0.0
          %3687 = vmatpush1.msra.mxu0 %v3543
          %3688 = vmatprep.subr.mxu0 0.0
          %3689 = vmatpush1.msra.mxu0 %v3544
          %3690 = vmatprep.subr.mxu0 0.0
          %3691 = vmatpush1.msra.mxu0 %v3545
          %3692 = vmatprep.subr.mxu0 0.0
          %3693 = vmatpush1.msra.mxu0 %v3546
          %3694 = vmatprep.subr.mxu0 0.0
          %3695 = vmatpush1.msra.mxu0 %v3547
          %3696 = vmatprep.subr.mxu0 0.0
          %3697 = vmatpush1.msra.mxu0 %v3548
          %3698 = vmatprep.subr.mxu0 0.0
          %3699 = vmatpush1.msra.mxu0 %v3549
          %3700 = vmatprep.subr.mxu0 0.0
          %3701 = vmatpush1.msra.mxu0 %v3550
          %3702 = vmatprep.subr.mxu0 0.0
          %3703 = vmatpush1.msra.mxu0 %v3551
          %3704 = vmatprep.subr.mxu0 0.0
          %3705 = vmatpush1.msra.mxu0 %v3552
          %3706 = vmatprep.subr.mxu0 0.0
          %3707 = vmatpush1.msra.mxu0 %v3553
          %3708 = vmatprep.subr.mxu0 0.0
          %3709 = vmatpush1.msra.mxu0 %v3554
          %3710 = vmatprep.subr.mxu0 0.0
          %3711 = vmatpush1.msra.mxu0 %v3555
          %3712 = vmatprep.subr.mxu0 0.0
          %3713 = vmatpush1.msra.mxu0 %v3556
          %3714 = vmatprep.subr.mxu0 0.0
          %3715 = vmatpush1.msra.mxu0 %v3557
          %3716 = vmatprep.subr.mxu0 0.0
          %3717 = vmatpush1.msra.mxu0 %v3558
          %3718 = vmatprep.subr.mxu0 0.0
          %3719 = vmatpush1.msra.mxu0 %v3559
          %3720 = vmatprep.subr.mxu0 0.0
          %3721 = vmatpush1.msra.mxu0 %v3560
          %3722 = vmatprep.subr.mxu0 0.0
          %3723 = vmatpush1.msra.mxu0 %v3561
          %3724 = vmatprep.subr.mxu0 0.0
          %3725 = vmatpush1.msra.mxu0 %v3562
          %3726 = vmatprep.subr.mxu0 0.0
          %3727 = vmatpush1.msra.mxu0 %v3563
          %3728 = vmatprep.subr.mxu0 0.0
          %3729 = vmatpush1.msra.mxu0 %v3564
          %3730 = vmatprep.subr.mxu0 0.0
          %3731 = vmatpush1.msra.mxu0 %v3565
          %3732 = vmatprep.subr.mxu0 0.0
          %3733 = vmatpush1.msra.mxu0 %v3566
          %3734 = vmatprep.subr.mxu0 0.0
          %3735 = vmatpush1.msra.mxu0 %v3567
          %3736 = vmatprep.subr.mxu0 0.0
          %3737 = vmatpush1.msra.mxu0 %v3568
          %3738 = vmatprep.subr.mxu0 0.0
          %3739 = vmatpush1.msra.mxu0 %v3569
          %3740 = vmatprep.subr.mxu0 0.0
          %3741 = vmatpush1.msra.mxu0 %v3570
          %3742 = vmatprep.subr.mxu0 0.0
          %3743 = vmatpush1.msra.mxu0 %v3571
          %3744 = vmatprep.subr.mxu0 0.0
          %3745 = vmatpush1.msra.mxu0 %v3572
          %3746 = vmatprep.mubr.f32.mxu0 %v3506
          %3747 = vmatmul.mubr.f32.gmra.mrb[0].mxu0 %v3505
          %v3748 = vpop.f32.mrb[0].mxu0
          %v3749 = vadd.f32 %v3679, %v3748
          %v3750 = vpop.f32.mrb[0].mxu0
          %3751 = vdwg.mxu0
          %3752 = vmatprep.subr.mxu0 0.0
          %3753 = vmatpush1.msra.mxu0 %v3573
          %3754 = vmatprep.subr.mxu0 0.0
          %3755 = vmatpush1.msra.mxu0 %v3574
          %3756 = vmatprep.subr.mxu0 0.0
          %3757 = vmatpush1.msra.mxu0 %v3575
          %3758 = vmatprep.subr.mxu0 0.0
          %3759 = vmatpush1.msra.mxu0 %v3576
          %3760 = vmatprep.subr.mxu0 0.0
          %3761 = vmatpush1.msra.mxu0 %v3577
          %3762 = vmatprep.subr.mxu0 0.0
          %3763 = vmatpush1.msra.mxu0 %v3578
          %3764 = vmatprep.subr.mxu0 0.0
          %3765 = vmatpush1.msra.mxu0 %v3579
          %3766 = vmatprep.subr.mxu0 0.0
          %3767 = vmatpush1.msra.mxu0 %v3580
          %3768 = vmatprep.subr.mxu0 0.0
          %3769 = vmatpush1.msra.mxu0 %v3581
          %3770 = vmatprep.subr.mxu0 0.0
          %3771 = vmatpush1.msra.mxu0 %v3582
          %3772 = vmatprep.subr.mxu0 0.0
          %3773 = vmatpush1.msra.mxu0 %v3583
          %3774 = vmatprep.subr.mxu0 0.0
          %3775 = vmatpush1.msra.mxu0 %v3584
          %3776 = vmatprep.subr.mxu0 0.0
          %3777 = vmatpush1.msra.mxu0 %v3585
          %3778 = vmatprep.subr.mxu0 0.0
          %3779 = vmatpush1.msra.mxu0 %v3586
          %3780 = vmatprep.subr.mxu0 0.0
          %3781 = vmatpush1.msra.mxu0 %v3587
          %3782 = vmatprep.subr.mxu0 0.0
          %3783 = vmatpush1.msra.mxu0 %v3588
          %3784 = vmatprep.subr.mxu0 0.0
          %3785 = vmatpush1.msra.mxu0 %v3589
          %3786 = vmatprep.subr.mxu0 0.0
          %3787 = vmatpush1.msra.mxu0 %v3590
          %3788 = vmatprep.subr.mxu0 0.0
          %3789 = vmatpush1.msra.mxu0 %v3591
          %3790 = vmatprep.subr.mxu0 0.0
          %3791 = vmatpush1.msra.mxu0 %v3592
          %3792 = vmatprep.subr.mxu0 0.0
          %3793 = vmatpush1.msra.mxu0 %v3593
          %3794 = vmatprep.subr.mxu0 0.0
          %3795 = vmatpush1.msra.mxu0 %v3594
          %3796 = vmatprep.subr.mxu0 0.0
          %3797 = vmatpush1.msra.mxu0 %v3595
          %3798 = vmatprep.subr.mxu0 0.0
          %3799 = vmatpush1.msra.mxu0 %v3596
          %3800 = vmatprep.subr.mxu0 0.0
          %3801 = vmatpush1.msra.mxu0 %v3597
          %3802 = vmatprep.subr.mxu0 0.0
          %3803 = vmatpush1.msra.mxu0 %v3598
          %3804 = vmatprep.subr.mxu0 0.0
          %3805 = vmatpush1.msra.mxu0 %v3599
          %3806 = vmatprep.subr.mxu0 0.0
          %3807 = vmatpush1.msra.mxu0 %v3600
          %3808 = vmatprep.subr.mxu0 0.0
          %3809 = vmatpush1.msra.mxu0 %v3601
          %3810 = vmatprep.subr.mxu0 0.0
          %3811 = vmatpush1.msra.mxu0 %v3602
          %3812 = vmatprep.subr.mxu0 0.0
          %3813 = vmatpush1.msra.mxu0 %v3603
          %3814 = vmatprep.subr.mxu0 0.0
          %3815 = vmatpush1.msra.mxu0 %v3604
          %3816 = vmatprep.mubr.f32.mxu0 %v3508
          %3817 = vmatmul.mubr.f32.gmra.mrb[0].mxu0 %v3507
          %v3818 = vpop.f32.mrb[0].mxu0
          %v3819 = vadd.f32 %v3749, %v3818
          %v3820 = vpop.f32.mrb[0].mxu0
          %3821 = vdwg.mxu0
          %3822 = vst [vmem:[%s472] sm:$0xff] %v3819
          %v3823 = vlaneseq
          %v3824 = vand.u32 %v3823, 127
          %vm3825 = vcmp.lt.s32.totalorder %v3824, 2
          %v3826 = vsel %vm3825, %v3819, -1e+30
          %3827 = vmax.xlane.f32.xlu0 %v3826
          %v3828 = vpop.xlane.xlu0 %3827
          %v3829 = vsub.f32 %v3826, %v3828
          %v3830 = vmul.f32 %v3829, 1.442695
          %v3831 = vpow.pop %v3830
          %3832 = vadd.xlane.f32.xlu0 %v3831
          %v3833 = vpop.xlane.xlu0 %3832
          %v3834 = vlog2.pop %v3833
          %v3835 = vmul.f32 %v3834, 0.6931472
          %v3836 = vadd.f32 %v3828, %v3835
          %v3837 = vld [vmem:[%s484] sm:$0xff]
          %3838 = vset.pattern.permute.xlu0 0
          %3839 = vperm.xlu0 %3838, %v3837
          %v3840 = vpop.permute.xlu0 %3839
          %vm3841 = vcmp.eq.s32.totalorder %v3824, %v3840
          %v3842 = vsel %vm3841, %v3819, 0.0
          %3843 = vadd.xlane.f32.xlu0 %v3842
          %v3844 = vpop.xlane.xlu0 %3843
          %v3845 = vsub.f32 %v3836, %v3844
          %vm3846 = vcmask 7168
          %3847 = vst.msk [vmem:[%s488] sm:$0xff] %vm3846, %v3845
        $region80: #{tpu_custom_call.1} parent=47 // pred_fallthru
          _
        %s3848 = sand.u32 %s215, 1
        %s3849 = scalar_lea.sflag [#allocation5], %s3848
        %s3850 = sand.u32 %s215, 1
        %s3851 = smul.addr %s3850, 8
        %s3852 = scalar_lea.vmem [#allocation14], %s3851
        %p3853 = scmp.lt.s32.totalorder %s35, 1
        %s3854 = scalar_select %p3853, %s35, 1
        %s3855 = smul.addr %s3854, 8
        %s3856 = scalar_lea.vmem %s8, %s3855
        // Predicated region
        $region81: #{tpu_custom_call.1} parent=47 // pred_check
          %p3857 = pneg %p225
        $region82: #{tpu_custom_call.1} parent=47 // pred_check_branch
          %3859 = sbr.rel (%p3857) target = $region84
        $region83: #{tpu_custom_call.1} parent=47 // pred_region
          %s3861 = ssub.s32 128, 128
          %3862 = vsyncadd %s3849, %s3861
          %s3863 = smul.addr %s35, 128
          %s3864 = scalar_lea.hbm %s7, %s3863
          %s3866 = sshll.u32 %s3852, 4
          %s3867 = int_to_ptr.vmem [resolvable:$true] %s3866
          %3869 = dma.vmem_to_hbm [thread:$0]  %s3867, 128, %s3864, %s3849
        $region84: #{tpu_custom_call.1} parent=47 // pred_fallthru
          _
        // Predicated region
        $region85: #{tpu_custom_call.1} parent=47 // pred_check
          %p3870 = pneg %p251
        $region86: #{tpu_custom_call.1} parent=47 // pred_check_branch
          %3872 = sbr.rel (%p3870) target = $region88
        $region87: #{tpu_custom_call.1} parent=47 // pred_region
          _
        $region88: #{tpu_custom_call.1} parent=47 // pred_fallthru
          _
      $region48: #{tpu_custom_call.1} parent=5 // pred_fallthru
        _
      %p3873 = scmp.le.s32.totalorder 2, %s26
      // Predicated region
      $region89: #{tpu_custom_call.1} parent=5 // pred_check
        %p3874 = pneg %p3873
      $region90: #{tpu_custom_call.1} parent=5 // pred_check_branch
        %3876 = sbr.rel (%p3874) target = $region92
      $region91: #{tpu_custom_call.1} parent=5 // pred_region
        %s3877 = ssub.s32 %s26, 2
        // Predicated region
        $region93: #{tpu_custom_call.1} parent=91 // pred_check
          %p3878 = pneg %p231
        $region94: #{tpu_custom_call.1} parent=91 // pred_check_branch
          %3880 = sbr.rel (%p3878) target = $region96
        $region95: #{tpu_custom_call.1} parent=91 // pred_region
          %s3881 = sand.u32 %s216, 1
          %s3882 = scalar_lea.sflag [#allocation5], %s3881
          %s3883 = sand.u32 %s216, 1
          %s3884 = smul.addr %s3883, 8
          %s3885 = scalar_lea.vmem [#allocation14], %s3884
          %3886 = dma.done %s3882, 128
        $region96: #{tpu_custom_call.1} parent=91 // pred_fallthru
          _
        // Predicated region
        $region97: #{tpu_custom_call.1} parent=91 // pred_check
          %p3887 = pneg %p257
        $region98: #{tpu_custom_call.1} parent=91 // pred_check_branch
          %3889 = sbr.rel (%p3887) target = $region100
        $region99: #{tpu_custom_call.1} parent=91 // pred_region
          %p3890 = scmp.lt.s32.totalorder %s37, 1
          %s3891 = scalar_select %p3890, %s37, 1
          %s3892 = smul.addr %s3891, 8
          %s3893 = scalar_lea.vmem %s8, %s3892
        $region100: #{tpu_custom_call.1} parent=91 // pred_fallthru
          _
      $region92: #{tpu_custom_call.1} parent=5 // pred_fallthru
        _
    $region6: #{tpu_custom_call.1} parent=1 // loop_footer
      %s30 = sadd.s32 1, %s26
    $region7: #{tpu_custom_call.1} parent=1 // loop_footer_branch
      %25 = sbr.rel target = $region3
    $region8: #{tpu_custom_call.1} parent=1 // loop_exit
      _
    %3894 = vsyncpa [#allocation4], 1
    %s3895 = scalar_lea.sflag [#allocation4], 1
    %3896 = vsyncpa %s3895, 1
    %3897 = vsyncpa [#allocation7], 1
    %3898 = vsyncpa [#allocation10], 1
    %3899 = vsyncpa [#allocation13], 1
    %s3900 = scalar_lea.sflag [#allocation13], 1
    %3901 = vsyncpa %s3900, 1
    %3902 = vsyncpa [#allocation5], 1
    %s3903 = scalar_lea.sflag [#allocation5], 1
    %3904 = vsyncpa %s3903, 1

</llo_original>
